<compile_context>
chip_gen: v7x
topology: tpu7x:2x2x1
jax: 0.10.0
libtpu: 0.0.40
codegen_flags: <defaults>
</compile_context>

<pallas_src>
import functools

import jax
import jax.numpy as jnp
from jax import lax
from jax.experimental import pallas as pl
from jax.experimental.pallas import tpu as pltpu


def _round_up(x, m):
    return ((x + m - 1) // m) * m


# ----------------------------------------------------------------------------
# Pallas kernel 1: grouped 1x1 conv + (folded-BN) bias + ReLU for the stages.
# Grid = (num_stages,); each step: one small (R, C) @ (C, Np) MXU matmul.
# ----------------------------------------------------------------------------
def _stage_matmul_bias_relu_kernel(x_ref, w_ref, b_ref, o_ref):
    acc = jnp.dot(x_ref[0], w_ref[0], preferred_element_type=jnp.float32)
    o_ref[...] = jnp.maximum(acc + b_ref[0], 0.0)[None].astype(o_ref.dtype)


def grouped_stage_conv1x1(x_groups, w_groups, b_groups):
    """x_groups: (G,R,C) bf16, w_groups: (G,C,Np) bf16, b_groups: (G,1,Np) f32."""
    G, R, C = x_groups.shape
    Np = w_groups.shape[-1]
    return pl.pallas_call(
        _stage_matmul_bias_relu_kernel,
        out_shape=jax.ShapeDtypeStruct((G, R, Np), jnp.float32),
        grid_spec=pltpu.PrefetchScalarGridSpec(
            num_scalar_prefetch=0,
            grid=(G,),
            in_specs=[
                pl.BlockSpec((1, R, C), lambda g: (g, 0, 0)),
                pl.BlockSpec((1, C, Np), lambda g: (g, 0, 0)),
                pl.BlockSpec((1, 1, Np), lambda g: (g, 0, 0)),
            ],
            out_specs=pl.BlockSpec((1, R, Np), lambda g: (g, 0, 0)),
        ),
        compiler_params=pltpu.CompilerParams(
            dimension_semantics=("parallel",)),
    )(x_groups, w_groups, b_groups)


# ----------------------------------------------------------------------------
# Tiling / VMEM-budget selection for the 3x3 bottleneck conv.
# ----------------------------------------------------------------------------
def _conv_tiling(H, W, c_cat, n_lanes, m_tile_target, k_tile):
    """Pick (row pitch, image-rows per M tile, K tile, padded K, vmem_limit)."""
    pitch = _round_up(W + 2, 8)                 # sublane-aligned flattened row pitch
    divisors = [d for d in range(H, 0, -1) if H % d == 0]
    rpt0 = next((d for d in divisors if d * pitch <= m_tile_target), 1)

    try:
        vmem_cap = int(pltpu.get_tpu_info().vmem_capacity_bytes)
    except Exception:                           # conservative default (v7x = 64 MiB)
        vmem_cap = 64 * 2 ** 20
    budget = int(vmem_cap * 0.80)

    if k_tile is not None:
        assert k_tile % 128 == 0, "k_tile override must be a multiple of 128"
        tc_opts = [(k_tile, _round_up(c_cat, k_tile))]
    elif c_cat <= 128:
        tc_opts = [(c_cat, c_cat)]              # single shot, block == full dim
    else:
        single = _round_up(c_cat, 128)          # single-shot K (preferred when it fits)
        tc_opts = [(single, single)] + [(t, _round_up(c_cat, t))
                                        for t in (2048, 1024, 512, 256, 128)
                                        if t < single]

    def need_bytes(rpt, tc):
        tm = rpt * pitch
        tm_in = tm + 2 * pitch + 2
        return (2 * tm_in * tc * 2              # x window (bf16, double-buffered)
                + 2 * 9 * tc * n_lanes * 2      # weight taps (bf16, double-buffered)
                + 2 * tm * n_lanes * 4          # output/accumulator (f32, dbl-buffered)
                + 2 * n_lanes * 4)              # bias

    rpt_opts = [rpt0] + [d for d in divisors if d < rpt0]
    chosen = None
    for rpt in rpt_opts:                        # prefer the largest K tile that fits,
        for tc, c_pad in tc_opts:               # then shrink the M tile if needed
            if need_bytes(rpt, tc) <= budget:
                chosen = (rpt, tc, c_pad)
                break
        if chosen is not None:
            break
    if chosen is None:                          # nothing fits the budget: smallest combo
        chosen = (rpt_opts[-1],) + tc_opts[-1]
    rpt, tc, c_pad = chosen

    need = need_bytes(rpt, tc)
    vmem_limit = max(need + (8 << 20), 32 << 20)
    vmem_limit = min(vmem_limit, int(vmem_cap * 0.90))
    vmem_limit = max(vmem_limit, need + (2 << 20))   # never clamp below the true need
    return pitch, rpt, tc, c_pad, int(vmem_limit)


# ----------------------------------------------------------------------------
# Pallas kernel 2: 3x3 conv (pad=1) + folded-BN bias + ReLU as implicit GEMM.
# Grid = (B, M_tiles, K_tiles); K is the reduction ("arbitrary") axis and the
# f32 output block itself is the accumulator (no scratch).
# ----------------------------------------------------------------------------
def _conv3x3_bias_relu_kernel(x_ref, w_ref, b_ref, o_ref, *, pitch, tm, n_ct):
    # x_ref: (TM_in, tc) bf16, w_ref: (3,3,tc,Np) bf16, b_ref: (1,Np) f32,
    # o_ref: (TM, Np) f32 (resident across the K axis).
    acc = None
    for kh in range(3):
        for kw in range(3):
            off = kh * pitch + kw               # static per-tap row offset
            tap = x_ref[off:off + tm, :]        # (tm, tc) bf16
            d = jnp.dot(tap, w_ref[kh, kw], preferred_element_type=jnp.float32)
            acc = d if acc is None else acc + d

    if n_ct == 1:
        # Single K step: fused store + bias + ReLU (no read-modify-write).
        o_ref[...] = jnp.maximum(acc + b_ref[...], 0.0)
    else:
        ct = pl.program_id(2)

        @pl.when(ct == 0)
        def _():                                # first K step: plain store, no zero-fill
            o_ref[...] = acc

        @pl.when(jnp.logical_and(ct > 0, ct < n_ct - 1))
        def _():
            o_ref[...] = o_ref[...] + acc

        @pl.when(ct == n_ct - 1)
        def _():                                # last K step: fold in bias + ReLU
            o_ref[...] = jnp.maximum(o_ref[...] + acc + b_ref[...], 0.0)


def conv3x3_bn_relu(x_win, w, bias, pitch, tc, vmem_limit):
    """
    x_win: (B, MT, TM_in, c_pad) bf16  -- overlapping, spatially padded windows
    w:     (3, 3, c_pad, Np)     bf16  -- BN scale folded, cout lane-padded
    bias:  (1, Np)               f32
    Returns (B, MT, TM, Np) f32 (caller strips wrap columns / lane padding).
    """
    B, MT, TM_in, c_pad = x_win.shape
    Np = w.shape[-1]
    TM = TM_in - 2 * pitch - 2
    n_ct = c_pad // tc

    kernel = functools.partial(_conv3x3_bias_relu_kernel,
                               pitch=pitch, tm=TM, n_ct=n_ct)
    # TODO(synk): if a v7x bundle dump shows exposed weight DMA with n_ct > 1,
    # bump the weight BlockSpec to pipeline_mode=pl.Buffered(3).
    return pl.pallas_call(
        kernel,
        out_shape=jax.ShapeDtypeStruct((B, MT, TM, Np), jnp.float32),
        grid_spec=pltpu.PrefetchScalarGridSpec(
            num_scalar_prefetch=0,
            grid=(B, MT, n_ct),                 # reduction axis innermost
            in_specs=[
                pl.BlockSpec((None, None, TM_in, tc), lambda b, m, k: (b, m, 0, k)),
                pl.BlockSpec((3, 3, tc, Np), lambda b, m, k: (0, 0, k, 0)),
                pl.BlockSpec((1, Np), lambda b, m, k: (0, 0)),
            ],
            out_specs=pl.BlockSpec((None, None, TM, Np), lambda b, m, k: (b, m, 0, 0)),
        ),
        compiler_params=pltpu.CompilerParams(
            dimension_semantics=("parallel", "parallel", "arbitrary"),
            vmem_limit_bytes=int(vmem_limit)),
    )(x_win, w, bias)


# ----------------------------------------------------------------------------
# Plain-JAX glue (matches PyTorch semantics)
# ----------------------------------------------------------------------------
def adaptive_avg_pool_nhwc(x, s):
    """PyTorch AdaptiveAvgPool2d semantics (bins may overlap)."""
    B, H, W, C = x.shape
    rows = []
    for i in range(s):
        h0 = (i * H) // s
        h1 = -(-((i + 1) * H) // s)             # ceil
        cols = []
        for j in range(s):
            w0 = (j * W) // s
            w1 = -(-((j + 1) * W) // s)
            cols.append(jnp.mean(x[:, h0:h1, w0:w1, :], axis=(1, 2)))
        rows.append(jnp.stack(cols, axis=1))
    return jnp.stack(rows, axis=1)              # (B, s, s, C)


def upsample_bilinear_align_corners(x, H, W):
    """F.interpolate(mode='bilinear', align_corners=True), NHWC."""
    B, s, _, C = x.shape
    if s == 1:
        return jnp.broadcast_to(x, (B, H, W, C))
    ry = (s - 1) / (H - 1) if H > 1 else 0.0
    rx = (s - 1) / (W - 1) if W > 1 else 0.0
    ys = jnp.arange(H, dtype=jnp.float32) * ry
    xs = jnp.arange(W, dtype=jnp.float32) * rx
    y0 = jnp.floor(ys).astype(jnp.int32)
    x0 = jnp.floor(xs).astype(jnp.int32)
    y1 = jnp.minimum(y0 + 1, s - 1)
    x1 = jnp.minimum(x0 + 1, s - 1)
    wy = (ys - y0.astype(jnp.float32))[None, :, None, None]
    wx = (xs - x0.astype(jnp.float32))[None, None, :, None]
    g00 = x[:, y0][:, :, x0]
    g01 = x[:, y0][:, :, x1]
    g10 = x[:, y1][:, :, x0]
    g11 = x[:, y1][:, :, x1]
    top = g00 * (1.0 - wx) + g01 * wx
    bot = g10 * (1.0 - wx) + g11 * wx
    return top * (1.0 - wy) + bot * wy


def bn_fold(gamma, beta, mean, var, eps=1e-5):
    scale = gamma / jnp.sqrt(var + eps)
    bias = beta - mean * scale
    return scale, bias


# ----------------------------------------------------------------------------
# Parameter init (deterministic, synthetic)
# ----------------------------------------------------------------------------
def init_params(key, features, out_features, sizes):
    params = {"stages": [], "bottleneck": {}}
    keys = jax.random.split(key, 2 * len(sizes) + 2)
    for i, _ in enumerate(sizes):
        kw, kb = keys[2 * i], keys[2 * i + 1]
        params["stages"].append({
            "conv_w": 0.1 * jax.random.normal(
                kw, (out_features, features, 1, 1), jnp.float32),
            "bn_gamma": 1.0 + 0.1 * jax.random.normal(kb, (out_features,), jnp.float32),
            "bn_beta": 0.05 * jax.random.normal(jax.random.fold_in(kb, 1),
                                                (out_features,), jnp.float32),
            "bn_mean": 0.05 * jax.random.normal(jax.random.fold_in(kb, 2),
                                                (out_features,), jnp.float32),
            "bn_var": 0.5 + jax.random.uniform(jax.random.fold_in(kb, 3),
                                               (out_features,), jnp.float32),
        })
    c_cat = features + len(sizes) * out_features
    kw, kb = keys[-2], keys[-1]
    params["bottleneck"] = {
        "conv_w": 0.05 * jax.random.normal(
            kw, (out_features, c_cat, 3, 3), jnp.float32),
        "bn_gamma": 1.0 + 0.1 * jax.random.normal(kb, (out_features,), jnp.float32),
        "bn_beta": 0.05 * jax.random.normal(jax.random.fold_in(kb, 1),
                                            (out_features,), jnp.float32),
        "bn_mean": 0.05 * jax.random.normal(jax.random.fold_in(kb, 2),
                                            (out_features,), jnp.float32),
        "bn_var": 0.5 + jax.random.uniform(jax.random.fold_in(kb, 3),
                                           (out_features,), jnp.float32),
    }
    return params


# ----------------------------------------------------------------------------
# PSPModule forward (Pallas path)
# ----------------------------------------------------------------------------
@functools.partial(jax.jit,
                   static_argnames=("sizes", "out_features", "m_tile_target", "k_tile"))
def psp_forward(x_nchw, params, sizes, out_features, m_tile_target=1024, k_tile=None):
    B, C, H, W = x_nchw.shape
    G = len(sizes)
    x = jnp.transpose(x_nchw, (0, 2, 3, 1))           # NCHW -> NHWC (f32)
    Np = max(128, _round_up(out_features, 128))       # lane-dense output padding

    # ---- pyramid stages: one grouped 1x1-conv+BN+ReLU pallas_call ----------
    R = _round_up(max(B * s * s for s in sizes), 8)
    xs, ws, bs = [], [], []
    for s, p in zip(sizes, params["stages"]):
        pooled = adaptive_avg_pool_nhwc(x, s).reshape(B * s * s, C)
        xs.append(jnp.pad(pooled, ((0, R - B * s * s), (0, 0))))
        scale, bias = bn_fold(p["bn_gamma"], p["bn_beta"],
                              p["bn_mean"], p["bn_var"])
        w = p["conv_w"][:, :, 0, 0].T * scale[None, :]     # (C, out), BN folded
        ws.append(jnp.pad(w, ((0, 0), (0, Np - out_features))))
        bs.append(jnp.pad(bias, (0, Np - out_features)))
    x_groups = jnp.stack(xs).astype(jnp.bfloat16)          # (G, R, C)
    w_groups = jnp.stack(ws).astype(jnp.bfloat16)          # (G, C, Np)
    b_groups = jnp.stack(bs).reshape(G, 1, Np)              # (G, 1, Np) f32

    stage_out = grouped_stage_conv1x1(x_groups, w_groups, b_groups)

    priors = []
    for g, s in enumerate(sizes):
        y = stage_out[g, :B * s * s, :out_features].reshape(B, s, s, out_features)
        priors.append(upsample_bilinear_align_corners(y, H, W))
    priors.append(x)

    # ---- bottleneck: 3x3 conv + BN + ReLU as implicit GEMM -----------------
    # NOTE: the concatenated activation (incl. the passthrough x) is cast to
    # bf16 for the MXU; accumulation, bias and ReLU stay in f32.
    cat = jnp.concatenate([p.astype(jnp.bfloat16) for p in priors], axis=-1)
    c_cat = cat.shape[-1]

    pitch, rpt, tc, c_pad, vmem_limit = _conv_tiling(
        H, W, c_cat, Np, m_tile_target, k_tile)
    MT = H // rpt
    TM = rpt * pitch
    TM_in = TM + 2 * pitch + 2

    bp = params["bottleneck"]
    scale, bias = bn_fold(bp["bn_gamma"], bp["bn_beta"],
                          bp["bn_mean"], bp["bn_var"])
    w = jnp.transpose(bp["conv_w"], (2, 3, 1, 0)) * scale[None, None, None, :]
    w = jnp.pad(w, ((0, 0), (0, 0), (0, c_pad - c_cat), (0, Np - out_features)))
    b_b = jnp.pad(bias, (0, Np - out_features)).reshape(1, Np)

    # One spatial zero-pad (conv padding=1; one extra bottom row plus dead
    # right columns keep every shifted tap window in bounds and make the row
    # pitch a multiple of 8), then flatten H,W into rows.
    cat_p = jnp.pad(cat, ((0, 0), (1, 2), (1, pitch - W - 1), (0, c_pad - c_cat)))
    x_flat = cat_p.reshape(B, (H + 3) * pitch, c_pad)

    # Overlapping M-tile windows (halo = 2*pitch + 2 rows) so the kernel gets
    # a spatial "parallel" grid axis with plain Blocked specs.  MT == 1 is
    # just a slice (no duplication).
    x_win = jnp.stack([x_flat[:, t * TM: t * TM + TM_in, :] for t in range(MT)],
                      axis=1)                              # (B, MT, TM_in, c_pad)

    y = conv3x3_bn_relu(x_win, w.astype(jnp.bfloat16), b_b, pitch, tc, vmem_limit)
    y = y.reshape(B, H, pitch, Np)[:, :, :W, :out_features]   # strip wrap/lane pad

    # TODO(synk): nn.Dropout2d(0.1) is identity in eval mode; no RNG dropout.
    return jnp.transpose(y, (0, 3, 1, 2))                  # back to NCHW


# ----------------------------------------------------------------------------
# Pure-JAX f32 reference for numerical validation
# ----------------------------------------------------------------------------
def psp_forward_reference(x_nchw, params, sizes, out_features):
    B, C, H, W = x_nchw.shape
    x = jnp.transpose(x_nchw, (0, 2, 3, 1))
    priors = []
    for s, p in zip(sizes, params["stages"]):
        pooled = adaptive_avg_pool_nhwc(x, s)
        scale, bias = bn_fold(p["bn_gamma"], p["bn_beta"],
                              p["bn_mean"], p["bn_var"])
        y = jnp.einsum("bhwc,oc->bhwo", pooled, p["conv_w"][:, :, 0, 0],
                       precision=lax.Precision.HIGHEST)
        y = jnp.maximum(y * scale + bias, 0.0)
        priors.append(upsample_bilinear_align_corners(y, H, W))
    priors.append(x)
    cat = jnp.concatenate(priors, axis=-1)
    bp = params["bottleneck"]
    scale, bias = bn_fold(bp["bn_gamma"], bp["bn_beta"],
                          bp["bn_mean"], bp["bn_var"])
    y = lax.conv_general_dilated(
        cat, jnp.transpose(bp["conv_w"], (2, 3, 1, 0)),
        window_strides=(1, 1), padding=((1, 1), (1, 1)),
        dimension_numbers=("NHWC", "HWIO", "NHWC"),
        precision=lax.Precision.HIGHEST)
    y = jnp.maximum(y * scale + bias, 0.0)
    return jnp.transpose(y, (0, 3, 1, 2))


if __name__ == "__main__":
    key = jax.random.PRNGKey(0)
    sizes = (1, 2, 3, 6)

    # --- Config 1: defaults (single K step, single M tile, fused epilogue) ---
    B, C, H, W = 2, 4, 16, 16
    out_features = 8
    k_x, k_p = jax.random.split(key)
    x = jax.random.normal(k_x, (B, C, H, W), jnp.float32)
    params = init_params(k_p, C, out_features, sizes)

    out = psp_forward(x, params, sizes, out_features)
    jax.block_until_ready(out)

    assert out.shape == (B, out_features, H, W), out.shape
    assert bool(jnp.all(jnp.isfinite(out)))
    assert bool(jnp.all(out >= 0.0))                    # ReLU output

    ref = psp_forward_reference(x, params, sizes, out_features)
    max_err = float(jnp.max(jnp.abs(out - ref)))
    mean_err = float(jnp.mean(jnp.abs(out - ref)))
    assert max_err < 0.5 and mean_err < 0.05, (max_err, mean_err)

    # --- Config 2: forces multi-M-tile + multi-K-tile accumulate-into-o_ref --
    B2, C2, H2, W2 = 1, 8, 16, 16
    out2 = 32
    k_x2, k_p2 = jax.random.split(jax.random.fold_in(key, 1))
    x2 = jax.random.normal(k_x2, (B2, C2, H2, W2), jnp.float32)
    params2 = init_params(k_p2, C2, out2, sizes)

    o2 = psp_forward(x2, params2, sizes, out2, m_tile_target=256, k_tile=128)
    jax.block_until_ready(o2)

    ref2 = psp_forward_reference(x2, params2, sizes, out2)
    assert o2.shape == ref2.shape, (o2.shape, ref2.shape)
    assert bool(jnp.all(jnp.isfinite(o2)))
    max_err2 = float(jnp.max(jnp.abs(o2 - ref2)))
    mean_err2 = float(jnp.mean(jnp.abs(o2 - ref2)))
    assert max_err2 < 0.5 and mean_err2 < 0.05, (max_err2, mean_err2)

    print("KERNEL_OK")
</pallas_src>

<mosaic_0001>
module attributes {stable_mosaic.version = 11 : i64} {
  func.func @_stage_matmul_bias_relu_kernel(%arg0: i32, %arg1: memref<1x72x4xbf16, #tpu.memory_space<vmem>>, %arg2: memref<1x4x128xbf16, #tpu.memory_space<vmem>>, %arg3: memref<1x1x128xf32, #tpu.memory_space<vmem>>, %arg4: memref<1x72x128xf32, #tpu.memory_space<vmem>>) attributes {dimension_semantics = [#tpu.dimension_semantics<parallel>], iteration_bounds = array<i64: 4>, scalar_prefetch = 0 : i64, scratch_operands = 0 : i64, tpu.core_type = #tpu.core_type<tc>, window_params = [{transform_indices = @transform_0, window_bounds = array<i64: 1, 72, 4>}, {transform_indices = @transform_1, window_bounds = array<i64: 1, 4, 128>}, {transform_indices = @transform_2, window_bounds = array<i64: 1, 1, 128>}, {transform_indices = @transform_3, window_bounds = array<i64: 1, 72, 128>}]} {
    %c0 = arith.constant 0 : index
    %c0_0 = arith.constant 0 : index
    %c0_1 = arith.constant 0 : index
    %0 = vector.load %arg1[%c0, %c0_0, %c0_1] : memref<1x72x4xbf16, #tpu.memory_space<vmem>>, vector<1x72x4xbf16>
    %1 = vector.shape_cast %0 : vector<1x72x4xbf16> to vector<72x4xbf16>
    %c0_2 = arith.constant 0 : index
    %c0_3 = arith.constant 0 : index
    %c0_4 = arith.constant 0 : index
    %2 = vector.load %arg2[%c0_2, %c0_3, %c0_4] : memref<1x4x128xbf16, #tpu.memory_space<vmem>>, vector<1x4x128xbf16>
    %3 = vector.shape_cast %2 : vector<1x4x128xbf16> to vector<4x128xbf16>
    %cst = arith.constant dense<0.000000e+00> : vector<72x128xf32>
    %4 = tpu.matmul %1, %3, %cst {dimension_numbers = #tpu.dot_dimension_numbers<[1], [0], [0], [1], [0, 0, 1, 1], [], []>} : vector<72x4xbf16>, vector<4x128xbf16>, vector<72x128xf32> -> vector<72x128xf32>
    %c0_5 = arith.constant 0 : index
    %c0_6 = arith.constant 0 : index
    %c0_7 = arith.constant 0 : index
    %5 = vector.load %arg3[%c0_5, %c0_6, %c0_7] : memref<1x1x128xf32, #tpu.memory_space<vmem>>, vector<1x1x128xf32>
    %6 = vector.shape_cast %5 : vector<1x1x128xf32> to vector<1x128xf32>
    %7 = vector.broadcast %6 : vector<1x128xf32> to vector<72x128xf32>
    %8 = arith.addf %4, %7 : vector<72x128xf32>
    %cst_8 = arith.constant 0.000000e+00 : f32
    %9 = vector.broadcast %cst_8 : f32 to vector<72x128xf32>
    %10 = arith.maximumf %8, %9 : vector<72x128xf32>
    %11 = vector.shape_cast %10 : vector<72x128xf32> to vector<1x72x128xf32>
    %c0_9 = arith.constant 0 : index
    %c0_10 = arith.constant 0 : index
    %c0_11 = arith.constant 0 : index
    %12 = vector.load %arg4[%c0_9, %c0_10, %c0_11] : memref<1x72x128xf32, #tpu.memory_space<vmem>>, vector<1x72x128xf32>
    tpu.vector_store %arg4[%c0_9, %c0_10, %c0_11], %11 {strides = array<i32>} : memref<1x72x128xf32, #tpu.memory_space<vmem>>, vector<1x72x128xf32>,
    return
  }
  func.func @transform_0(%arg0: i32) -> (i32, i32, i32) {
    %c0_i32 = arith.constant 0 : i32
    %c0_i32_0 = arith.constant 0 : i32
    %c0_i32_1 = arith.constant 0 : i32
    return %arg0, %c0_i32, %c0_i32_0 : i32, i32, i32
  }
  func.func @transform_1(%arg0: i32) -> (i32, i32, i32) {
    %c0_i32 = arith.constant 0 : i32
    %c0_i32_0 = arith.constant 0 : i32
    %c0_i32_1 = arith.constant 0 : i32
    return %arg0, %c0_i32, %c0_i32_0 : i32, i32, i32
  }
  func.func @transform_2(%arg0: i32) -> (i32, i32, i32) {
    %c0_i32 = arith.constant 0 : i32
    %c0_i32_0 = arith.constant 0 : i32
    %c0_i32_1 = arith.constant 0 : i32
    return %arg0, %c0_i32, %c0_i32_0 : i32, i32, i32
  }
  func.func @transform_3(%arg0: i32) -> (i32, i32, i32) {
    %c0_i32 = arith.constant 0 : i32
    %c0_i32_0 = arith.constant 0 : i32
    %c0_i32_1 = arith.constant 0 : i32
    return %arg0, %c0_i32, %c0_i32_0 : i32, i32, i32
  }
}

module attributes {stable_mosaic.version = 11 : i64} {
  func.func @_conv3x3_bias_relu_kernel(%arg0: i32, %arg1: i32, %arg2: i32, %arg3: memref<1x1x434x36xbf16, #tpu.memory_space<vmem>>, %arg4: memref<3x3x36x128xbf16, #tpu.memory_space<vmem>>, %arg5: memref<1x128xf32, #tpu.memory_space<vmem>>, %arg6: memref<1x1x384x128xf32, #tpu.memory_space<vmem>>) attributes {dimension_semantics = [#tpu.dimension_semantics<parallel>, #tpu.dimension_semantics<parallel>, #tpu.dimension_semantics<arbitrary>], iteration_bounds = array<i64: 2, 1, 1>, scalar_prefetch = 0 : i64, scratch_operands = 0 : i64, tpu.core_type = #tpu.core_type<tc>, window_params = [{transform_indices = @transform_0, window_bounds = array<i64: 1, 1, 434, 36>}, {transform_indices = @transform_1, window_bounds = array<i64: 3, 3, 36, 128>}, {pipeline_mode = #tpu.pipeline_mode<synchronous>, transform_indices = @transform_2, window_bounds = array<i64: 1, 128>}, {transform_indices = @transform_3, window_bounds = array<i64: 1, 1, 384, 128>}]} {
    %c0 = arith.constant 0 : index
    %c0_0 = arith.constant 0 : index
    %c0_1 = arith.constant 0 : index
    %c0_2 = arith.constant 0 : index
    %0 = vector.load %arg3[%c0, %c0_0, %c0_1, %c0_2] : memref<1x1x434x36xbf16, #tpu.memory_space<vmem>>, vector<1x1x384x36xbf16>
    %1 = vector.shape_cast %0 : vector<1x1x384x36xbf16> to vector<384x36xbf16>
    %c0_3 = arith.constant 0 : index
    %c0_4 = arith.constant 0 : index
    %c0_5 = arith.constant 0 : index
    %c0_6 = arith.constant 0 : index
    %2 = vector.load %arg4[%c0_3, %c0_4, %c0_5, %c0_6] : memref<3x3x36x128xbf16, #tpu.memory_space<vmem>>, vector<1x1x36x128xbf16>
    %3 = vector.shape_cast %2 : vector<1x1x36x128xbf16> to vector<36x128xbf16>
    %cst = arith.constant dense<0.000000e+00> : vector<384x128xf32>
    %4 = tpu.matmul %1, %3, %cst {dimension_numbers = #tpu.dot_dimension_numbers<[1], [0], [0], [1], [0, 0, 1, 1], [], []>} : vector<384x36xbf16>, vector<36x128xbf16>, vector<384x128xf32> -> vector<384x128xf32>
    %c0_7 = arith.constant 0 : index
    %c0_8 = arith.constant 0 : index
    %c1 = arith.constant 1 : index
    %c0_9 = arith.constant 0 : index
    %5 = vector.load %arg3[%c0_7, %c0_8, %c1, %c0_9] : memref<1x1x434x36xbf16, #tpu.memory_space<vmem>>, vector<1x1x384x36xbf16>
    %6 = vector.shape_cast %5 : vector<1x1x384x36xbf16> to vector<384x36xbf16>
    %c0_10 = arith.constant 0 : index
    %c1_11 = arith.constant 1 : index
    %c0_12 = arith.constant 0 : index
    %c0_13 = arith.constant 0 : index
    %7 = vector.load %arg4[%c0_10, %c1_11, %c0_12, %c0_13] : memref<3x3x36x128xbf16, #tpu.memory_space<vmem>>, vector<1x1x36x128xbf16>
    %8 = vector.shape_cast %7 : vector<1x1x36x128xbf16> to vector<36x128xbf16>
    %cst_14 = arith.constant dense<0.000000e+00> : vector<384x128xf32>
    %9 = tpu.matmul %6, %8, %cst_14 {dimension_numbers = #tpu.dot_dimension_numbers<[1], [0], [0], [1], [0, 0, 1, 1], [], []>} : vector<384x36xbf16>, vector<36x128xbf16>, vector<384x128xf32> -> vector<384x128xf32>
    %10 = arith.addf %4, %9 : vector<384x128xf32>
    %c0_15 = arith.constant 0 : index
    %c0_16 = arith.constant 0 : index
    %c2 = arith.constant 2 : index
    %c0_17 = arith.constant 0 : index
    %11 = vector.load %arg3[%c0_15, %c0_16, %c2, %c0_17] : memref<1x1x434x36xbf16, #tpu.memory_space<vmem>>, vector<1x1x384x36xbf16>
    %12 = vector.shape_cast %11 : vector<1x1x384x36xbf16> to vector<384x36xbf16>
    %c0_18 = arith.constant 0 : index
    %c2_19 = arith.constant 2 : index
    %c0_20 = arith.constant 0 : index
    %c0_21 = arith.constant 0 : index
    %13 = vector.load %arg4[%c0_18, %c2_19, %c0_20, %c0_21] : memref<3x3x36x128xbf16, #tpu.memory_space<vmem>>, vector<1x1x36x128xbf16>
    %14 = vector.shape_cast %13 : vector<1x1x36x128xbf16> to vector<36x128xbf16>
    %cst_22 = arith.constant dense<0.000000e+00> : vector<384x128xf32>
    %15 = tpu.matmul %12, %14, %cst_22 {dimension_numbers = #tpu.dot_dimension_numbers<[1], [0], [0], [1], [0, 0, 1, 1], [], []>} : vector<384x36xbf16>, vector<36x128xbf16>, vector<384x128xf32> -> vector<384x128xf32>
    %16 = arith.addf %10, %15 : vector<384x128xf32>
    %c0_23 = arith.constant 0 : index
    %c0_24 = arith.constant 0 : index
    %c24 = arith.constant 24 : index
    %c0_25 = arith.constant 0 : index
    %17 = vector.load %arg3[%c0_23, %c0_24, %c24, %c0_25] : memref<1x1x434x36xbf16, #tpu.memory_space<vmem>>, vector<1x1x384x36xbf16>
    %18 = vector.shape_cast %17 : vector<1x1x384x36xbf16> to vector<384x36xbf16>
    %c1_26 = arith.constant 1 : index
    %c0_27 = arith.constant 0 : index
    %c0_28 = arith.constant 0 : index
    %c0_29 = arith.constant 0 : index
    %19 = vector.load %arg4[%c1_26, %c0_27, %c0_28, %c0_29] : memref<3x3x36x128xbf16, #tpu.memory_space<vmem>>, vector<1x1x36x128xbf16>
    %20 = vector.shape_cast %19 : vector<1x1x36x128xbf16> to vector<36x128xbf16>
    %cst_30 = arith.constant dense<0.000000e+00> : vector<384x128xf32>
    %21 = tpu.matmul %18, %20, %cst_30 {dimension_numbers = #tpu.dot_dimension_numbers<[1], [0], [0], [1], [0, 0, 1, 1], [], []>} : vector<384x36xbf16>, vector<36x128xbf16>, vector<384x128xf32> -> vector<384x128xf32>
    %22 = arith.addf %16, %21 : vector<384x128xf32>
    %c0_31 = arith.constant 0 : index
    %c0_32 = arith.constant 0 : index
    %c25 = arith.constant 25 : index
    %c0_33 = arith.constant 0 : index
    %23 = vector.load %arg3[%c0_31, %c0_32, %c25, %c0_33] : memref<1x1x434x36xbf16, #tpu.memory_space<vmem>>, vector<1x1x384x36xbf16>
    %24 = vector.shape_cast %23 : vector<1x1x384x36xbf16> to vector<384x36xbf16>
    %c1_34 = arith.constant 1 : index
    %c1_35 = arith.constant 1 : index
    %c0_36 = arith.constant 0 : index
    %c0_37 = arith.constant 0 : index
    %25 = vector.load %arg4[%c1_34, %c1_35, %c0_36, %c0_37] : memref<3x3x36x128xbf16, #tpu.memory_space<vmem>>, vector<1x1x36x128xbf16>
    %26 = vector.shape_cast %25 : vector<1x1x36x128xbf16> to vector<36x128xbf16>
    %cst_38 = arith.constant dense<0.000000e+00> : vector<384x128xf32>
    %27 = tpu.matmul %24, %26, %cst_38 {dimension_numbers = #tpu.dot_dimension_numbers<[1], [0], [0], [1], [0, 0, 1, 1], [], []>} : vector<384x36xbf16>, vector<36x128xbf16>, vector<384x128xf32> -> vector<384x128xf32>
    %28 = arith.addf %22, %27 : vector<384x128xf32>
    %c0_39 = arith.constant 0 : index
    %c0_40 = arith.constant 0 : index
    %c26 = arith.constant 26 : index
    %c0_41 = arith.constant 0 : index
    %29 = vector.load %arg3[%c0_39, %c0_40, %c26, %c0_41] : memref<1x1x434x36xbf16, #tpu.memory_space<vmem>>, vector<1x1x384x36xbf16>
    %30 = vector.shape_cast %29 : vector<1x1x384x36xbf16> to vector<384x36xbf16>
    %c1_42 = arith.constant 1 : index
    %c2_43 = arith.constant 2 : index
    %c0_44 = arith.constant 0 : index
    %c0_45 = arith.constant 0 : index
    %31 = vector.load %arg4[%c1_42, %c2_43, %c0_44, %c0_45] : memref<3x3x36x128xbf16, #tpu.memory_space<vmem>>, vector<1x1x36x128xbf16>
    %32 = vector.shape_cast %31 : vector<1x1x36x128xbf16> to vector<36x128xbf16>
    %cst_46 = arith.constant dense<0.000000e+00> : vector<384x128xf32>
    %33 = tpu.matmul %30, %32, %cst_46 {dimension_numbers = #tpu.dot_dimension_numbers<[1], [0], [0], [1], [0, 0, 1, 1], [], []>} : vector<384x36xbf16>, vector<36x128xbf16>, vector<384x128xf32> -> vector<384x128xf32>
    %34 = arith.addf %28, %33 : vector<384x128xf32>
    %c0_47 = arith.constant 0 : index
    %c0_48 = arith.constant 0 : index
    %c48 = arith.constant 48 : index
    %c0_49 = arith.constant 0 : index
    %35 = vector.load %arg3[%c0_47, %c0_48, %c48, %c0_49] : memref<1x1x434x36xbf16, #tpu.memory_space<vmem>>, vector<1x1x384x36xbf16>
    %36 = vector.shape_cast %35 : vector<1x1x384x36xbf16> to vector<384x36xbf16>
    %c2_50 = arith.constant 2 : index
    %c0_51 = arith.constant 0 : index
    %c0_52 = arith.constant 0 : index
    %c0_53 = arith.constant 0 : index
    %37 = vector.load %arg4[%c2_50, %c0_51, %c0_52, %c0_53] : memref<3x3x36x128xbf16, #tpu.memory_space<vmem>>, vector<1x1x36x128xbf16>
    %38 = vector.shape_cast %37 : vector<1x1x36x128xbf16> to vector<36x128xbf16>
    %cst_54 = arith.constant dense<0.000000e+00> : vector<384x128xf32>
    %39 = tpu.matmul %36, %38, %cst_54 {dimension_numbers = #tpu.dot_dimension_numbers<[1], [0], [0], [1], [0, 0, 1, 1], [], []>} : vector<384x36xbf16>, vector<36x128xbf16>, vector<384x128xf32> -> vector<384x128xf32>
    %40 = arith.addf %34, %39 : vector<384x128xf32>
    %c0_55 = arith.constant 0 : index
    %c0_56 = arith.constant 0 : index
    %c49 = arith.constant 49 : index
    %c0_57 = arith.constant 0 : index
    %41 = vector.load %arg3[%c0_55, %c0_56, %c49, %c0_57] : memref<1x1x434x36xbf16, #tpu.memory_space<vmem>>, vector<1x1x384x36xbf16>
    %42 = vector.shape_cast %41 : vector<1x1x384x36xbf16> to vector<384x36xbf16>
    %c2_58 = arith.constant 2 : index
    %c1_59 = arith.constant 1 : index
    %c0_60 = arith.constant 0 : index
    %c0_61 = arith.constant 0 : index
    %43 = vector.load %arg4[%c2_58, %c1_59, %c0_60, %c0_61] : memref<3x3x36x128xbf16, #tpu.memory_space<vmem>>, vector<1x1x36x128xbf16>
    %44 = vector.shape_cast %43 : vector<1x1x36x128xbf16> to vector<36x128xbf16>
    %cst_62 = arith.constant dense<0.000000e+00> : vector<384x128xf32>
    %45 = tpu.matmul %42, %44, %cst_62 {dimension_numbers = #tpu.dot_dimension_numbers<[1], [0], [0], [1], [0, 0, 1, 1], [], []>} : vector<384x36xbf16>, vector<36x128xbf16>, vector<384x128xf32> -> vector<384x128xf32>
    %46 = arith.addf %40, %45 : vector<384x128xf32>
    %c0_63 = arith.constant 0 : index
    %c0_64 = arith.constant 0 : index
    %c50 = arith.constant 50 : index
    %c0_65 = arith.constant 0 : index
    %47 = vector.load %arg3[%c0_63, %c0_64, %c50, %c0_65] : memref<1x1x434x36xbf16, #tpu.memory_space<vmem>>, vector<1x1x384x36xbf16>
    %48 = vector.shape_cast %47 : vector<1x1x384x36xbf16> to vector<384x36xbf16>
    %c2_66 = arith.constant 2 : index
    %c2_67 = arith.constant 2 : index
    %c0_68 = arith.constant 0 : index
    %c0_69 = arith.constant 0 : index
    %49 = vector.load %arg4[%c2_66, %c2_67, %c0_68, %c0_69] : memref<3x3x36x128xbf16, #tpu.memory_space<vmem>>, vector<1x1x36x128xbf16>
    %50 = vector.shape_cast %49 : vector<1x1x36x128xbf16> to vector<36x128xbf16>
    %cst_70 = arith.constant dense<0.000000e+00> : vector<384x128xf32>
    %51 = tpu.matmul %48, %50, %cst_70 {dimension_numbers = #tpu.dot_dimension_numbers<[1], [0], [0], [1], [0, 0, 1, 1], [], []>} : vector<384x36xbf16>, vector<36x128xbf16>, vector<384x128xf32> -> vector<384x128xf32>
    %52 = arith.addf %46, %51 : vector<384x128xf32>
    %c0_71 = arith.constant 0 : index
    %c0_72 = arith.constant 0 : index
    %53 = vector.load %arg5[%c0_71, %c0_72] : memref<1x128xf32, #tpu.memory_space<vmem>>, vector<1x128xf32>
    %54 = vector.broadcast %53 : vector<1x128xf32> to vector<384x128xf32>
    %55 = arith.addf %52, %54 : vector<384x128xf32>
    %cst_73 = arith.constant 0.000000e+00 : f32
    %56 = vector.broadcast %cst_73 : f32 to vector<384x128xf32>
    %57 = arith.maximumf %55, %56 : vector<384x128xf32>
    %c0_74 = arith.constant 0 : index
    %c0_75 = arith.constant 0 : index
    %c0_76 = arith.constant 0 : index
    %c0_77 = arith.constant 0 : index
    %58 = vector.load %arg6[%c0_74, %c0_75, %c0_76, %c0_77] : memref<1x1x384x128xf32, #tpu.memory_space<vmem>>, vector<1x1x384x128xf32>
    %59 = vector.shape_cast %58 : vector<1x1x384x128xf32> to vector<384x128xf32>
    %60 = vector.shape_cast %57 : vector<384x128xf32> to vector<1x1x384x128xf32>
    tpu.vector_store %arg6[%c0_74, %c0_75, %c0_76, %c0_77], %60 {strides = array<i32>} : memref<1x1x384x128xf32, #tpu.memory_space<vmem>>, vector<1x1x384x128xf32>,
    return
  }
  func.func @transform_0(%arg0: i32, %arg1: i32, %arg2: i32) -> (i32, i32, i32, i32) {
    %c0_i32 = arith.constant 0 : i32
    %c0_i32_0 = arith.constant 0 : i32
    return %arg0, %arg1, %c0_i32, %arg2 : i32, i32, i32, i32
  }
  func.func @transform_1(%arg0: i32, %arg1: i32, %arg2: i32) -> (i32, i32, i32, i32) {
    %c0_i32 = arith.constant 0 : i32
    %c0_i32_0 = arith.constant 0 : i32
    %c0_i32_1 = arith.constant 0 : i32
    %c0_i32_2 = arith.constant 0 : i32
    return %c0_i32, %c0_i32_0, %arg2, %c0_i32_1 : i32, i32, i32, i32
  }
  func.func @transform_2(%arg0: i32, %arg1: i32, %arg2: i32) -> (i32, i32) {
    %c0_i32 = arith.constant 0 : i32
    %c0_i32_0 = arith.constant 0 : i32
    %c0_i32_1 = arith.constant 0 : i32
    return %c0_i32, %c0_i32_0 : i32, i32
  }
  func.func @transform_3(%arg0: i32, %arg1: i32, %arg2: i32) -> (i32, i32, i32, i32) {
    %c0_i32 = arith.constant 0 : i32
    %c0_i32_0 = arith.constant 0 : i32
    %c0_i32_1 = arith.constant 0 : i32
    return %arg0, %arg1, %c0_i32, %c0_i32_0 : i32, i32, i32, i32
  }
}

</mosaic_0001>

<llo_original>
// kernel: psp_forward.2
$region0: #{psp_forward.2}
  #allocation0 [shape = 'u32[]', space=smem, size = 0x4, offset = 0x4, fixed_abs, tag = 'smem constant byte address 0x4 - core index']
  #allocation1 [shape = 'u32[144,128]{1,0:T(1,128)}', space=vmem, size = 0x12000, scoped, tag = 'internal scratch']
  %s0 = inlined_call_operand.vmem [shape: bf16[4,72,4], index: 0, kind: input, shape index: {}]
  %s1 = inlined_call_operand.vmem [shape: bf16[4,4,128], index: 1, kind: input, shape index: {}]
  %s2 = inlined_call_operand.vmem [shape: f32[4,1,128], index: 2, kind: input, shape index: {}]
  %s3 = inlined_call_operand.vmem [shape: f32[4,72,128], index: 3, kind: output, shape index: {}]
  %s4 = sld [smem:[#allocation0]]
  $region45: #{psp_forward.2} parent=0
    _
  %s6 = ssub.s32 1, %s4
  %s7 = scalar_select 0, %s6, %s4
  loop: start=0, step=1, limit=6
  $region2: #{psp_forward.2} parent=0 // loop_pre_header
    _
  $region3: #{psp_forward.2} parent=0 // loop_header
    %s9 = sphi 0, %s13
    %p10 = scmp.ge.s32.totalorder %s9, 6
    %s19 = sphi 0, %s21
    %s22 = sphi 0, %s19
    %s23 = sphi 0, %s22
    %s39 = sphi 0, %s23
    %s45 = sphi 0, %s47
    %s48 = sphi 0, %s45
    %s49 = sphi 0, %s48
    %s65 = sphi 0, %s49
    %s71 = sphi 0, %s73
    %s74 = sphi 0, %s71
    %s75 = sphi 0, %s74
    %s91 = sphi 0, %s75
    %s97 = sphi 0, %s99
    %s100 = sphi 0, %s97
    %s101 = sphi 0, %s100
    %s117 = sphi 0, %s101
  $region4: #{psp_forward.2} parent=0 // loop_header_branch
    %12 = sbr.rel (%p10) target = $region8
  $region5: #{psp_forward.2} parent=0 // loop_body
    %s14 = ssub.s32 %s9, 1
    %s15 = ssub.s32 %s9, 2
    %s16 = sadd.s32 %s9, 1
    %s17 = ssub.s32 %s9, %s16
    %p18 = scmp.eq.s32.totalorder %s17, 0
    %s20 = sadd.s32 %s19, 1
    %s21 = scalar_select %p18, %s19, %s20
    %p24 = pneg %p18
    %p25 = scmp.eq.s32.totalorder %s9, 3
    %p26 = por %p24, %p25
    %p27 = scmp.ne.s32.totalorder %s19, %s22
    %p28 = scmp.eq.s32.totalorder %s9, 0
    %p29 = por %p27, %p28
    %p30 = scmp.ne.s32.totalorder %s19, %s22
    %p31 = scmp.eq.s32.totalorder %s14, 3
    %p32 = por %p30, %p31
    %p33 = scmp.ne.s32.totalorder %s22, %s23
    %p34 = scmp.eq.s32.totalorder %s14, 0
    %p35 = por %p33, %p34
    %p36 = scmp.ne.s32.totalorder %s22, %s23
    %p37 = scmp.eq.s32.totalorder %s15, 3
    %p38 = por %p36, %p37
    %p40 = scmp.ne.s32.totalorder %s23, %s39
    %p41 = scmp.eq.s32.totalorder %s15, 0
    %p42 = por %p40, %p41
    %s43 = ssub.s32 %s9, %s16
    %p44 = scmp.eq.s32.totalorder %s43, 0
    %s46 = sadd.s32 %s45, 1
    %s47 = scalar_select %p44, %s45, %s46
    %p50 = pneg %p44
    %p51 = scmp.eq.s32.totalorder %s9, 3
    %p52 = por %p50, %p51
    %p53 = scmp.ne.s32.totalorder %s45, %s48
    %p54 = scmp.eq.s32.totalorder %s9, 0
    %p55 = por %p53, %p54
    %p56 = scmp.ne.s32.totalorder %s45, %s48
    %p57 = scmp.eq.s32.totalorder %s14, 3
    %p58 = por %p56, %p57
    %p59 = scmp.ne.s32.totalorder %s48, %s49
    %p60 = scmp.eq.s32.totalorder %s14, 0
    %p61 = por %p59, %p60
    %p62 = scmp.ne.s32.totalorder %s48, %s49
    %p63 = scmp.eq.s32.totalorder %s15, 3
    %p64 = por %p62, %p63
    %p66 = scmp.ne.s32.totalorder %s49, %s65
    %p67 = scmp.eq.s32.totalorder %s15, 0
    %p68 = por %p66, %p67
    %s69 = ssub.s32 %s9, %s16
    %p70 = scmp.eq.s32.totalorder %s69, 0
    %s72 = sadd.s32 %s71, 1
    %s73 = scalar_select %p70, %s71, %s72
    %p76 = pneg %p70
    %p77 = scmp.eq.s32.totalorder %s9, 3
    %p78 = por %p76, %p77
    %p79 = scmp.ne.s32.totalorder %s71, %s74
    %p80 = scmp.eq.s32.totalorder %s9, 0
    %p81 = por %p79, %p80
    %p82 = scmp.ne.s32.totalorder %s71, %s74
    %p83 = scmp.eq.s32.totalorder %s14, 3
    %p84 = por %p82, %p83
    %p85 = scmp.ne.s32.totalorder %s74, %s75
    %p86 = scmp.eq.s32.totalorder %s14, 0
    %p87 = por %p85, %p86
    %p88 = scmp.ne.s32.totalorder %s74, %s75
    %p89 = scmp.eq.s32.totalorder %s15, 3
    %p90 = por %p88, %p89
    %p92 = scmp.ne.s32.totalorder %s75, %s91
    %p93 = scmp.eq.s32.totalorder %s15, 0
    %p94 = por %p92, %p93
    %s95 = ssub.s32 %s9, %s16
    %p96 = scmp.eq.s32.totalorder %s95, 0
    %s98 = sadd.s32 %s97, 1
    %s99 = scalar_select %p96, %s97, %s98
    %p102 = pneg %p96
    %p103 = scmp.eq.s32.totalorder %s9, 3
    %p104 = por %p102, %p103
    %p105 = scmp.ne.s32.totalorder %s97, %s100
    %p106 = scmp.eq.s32.totalorder %s9, 0
    %p107 = por %p105, %p106
    %p108 = scmp.ne.s32.totalorder %s97, %s100
    %p109 = scmp.eq.s32.totalorder %s14, 3
    %p110 = por %p108, %p109
    %p111 = scmp.ne.s32.totalorder %s100, %s101
    %p112 = scmp.eq.s32.totalorder %s14, 0
    %p113 = por %p111, %p112
    %p114 = scmp.ne.s32.totalorder %s100, %s101
    %p115 = scmp.eq.s32.totalorder %s15, 3
    %p116 = por %p114, %p115
    %p118 = scmp.ne.s32.totalorder %s101, %s117
    %p119 = scmp.eq.s32.totalorder %s15, 0
    %p120 = por %p118, %p119
    %p121 = scmp.le.s32.totalorder 1, %s9
    %p122 = scmp.lt.s32.totalorder %s9, 5
    %p123 = pnand %p121, %p122
    %p124 = pneg %p123
    // Predicated region
    $region9: #{psp_forward.2} parent=5 // pred_check
      _
    $region10: #{psp_forward.2} parent=5 // pred_check_branch
      %126 = sbr.rel (%p123) target = $region12
    $region11: #{psp_forward.2} parent=5 // pred_region
      %s127 = ssub.s32 %s9, 1
    $region12: #{psp_forward.2} parent=5 // pred_fallthru
      _
    %p128 = scmp.lt.s32.totalorder %s9, 4
    // Predicated region
    $region13: #{psp_forward.2} parent=5 // pred_check
      %p129 = pneg %p128
    $region14: #{psp_forward.2} parent=5 // pred_check_branch
      %131 = sbr.rel (%p129) target = $region16
    $region15: #{psp_forward.2} parent=5 // pred_region
      // Predicated region
      $region17: #{psp_forward.2} parent=15 // pred_check
        %p132 = pneg %p29
      $region18: #{psp_forward.2} parent=15 // pred_check_branch
        %134 = sbr.rel (%p132) target = $region20
      $region19: #{psp_forward.2} parent=15 // pred_region
        %p135 = scmp.lt.s32.totalorder %s9, 3
        %s136 = scalar_select %p135, %s9, 3
        %s137 = smul.addr %s136, 9
        %s138 = smul.addr %s137, 4
        %s139 = scalar_lea.vmem %s0, %s138
      $region20: #{psp_forward.2} parent=15 // pred_fallthru
        _
      // Predicated region
      $region21: #{psp_forward.2} parent=15 // pred_check
        %p140 = pneg %p55
      $region22: #{psp_forward.2} parent=15 // pred_check_branch
        %142 = sbr.rel (%p140) target = $region24
      $region23: #{psp_forward.2} parent=15 // pred_region
        %p143 = scmp.lt.s32.totalorder %s9, 3
        %s144 = scalar_select %p143, %s9, 3
        %s145 = smul.addr %s144, 2
        %s146 = scalar_lea.vmem %s1, %s145
      $region24: #{psp_forward.2} parent=15 // pred_fallthru
        _
      // Predicated region
      $region25: #{psp_forward.2} parent=15 // pred_check
        %p147 = pneg %p81
      $region26: #{psp_forward.2} parent=15 // pred_check_branch
        %149 = sbr.rel (%p147) target = $region28
      $region27: #{psp_forward.2} parent=15 // pred_region
        %p150 = scmp.lt.s32.totalorder %s9, 3
        %s151 = scalar_select %p150, %s9, 3
        %s152 = scalar_lea.vmem %s2, %s151
      $region28: #{psp_forward.2} parent=15 // pred_fallthru
        _
    $region16: #{psp_forward.2} parent=5 // pred_fallthru
      _
    %p153 = scmp.le.s32.totalorder 1, %s9
    %p154 = scmp.lt.s32.totalorder %s9, 5
    %p155 = pnand %p153, %p154
    %p156 = pneg %p155
    // Predicated region
    $region29: #{psp_forward.2} parent=5 // pred_check
      _
    $region30: #{psp_forward.2} parent=5 // pred_check_branch
      %158 = sbr.rel (%p155) target = $region32
    $region31: #{psp_forward.2} parent=5 // pred_region
      %s159 = ssub.s32 %s9, 1
      %p160 = scmp.lt.s32.totalorder %s14, 3
      %s161 = scalar_select %p160, %s14, 3
      %s162 = smul.addr %s161, 9
      %s163 = smul.addr %s162, 4
      %s164 = scalar_lea.vmem %s0, %s163
      %p165 = pneg %p35
      %p166 = pneg %p32
      %p167 = scmp.lt.s32.totalorder %s14, 3
      %s168 = scalar_select %p167, %s14, 3
      %s169 = smul.addr %s168, 2
      %s170 = scalar_lea.vmem %s1, %s169
      %p171 = pneg %p61
      %p172 = pneg %p58
      %p173 = scmp.lt.s32.totalorder %s14, 3
      %s174 = scalar_select %p173, %s14, 3
      %s175 = scalar_lea.vmem %s2, %s174
      %p176 = pneg %p87
      %p177 = pneg %p84
      %p178 = pneg %p113
      %p179 = pneg %p110
      %p180 = scmp.lt.s32.totalorder %s14, 3
      %s181 = scalar_select %p180, %s14, 3
      %s182 = smul.addr %s181, 9
      %s183 = smul.addr %s182, 8
      %s184 = scalar_lea.vmem %s3, %s183
      %p185 = scmp.lt.s32.totalorder %s14, 3
      %s186 = scalar_select %p185, %s14, 3
      %s187 = smul.addr %s186, 9
      %s188 = smul.addr %s187, 4
      %s189 = scalar_lea.vmem %s0, %s188
      %p190 = scmp.lt.s32.totalorder %s14, 3
      %s191 = scalar_select %p190, %s14, 3
      %s192 = smul.addr %s191, 2
      %s193 = scalar_lea.vmem %s1, %s192
      %p194 = scmp.lt.s32.totalorder %s14, 3
      %s195 = scalar_select %p194, %s14, 3
      %s196 = scalar_lea.vmem %s2, %s195
      %p197 = scmp.lt.s32.totalorder %s14, 3
      %s198 = scalar_select %p197, %s14, 3
      %s199 = smul.addr %s198, 9
      %s200 = smul.addr %s199, 8
      %s201 = scalar_lea.vmem %s3, %s200
      %v203 = vld [vmem:[%s189] sm:$0xf]
      %v204 = vld [vmem:[%s189 + $0x4] sm:$0xf]
      %v205 = vld [vmem:[%s189 + $0x8] sm:$0xf]
      %v206 = vld [vmem:[%s189 + $0xc] sm:$0xf]
      %v207 = vld [vmem:[%s189 + $0x10] sm:$0xf]
      %v208 = vld [vmem:[%s189 + $0x14] sm:$0xf]
      %v209 = vld [vmem:[%s189 + $0x18] sm:$0xf]
      %v210 = vld [vmem:[%s189 + $0x1c] sm:$0xf]
      %v211 = vld [vmem:[%s189 + $0x20] sm:$0xf]
      %v212 = vld [vmem:[%s193] sm:$0x3]
      %v213 = vld [vmem:[%s196] sm:$0x1]
      %v215 = vlaneseq
      %v216 = vshrl.u32 %v215, 7
      %v217 = vsub.s32 0, %v216
      %v218 = vrot.slane %v213, %v217
      %v229 = vunpack.c.l.b16 %v203
      %v230 = vunpack.c.l.b16 %v204
      %v231 = vunpack.c.l.b16 %v205
      %v232 = vunpack.c.l.b16 %v206
      %v233 = vunpack.c.l.b16 %v207
      %v234 = vunpack.c.l.b16 %v208
      %v235 = vunpack.c.l.b16 %v209
      %v236 = vunpack.c.l.b16 %v210
      %v237 = vunpack.c.l.b16 %v211
      %v238 = vpack.c.b16 %v230, %v229
      %v239 = vpack.c.b16 %v232, %v231
      %v240 = vpack.c.b16 %v234, %v233
      %v241 = vpack.c.b16 %v236, %v235
      %v242 = vpack.c.b16 %v237, %v237
      %vm243 = vcmask 31744
      %v245 = vsel %vm243, %v238, 0
      %v248 = vsel %vm243, %v239, 0
      %v251 = vsel %vm243, %v240, 0
      %v254 = vsel %vm243, %v241, 0
      %v257 = vsel %vm243, %v242, 0
      %vm259 = vcmask 1041408
      %v261 = vsel %vm259, %v212, 0
      %263 = vmatprep.subr.bf16.mxu0 0
      %264 = vmatpush1.bf16.msra.mxu0 %v261
      %265 = vmatprep.subr.bf16.mxu0 0
      %266 = vmatpush1.bf16.msra.mxu0 0
      %267 = vmatprep.subr.bf16.mxu0 0
      %268 = vmatpush1.bf16.msra.mxu0 0
      %269 = vmatprep.subr.bf16.mxu0 0
      %270 = vmatpush1.bf16.msra.mxu0 0
      %271 = vmatprep.subr.bf16.mxu0 0
      %272 = vmatpush1.bf16.msra.mxu0 0
      %273 = vmatprep.subr.bf16.mxu0 0
      %274 = vmatpush1.bf16.msra.mxu0 0
      %275 = vmatprep.subr.bf16.mxu0 0
      %276 = vmatpush1.bf16.msra.mxu0 0
      %277 = vmatprep.subr.bf16.mxu0 0
      %278 = vmatpush1.bf16.msra.mxu0 0
      %279 = vmatprep.subr.bf16.mxu0 0
      %280 = vmatpush1.bf16.msra.mxu0 0
      %281 = vmatprep.subr.bf16.mxu0 0
      %282 = vmatpush1.bf16.msra.mxu0 0
      %283 = vmatprep.subr.bf16.mxu0 0
      %284 = vmatpush1.bf16.msra.mxu0 0
      %285 = vmatprep.subr.bf16.mxu0 0
      %286 = vmatpush1.bf16.msra.mxu0 0
      %287 = vmatprep.subr.bf16.mxu0 0
      %288 = vmatpush1.bf16.msra.mxu0 0
      %289 = vmatprep.subr.bf16.mxu0 0
      %290 = vmatpush1.bf16.msra.mxu0 0
      %291 = vmatprep.subr.bf16.mxu0 0
      %292 = vmatpush1.bf16.msra.mxu0 0
      %293 = vmatprep.subr.bf16.mxu0 0
      %294 = vmatpush1.bf16.msra.mxu0 0
      %295 = vmatprep.mubr.bf16.mxu0 0
      %296 = vmatmul.mubr.bf16.gmra.mrb[0].mxu0 %v245
      %v297 = vpop.f32.mrb[0].mxu0
      %v298 = vadd.f32 %v218, %v297
      %v299 = vpop.f32.mrb[0].mxu0
      %v300 = vpop.f32.mrb[0].mxu0
      %v301 = vadd.f32 %v218, %v300
      %v302 = vpop.f32.mrb[0].mxu0
      %303 = vmatprep.mubr.bf16.mxu0 0
      %304 = vmatmul.mubr.bf16.gmra.mrb[0].mxu0 %v248
      %v305 = vpop.f32.mrb[0].mxu0
      %v306 = vadd.f32 %v218, %v305
      %v307 = vpop.f32.mrb[0].mxu0
      %v308 = vpop.f32.mrb[0].mxu0
      %v309 = vadd.f32 %v218, %v308
      %v310 = vpop.f32.mrb[0].mxu0
      %311 = vmatprep.mubr.bf16.mxu0 0
      %312 = vmatmul.mubr.bf16.gmra.mrb[0].mxu0 %v251
      %v313 = vpop.f32.mrb[0].mxu0
      %v314 = vadd.f32 %v218, %v313
      %v315 = vpop.f32.mrb[0].mxu0
      %v316 = vpop.f32.mrb[0].mxu0
      %v317 = vadd.f32 %v218, %v316
      %v318 = vpop.f32.mrb[0].mxu0
      %319 = vmatprep.mubr.bf16.mxu0 0
      %320 = vmatmul.mubr.bf16.gmra.mrb[0].mxu0 %v254
      %v321 = vpop.f32.mrb[0].mxu0
      %v322 = vadd.f32 %v218, %v321
      %v323 = vpop.f32.mrb[0].mxu0
      %v324 = vpop.f32.mrb[0].mxu0
      %v325 = vadd.f32 %v218, %v324
      %v326 = vpop.f32.mrb[0].mxu0
      %327 = vmatprep.mubr.bf16.mxu0 0
      %328 = vmatmul.mubr.bf16.gmra.mrb[0].mxu0 %v257
      %v329 = vpop.f32.mrb[0].mxu0
      %v330 = vadd.f32 %v218, %v329
      %v331 = vpop.f32.mrb[0].mxu0
      %v332 = vpop.f32.mrb[0].mxu0
      %v333 = vpop.f32.mrb[0].mxu0
      %334 = vdwg.mxu0
      %v335 = vmax.f32 %v298, 0.0
      %v336 = vmax.f32 %v301, 0.0
      %v337 = vmax.f32 %v306, 0.0
      %v338 = vmax.f32 %v309, 0.0
      %v339 = vmax.f32 %v314, 0.0
      %v340 = vmax.f32 %v317, 0.0
      %v341 = vmax.f32 %v322, 0.0
      %v342 = vmax.f32 %v325, 0.0
      %v343 = vmax.f32 %v330, 0.0
      %344 = vst [vmem:[%s201] sm:$0xff] %v335
      %345 = vst [vmem:[%s201 + $0x8] sm:$0xff] %v336
      %346 = vst [vmem:[%s201 + $0x10] sm:$0xff] %v337
      %347 = vst [vmem:[%s201 + $0x18] sm:$0xff] %v338
      %348 = vst [vmem:[%s201 + $0x20] sm:$0xff] %v339
      %349 = vst [vmem:[%s201 + $0x28] sm:$0xff] %v340
      %350 = vst [vmem:[%s201 + $0x30] sm:$0xff] %v341
      %351 = vst [vmem:[%s201 + $0x38] sm:$0xff] %v342
      %352 = vst [vmem:[%s201 + $0x40] sm:$0xff] %v343
      %p353 = scmp.lt.s32.totalorder %s14, 3
      %s354 = scalar_select %p353, %s14, 3
      %s355 = smul.addr %s354, 9
      %s356 = smul.addr %s355, 8
      %s357 = scalar_lea.vmem %s3, %s356
      // Predicated region
      $region33: #{psp_forward.2} parent=31 // pred_check
        %p358 = pneg %p110
      $region34: #{psp_forward.2} parent=31 // pred_check_branch
        %360 = sbr.rel (%p358) target = $region36
      $region35: #{psp_forward.2} parent=31 // pred_region
        _
      $region36: #{psp_forward.2} parent=31 // pred_fallthru
        _
    $region32: #{psp_forward.2} parent=5 // pred_fallthru
      _
    %p361 = scmp.le.s32.totalorder 2, %s9
    // Predicated region
    $region37: #{psp_forward.2} parent=5 // pred_check
      %p362 = pneg %p361
    $region38: #{psp_forward.2} parent=5 // pred_check_branch
      %364 = sbr.rel (%p362) target = $region40
    $region39: #{psp_forward.2} parent=5 // pred_region
      %s365 = ssub.s32 %s9, 2
      // Predicated region
      $region41: #{psp_forward.2} parent=39 // pred_check
        %p366 = pneg %p116
      $region42: #{psp_forward.2} parent=39 // pred_check_branch
        %368 = sbr.rel (%p366) target = $region44
      $region43: #{psp_forward.2} parent=39 // pred_region
        %p369 = scmp.lt.s32.totalorder %s15, 3
        %s370 = scalar_select %p369, %s15, 3
        %s371 = smul.addr %s370, 9
        %s372 = smul.addr %s371, 8
        %s373 = scalar_lea.vmem %s3, %s372
      $region44: #{psp_forward.2} parent=39 // pred_fallthru
        _
    $region40: #{psp_forward.2} parent=5 // pred_fallthru
      _
  $region6: #{psp_forward.2} parent=0 // loop_footer
    %s13 = sadd.s32 1, %s9
  $region7: #{psp_forward.2} parent=0 // loop_footer_branch
    %8 = sbr.rel target = $region3
  $region8: #{psp_forward.2} parent=0 // loop_exit
    _

// kernel: squeeze.14
$region0: #{squeeze.14}
  %s0 = inlined_call_operand.vmem [shape: f32[1,18,8], index: 0, kind: input, shape index: {}]
  %s1 = inlined_call_operand.vmem [shape: f32[2,3,3,8], index: 1, kind: output, shape index: {}]
  $region1: #{squeeze.14} parent=0
    #allocation0 [shape = 'u8[24576]{0}', space=vmem, size = 0x6000, scoped, tag = 'scoped mem for output reshape']
    %v2 = vld [vmem:[%s0] sm:$0xff]
    %vm3 = vcmask 64512
    %4 = vst.msk [vmem:[#allocation0] sm:$0x7] %vm3, %v2
    %s5 = scalar_lea.vmem [#allocation0], 5
    %6 = vst.msk [vmem:[%s5] sm:$0x38] %vm3, %v2
    %s7 = scalar_lea.vmem [#allocation0], 10
    %8 = vst.msk [vmem:[%s7] sm:$0xc0] %vm3, %v2
    %s9 = scalar_lea.vmem %s0, 8
    %v10 = vld [vmem:[%s9] sm:$0xff]
    %vm11 = vcmask 64512
    %s12 = scalar_lea.vmem [#allocation0], 18
    %13 = vst.msk [vmem:[%s12] ss:$6 sm:$0x3] %vm11, %v10
    %s14 = scalar_lea.vmem [#allocation0], 23
    %15 = vst.msk [vmem:[%s14] sm:$0xc] %vm11, %v10
    %s16 = scalar_lea.vmem [#allocation0], 28
    %17 = vst.msk [vmem:[%s16] sm:$0x70] %vm11, %v10
    %s18 = scalar_lea.vmem [#allocation0], 33
    %19 = vst.msk [vmem:[%s18] sm:$0x80] %vm11, %v10
    %s20 = scalar_lea.vmem %s0, 16
    %v21 = vld [vmem:[%s20] sm:$0x3]
    %vm22 = vcmask 64512
    %s23 = scalar_lea.vmem [#allocation0], 41
    %24 = vst.msk [vmem:[%s23] sm:$0x3] %vm22, %v21
    %s26 = sshllo.u32 0, 4
    %v28 = vld [vmem:[#allocation0] sm:%s26]
    %s29 = sshllo.u32 0, 4
    %30 = vst [vmem:[%s1] sm:%s29] %v28
    %s31 = scalar_lea.vmem [#allocation0], 8
    %v32 = vld [vmem:[%s31] sm:%s26]
    %s33 = sshllo.u32 0, 4
    %s34 = scalar_lea.vmem %s1, 4
    %35 = vst [vmem:[%s34] sm:%s33] %v32
    %s36 = scalar_lea.vmem [#allocation0], 16
    %v37 = vld [vmem:[%s36] sm:%s26]
    %s38 = sshllo.u32 0, 4
    %s39 = smul.addr 4, 2
    %s40 = scalar_lea.vmem %s1, %s39
    %41 = vst [vmem:[%s40] sm:%s38] %v37
    %s42 = scalar_lea.vmem [#allocation0], 24
    %v43 = vld [vmem:[%s42] sm:%s26]
    %s44 = sshllo.u32 0, 4
    %s45 = smul.addr 4, 3
    %s46 = scalar_lea.vmem %s1, %s45
    %47 = vst [vmem:[%s46] sm:%s44] %v43
    %s48 = scalar_lea.vmem [#allocation0], 32
    %v49 = vld [vmem:[%s48] sm:%s26]
    %s50 = sshllo.u32 0, 4
    %s51 = smul.addr 4, 4
    %s52 = scalar_lea.vmem %s1, %s51
    %53 = vst [vmem:[%s52] sm:%s50] %v49
    %s54 = scalar_lea.vmem [#allocation0], 40
    %v55 = vld [vmem:[%s54] sm:%s26]
    %s56 = sshllo.u32 0, 4
    %s57 = smul.addr 4, 5
    %s58 = scalar_lea.vmem %s1, %s57
    %59 = vst [vmem:[%s58] sm:%s56] %v55

// kernel: psp_forward.3
$region0: #{psp_forward.3}
  #allocation0 [shape = 'u32[]', space=smem, size = 0x4, offset = 0x4, fixed_abs, tag = 'smem constant byte address 0x4 - core index']
  #allocation1 [shape = 'u32[144,128]{1,0:T(1,128)}', space=vmem, size = 0x12000, scoped, tag = 'internal scratch']
  %s0 = inlined_call_operand.vmem [shape: bf16[2,1,434,36], index: 0, kind: input, shape index: {}]
  %s1 = inlined_call_operand.vmem [shape: bf16[3,3,36,128], index: 1, kind: input, shape index: {}]
  %s2 = inlined_call_operand.vmem [shape: f32[1,128], index: 2, kind: input, shape index: {}]
  %s3 = inlined_call_operand.vmem [shape: f32[2,1,384,128], index: 3, kind: output, shape index: {}]
  %s4 = sld [smem:[#allocation0]]
  $region45: #{psp_forward.3} parent=0
    _
  %s6 = ssub.s32 1, %s4
  %s7 = scalar_select 0, %s6, %s4
  loop: start=0, step=1, limit=4
  $region2: #{psp_forward.3} parent=0 // loop_pre_header
    _
  $region3: #{psp_forward.3} parent=0 // loop_header
    %s9 = sphi 0, %s13
    %p10 = scmp.ge.s32.totalorder %s9, 4
    %s16 = sphi 0, %s35
    %s17 = sphi 0, %s31
    %s18 = sphi 0, %s27
    %s19 = sphi 0, %s16
    %s20 = sphi 0, %s17
    %s21 = sphi 0, %s18
    %s22 = sphi 0, %s19
    %s23 = sphi 0, %s20
    %s24 = sphi 0, %s21
    %s42 = sphi 0, %s44
    %s45 = sphi 0, %s42
    %s46 = sphi 0, %s45
    %s62 = sphi 0, %s46
    %s68 = sphi 0, %s70
    %s71 = sphi 0, %s68
    %s72 = sphi 0, %s71
    %s88 = sphi 0, %s72
    %s92 = sphi 0, %s92
    %s94 = sphi 0, %s92
    %s95 = sphi 0, %s94
    %s109 = sphi 0, %s95
    %s117 = sphi 0, %s119
    %s120 = sphi 0, %s117
    %s121 = sphi 0, %s120
    %s137 = sphi 0, %s121
  $region4: #{psp_forward.3} parent=0 // loop_header_branch
    %12 = sbr.rel (%p10) target = $region8
  $region5: #{psp_forward.3} parent=0 // loop_body
    %s14 = ssub.s32 %s9, 1
    %s15 = ssub.s32 %s9, 2
    %s25 = sadd.s32 1, %s18
    %p26 = scmp.ge.s32.totalorder %s25, 1
    %s27 = scalar_select %p26, 0, %s25
    %s28 = sadd.s32 1, %s17
    %s29 = scalar_select %p26, %s28, %s17
    %p30 = scmp.ge.s32.totalorder %s29, 1
    %s31 = scalar_select %p30, 0, %s29
    %s32 = sadd.s32 1, %s16
    %s33 = scalar_select %p30, %s32, %s16
    %p34 = scmp.ge.s32.totalorder %s33, 2
    %s35 = scalar_select %p34, 0, %s33
    %s36 = ssub.s32 %s16, %s35
    %s37 = ssub.s32 %s17, %s31
    %s38 = sor.u32 %s36, %s37
    %s39 = ssub.s32 %s18, %s27
    %s40 = sor.u32 %s38, %s39
    %p41 = scmp.eq.s32.totalorder %s40, 0
    %s43 = sadd.s32 %s42, 1
    %s44 = scalar_select %p41, %s42, %s43
    %p47 = pneg %p41
    %p48 = scmp.eq.s32.totalorder %s9, 1
    %p49 = por %p47, %p48
    %p50 = scmp.ne.s32.totalorder %s42, %s45
    %p51 = scmp.eq.s32.totalorder %s9, 0
    %p52 = por %p50, %p51
    %p53 = scmp.ne.s32.totalorder %s42, %s45
    %p54 = scmp.eq.s32.totalorder %s14, 1
    %p55 = por %p53, %p54
    %p56 = scmp.ne.s32.totalorder %s45, %s46
    %p57 = scmp.eq.s32.totalorder %s14, 0
    %p58 = por %p56, %p57
    %p59 = scmp.ne.s32.totalorder %s45, %s46
    %p60 = scmp.eq.s32.totalorder %s15, 1
    %p61 = por %p59, %p60
    %p63 = scmp.ne.s32.totalorder %s46, %s62
    %p64 = scmp.eq.s32.totalorder %s15, 0
    %p65 = por %p63, %p64
    %s66 = ssub.s32 %s18, %s27
    %p67 = scmp.eq.s32.totalorder %s66, 0
    %s69 = sadd.s32 %s68, 1
    %s70 = scalar_select %p67, %s68, %s69
    %p73 = pneg %p67
    %p74 = scmp.eq.s32.totalorder %s9, 1
    %p75 = por %p73, %p74
    %p76 = scmp.ne.s32.totalorder %s68, %s71
    %p77 = scmp.eq.s32.totalorder %s9, 0
    %p78 = por %p76, %p77
    %p79 = scmp.ne.s32.totalorder %s68, %s71
    %p80 = scmp.eq.s32.totalorder %s14, 1
    %p81 = por %p79, %p80
    %p82 = scmp.ne.s32.totalorder %s71, %s72
    %p83 = scmp.eq.s32.totalorder %s14, 0
    %p84 = por %p82, %p83
    %p85 = scmp.ne.s32.totalorder %s71, %s72
    %p86 = scmp.eq.s32.totalorder %s15, 1
    %p87 = por %p85, %p86
    %p89 = scmp.ne.s32.totalorder %s72, %s88
    %p90 = scmp.eq.s32.totalorder %s15, 0
    %p91 = por %p89, %p90
    %s93 = sadd.s32 %s92, 1
    %p96 = scmp.eq.s32.totalorder %s9, 1
    %p97 = scmp.ne.s32.totalorder %s92, %s94
    %p98 = scmp.eq.s32.totalorder %s9, 0
    %p99 = por %p97, %p98
    %p100 = scmp.ne.s32.totalorder %s92, %s94
    %p101 = scmp.eq.s32.totalorder %s14, 1
    %p102 = por %p100, %p101
    %p103 = scmp.ne.s32.totalorder %s94, %s95
    %p104 = scmp.eq.s32.totalorder %s14, 0
    %p105 = por %p103, %p104
    %p106 = scmp.ne.s32.totalorder %s94, %s95
    %p107 = scmp.eq.s32.totalorder %s15, 1
    %p108 = por %p106, %p107
    %p110 = scmp.ne.s32.totalorder %s95, %s109
    %p111 = scmp.eq.s32.totalorder %s15, 0
    %p112 = por %p110, %p111
    %s113 = ssub.s32 %s16, %s35
    %s114 = ssub.s32 %s17, %s31
    %s115 = sor.u32 %s113, %s114
    %p116 = scmp.eq.s32.totalorder %s115, 0
    %s118 = sadd.s32 %s117, 1
    %s119 = scalar_select %p116, %s117, %s118
    %p122 = pneg %p116
    %p123 = scmp.eq.s32.totalorder %s9, 1
    %p124 = por %p122, %p123
    %p125 = scmp.ne.s32.totalorder %s117, %s120
    %p126 = scmp.eq.s32.totalorder %s9, 0
    %p127 = por %p125, %p126
    %p128 = scmp.ne.s32.totalorder %s117, %s120
    %p129 = scmp.eq.s32.totalorder %s14, 1
    %p130 = por %p128, %p129
    %p131 = scmp.ne.s32.totalorder %s120, %s121
    %p132 = scmp.eq.s32.totalorder %s14, 0
    %p133 = por %p131, %p132
    %p134 = scmp.ne.s32.totalorder %s120, %s121
    %p135 = scmp.eq.s32.totalorder %s15, 1
    %p136 = por %p134, %p135
    %p138 = scmp.ne.s32.totalorder %s121, %s137
    %p139 = scmp.eq.s32.totalorder %s15, 0
    %p140 = por %p138, %p139
    %p141 = scmp.le.s32.totalorder 1, %s9
    %p142 = scmp.lt.s32.totalorder %s9, 3
    %p143 = pnand %p141, %p142
    %p144 = pneg %p143
    // Predicated region
    $region9: #{psp_forward.3} parent=5 // pred_check
      _
    $region10: #{psp_forward.3} parent=5 // pred_check_branch
      %146 = sbr.rel (%p143) target = $region12
    $region11: #{psp_forward.3} parent=5 // pred_region
      %s147 = ssub.s32 %s9, 1
      // Predicated region
      $region13: #{psp_forward.3} parent=11 // pred_check
        %p148 = pneg %p84
      $region14: #{psp_forward.3} parent=11 // pred_check_branch
        %150 = sbr.rel (%p148) target = $region16
      $region15: #{psp_forward.3} parent=11 // pred_region
        %s151 = smul.u32 5, %s21
        %p152 = scmp.lt.s32.totalorder %s151, 4
        %s153 = scalar_select %p152, %s151, 4
        %s154 = smul.addr %s153, 4
        %s155 = scalar_lea.vmem %s1, %s154
        %s156 = smul.u32 5, %s21
      $region16: #{psp_forward.3} parent=11 // pred_fallthru
        _
      // Predicated region
      $region17: #{psp_forward.3} parent=11 // pred_check
        %p157 = pneg %p105
      $region18: #{psp_forward.3} parent=11 // pred_check_branch
        %159 = sbr.rel (%p157) target = $region20
      $region19: #{psp_forward.3} parent=11 // pred_region
        _
      $region20: #{psp_forward.3} parent=11 // pred_fallthru
        _
    $region12: #{psp_forward.3} parent=5 // pred_fallthru
      _
    %p160 = scmp.lt.s32.totalorder %s9, 2
    // Predicated region
    $region21: #{psp_forward.3} parent=5 // pred_check
      %p161 = pneg %p160
    $region22: #{psp_forward.3} parent=5 // pred_check_branch
      %163 = sbr.rel (%p161) target = $region24
    $region23: #{psp_forward.3} parent=5 // pred_region
      // Predicated region
      $region25: #{psp_forward.3} parent=23 // pred_check
        %p164 = pneg %p52
      $region26: #{psp_forward.3} parent=23 // pred_check_branch
        %166 = sbr.rel (%p164) target = $region28
      $region27: #{psp_forward.3} parent=23 // pred_region
        %p167 = scmp.lt.s32.totalorder %s16, 1
        %s168 = scalar_select %p167, %s16, 1
        %p169 = scmp.lt.s32.totalorder %s17, 0
        %s170 = scalar_select %p169, %s17, 0
        %p171 = scmp.lt.s32.totalorder %s18, 0
        %s172 = scalar_select %p171, %s18, 0
        %s173 = smul.addr %s170, 55
        %s174 = sadd.s32 %s172, %s173
        %s175 = smul.addr %s168, 55
        %s176 = sadd.s32 %s174, %s175
        %s177 = smul.addr %s176, 4
        %s178 = scalar_lea.vmem %s0, %s177
      $region28: #{psp_forward.3} parent=23 // pred_fallthru
        _
    $region24: #{psp_forward.3} parent=5 // pred_fallthru
      _
    %p179 = scmp.le.s32.totalorder 1, %s9
    %p180 = scmp.lt.s32.totalorder %s9, 3
    %p181 = pnand %p179, %p180
    %p182 = pneg %p181
    // Predicated region
    $region29: #{psp_forward.3} parent=5 // pred_check
      _
    $region30: #{psp_forward.3} parent=5 // pred_check_branch
      %184 = sbr.rel (%p181) target = $region32
    $region31: #{psp_forward.3} parent=5 // pred_region
      %s185 = ssub.s32 %s9, 1
      %p186 = scmp.lt.s32.totalorder %s19, 1
      %s187 = scalar_select %p186, %s19, 1
      %p188 = scmp.lt.s32.totalorder %s20, 0
      %s189 = scalar_select %p188, %s20, 0
      %p190 = scmp.lt.s32.totalorder %s21, 0
      %s191 = scalar_select %p190, %s21, 0
      %s192 = smul.addr %s189, 55
      %s193 = sadd.s32 %s191, %s192
      %s194 = smul.addr %s187, 55
      %s195 = sadd.s32 %s193, %s194
      %s196 = smul.addr %s195, 4
      %s197 = scalar_lea.vmem %s0, %s196
      %p198 = pneg %p58
      %p199 = pneg %p55
      %s200 = smul.u32 5, %s21
      %p201 = scmp.lt.s32.totalorder %s200, 4
      %s202 = scalar_select %p201, %s200, 4
      %s203 = smul.addr %s202, 4
      %s204 = scalar_lea.vmem %s1, %s203
      %p205 = pneg %p84
      %p206 = pneg %p81
      %p207 = pneg %p105
      %p208 = pneg %p102
      %p209 = pneg %p133
      %p210 = pneg %p130
      %p211 = scmp.lt.s32.totalorder %s19, 1
      %s212 = scalar_select %p211, %s19, 1
      %p213 = scmp.lt.s32.totalorder %s20, 0
      %s214 = scalar_select %p213, %s20, 0
      %s215 = smul.addr %s214, 48
      %s216 = smul.addr %s212, 48
      %s217 = sadd.s32 %s215, %s216
      %s218 = smul.addr %s217, 8
      %s219 = scalar_lea.vmem %s3, %s218
      %p220 = scmp.lt.s32.totalorder %s19, 1
      %s221 = scalar_select %p220, %s19, 1
      %p222 = scmp.lt.s32.totalorder %s20, 0
      %s223 = scalar_select %p222, %s20, 0
      %p224 = scmp.lt.s32.totalorder %s21, 0
      %s225 = scalar_select %p224, %s21, 0
      %s226 = smul.addr %s223, 55
      %s227 = sadd.s32 %s225, %s226
      %s228 = smul.addr %s221, 55
      %s229 = sadd.s32 %s227, %s228
      %s230 = smul.addr %s229, 4
      %s231 = scalar_lea.vmem %s0, %s230
      %s232 = smul.u32 5, %s21
      %p233 = scmp.lt.s32.totalorder %s232, 4
      %s234 = scalar_select %p233, %s232, 4
      %s235 = smul.addr %s234, 4
      %s236 = scalar_lea.vmem %s1, %s235
      %s237 = smul.u32 5, %s21
      %p238 = scmp.lt.s32.totalorder %s19, 1
      %s239 = scalar_select %p238, %s19, 1
      %p240 = scmp.lt.s32.totalorder %s20, 0
      %s241 = scalar_select %p240, %s20, 0
      %s242 = smul.addr %s241, 48
      %s243 = smul.addr %s239, 48
      %s244 = sadd.s32 %s242, %s243
      %s245 = smul.addr %s244, 8
      %s246 = scalar_lea.vmem %s3, %s245
      %v248 = vld [vmem:[%s231] sm:$0xf]
      %v249 = vld [vmem:[%s231 + $0x4] sm:$0xf]
      %v250 = vld [vmem:[%s231 + $0x8] sm:$0xf]
      %v251 = vld [vmem:[%s231 + $0xc] sm:$0xf]
      %v252 = vld [vmem:[%s231 + $0x10] sm:$0xf]
      %v253 = vld [vmem:[%s231 + $0x14] sm:$0xf]
      %v254 = vld [vmem:[%s231 + $0x18] sm:$0xf]
      %v255 = vld [vmem:[%s231 + $0x1c] sm:$0xf]
      %v256 = vld [vmem:[%s231 + $0x20] sm:$0xf]
      %v257 = vld [vmem:[%s231 + $0x24] sm:$0xf]
      %v258 = vld [vmem:[%s231 + $0x28] sm:$0xf]
      %v259 = vld [vmem:[%s231 + $0x2c] sm:$0xf]
      %v260 = vld [vmem:[%s231 + $0x30] sm:$0xf]
      %v261 = vld [vmem:[%s231 + $0x34] sm:$0xf]
      %v262 = vld [vmem:[%s231 + $0x38] sm:$0xf]
      %v263 = vld [vmem:[%s231 + $0x3c] sm:$0xf]
      %v264 = vld [vmem:[%s231 + $0x40] sm:$0xf]
      %v265 = vld [vmem:[%s231 + $0x44] sm:$0xf]
      %v266 = vld [vmem:[%s231 + $0x48] sm:$0xf]
      %v267 = vld [vmem:[%s231 + $0x4c] sm:$0xf]
      %v268 = vld [vmem:[%s231 + $0x50] sm:$0xf]
      %v269 = vld [vmem:[%s231 + $0x54] sm:$0xf]
      %v270 = vld [vmem:[%s231 + $0x58] sm:$0xf]
      %v271 = vld [vmem:[%s231 + $0x5c] sm:$0xf]
      %v272 = vld [vmem:[%s231 + $0x60] sm:$0xf]
      %v273 = vld [vmem:[%s231 + $0x64] sm:$0xf]
      %v274 = vld [vmem:[%s231 + $0x68] sm:$0xf]
      %v275 = vld [vmem:[%s231 + $0x6c] sm:$0xf]
      %v276 = vld [vmem:[%s231 + $0x70] sm:$0xf]
      %v277 = vld [vmem:[%s231 + $0x74] sm:$0xf]
      %v278 = vld [vmem:[%s231 + $0x78] sm:$0xf]
      %v279 = vld [vmem:[%s231 + $0x7c] sm:$0xf]
      %v280 = vld [vmem:[%s231 + $0x80] sm:$0xf]
      %v281 = vld [vmem:[%s231 + $0x84] sm:$0xf]
      %v282 = vld [vmem:[%s231 + $0x88] sm:$0xf]
      %v283 = vld [vmem:[%s231 + $0x8c] sm:$0xf]
      %v284 = vld [vmem:[%s231 + $0x90] sm:$0xf]
      %v285 = vld [vmem:[%s231 + $0x94] sm:$0xf]
      %v286 = vld [vmem:[%s231 + $0x98] sm:$0xf]
      %v287 = vld [vmem:[%s231 + $0x9c] sm:$0xf]
      %v288 = vld [vmem:[%s231 + $0xa0] sm:$0xf]
      %v289 = vld [vmem:[%s231 + $0xa4] sm:$0xf]
      %v290 = vld [vmem:[%s231 + $0xa8] sm:$0xf]
      %v291 = vld [vmem:[%s231 + $0xac] sm:$0xf]
      %v292 = vld [vmem:[%s231 + $0xb0] sm:$0xf]
      %v293 = vld [vmem:[%s231 + $0xb4] sm:$0xf]
      %v294 = vld [vmem:[%s231 + $0xb8] sm:$0xf]
      %v295 = vld [vmem:[%s231 + $0xbc] sm:$0xf]
      %v296 = vld [vmem:[%s236] sm:$0xf]
      %v297 = vld [vmem:[%s236 + $0x4] sm:$0xf]
      %v298 = vld [vmem:[%s236 + $0x8] sm:$0xf]
      %v299 = vld [vmem:[%s236 + $0xc] sm:$0xf]
      %v300 = vld [vmem:[%s236 + $0x10] sm:$0x3]
      %v301 = vld [vmem:[%s231 + $0xc0] sm:$0x1]
      %s302 = scalar_lea.vmem %s236, 20
      %v303 = vld [vmem:[%s302] sm:$0xf]
      %v304 = vld [vmem:[%s302 + $0x4] sm:$0xf]
      %v305 = vld [vmem:[%s302 + $0x8] sm:$0xf]
      %v306 = vld [vmem:[%s302 + $0xc] sm:$0xf]
      %v307 = vld [vmem:[%s302 + $0x10] sm:$0x3]
      %v357 = vunpack.c.l.b16 %v248
      %v358 = vunpack.c.l.b16 %v249
      %v359 = vunpack.c.l.b16 %v250
      %v360 = vunpack.c.l.b16 %v251
      %v361 = vunpack.c.l.b16 %v252
      %v362 = vunpack.c.l.b16 %v253
      %v363 = vunpack.c.l.b16 %v254
      %v364 = vunpack.c.l.b16 %v255
      %v365 = vunpack.c.l.b16 %v256
      %v366 = vunpack.c.l.b16 %v257
      %v367 = vunpack.c.l.b16 %v258
      %v368 = vunpack.c.l.b16 %v259
      %v369 = vunpack.c.l.b16 %v260
      %v370 = vunpack.c.l.b16 %v261
      %v371 = vunpack.c.l.b16 %v262
      %v372 = vunpack.c.l.b16 %v263
      %v373 = vunpack.c.l.b16 %v264
      %v374 = vunpack.c.l.b16 %v265
      %v375 = vunpack.c.l.b16 %v266
      %v376 = vunpack.c.l.b16 %v267
      %v377 = vunpack.c.l.b16 %v268
      %v378 = vunpack.c.l.b16 %v269
      %v379 = vunpack.c.l.b16 %v270
      %v380 = vunpack.c.l.b16 %v271
      %v381 = vunpack.c.l.b16 %v272
      %v382 = vunpack.c.l.b16 %v273
      %v383 = vunpack.c.l.b16 %v274
      %v384 = vunpack.c.l.b16 %v275
      %v385 = vunpack.c.l.b16 %v276
      %v386 = vunpack.c.l.b16 %v277
      %v387 = vunpack.c.l.b16 %v278
      %v388 = vunpack.c.l.b16 %v279
      %v389 = vunpack.c.l.b16 %v280
      %v390 = vunpack.c.l.b16 %v281
      %v391 = vunpack.c.l.b16 %v282
      %v392 = vunpack.c.l.b16 %v283
      %v393 = vunpack.c.l.b16 %v284
      %v394 = vunpack.c.l.b16 %v285
      %v395 = vunpack.c.l.b16 %v286
      %v396 = vunpack.c.l.b16 %v287
      %v397 = vunpack.c.l.b16 %v288
      %v398 = vunpack.c.l.b16 %v289
      %v399 = vunpack.c.l.b16 %v290
      %v400 = vunpack.c.l.b16 %v291
      %v401 = vunpack.c.l.b16 %v292
      %v402 = vunpack.c.l.b16 %v293
      %v403 = vunpack.c.l.b16 %v294
      %v404 = vunpack.c.l.b16 %v295
      %v405 = vunpack.c.l.b16 %v301
      %v406 = vpack.c.b16 %v358, %v357
      %v407 = vpack.c.b16 %v360, %v359
      %v408 = vpack.c.b16 %v362, %v361
      %v409 = vpack.c.b16 %v364, %v363
      %v410 = vpack.c.b16 %v366, %v365
      %v411 = vpack.c.b16 %v368, %v367
      %v412 = vpack.c.b16 %v370, %v369
      %v413 = vpack.c.b16 %v372, %v371
      %v414 = vpack.c.b16 %v374, %v373
      %v415 = vpack.c.b16 %v376, %v375
      %v416 = vpack.c.b16 %v378, %v377
      %v417 = vpack.c.b16 %v380, %v379
      %v418 = vpack.c.b16 %v382, %v381
      %v419 = vpack.c.b16 %v384, %v383
      %v420 = vpack.c.b16 %v386, %v385
      %v421 = vpack.c.b16 %v388, %v387
      %v422 = vpack.c.b16 %v390, %v389
      %v423 = vpack.c.b16 %v392, %v391
      %v424 = vpack.c.b16 %v394, %v393
      %v425 = vpack.c.b16 %v396, %v395
      %v426 = vpack.c.b16 %v398, %v397
      %v427 = vpack.c.b16 %v400, %v399
      %v428 = vpack.c.b16 %v402, %v401
      %v429 = vpack.c.b16 %v404, %v403
      %v430 = vpack.c.b16 %v405, %v405
      %vm431 = vsmask.f32 7424
      %v433 = vshrl.u32 %v406, 16
      %v435 = vshll.u32 %v406, 16
      %v437 = vrot.slane %v435, 1
      %v438 = vor.u32 %v433, %v437
      %v440 = vshll.u32 %v407, 16
      %v442 = vrot.slane %v440, 1
      %v443 = vsel %vm431, %v438, %v442
      %v444 = vshrl.u32 %v407, 16
      %v446 = vor.u32 %v444, %v442
      %v448 = vshll.u32 %v408, 16
      %v450 = vrot.slane %v448, 1
      %v451 = vsel %vm431, %v446, %v450
      %v452 = vshrl.u32 %v408, 16
      %v454 = vor.u32 %v452, %v450
      %v456 = vshll.u32 %v409, 16
      %v458 = vrot.slane %v456, 1
      %v459 = vsel %vm431, %v454, %v458
      %v460 = vshrl.u32 %v409, 16
      %v462 = vor.u32 %v460, %v458
      %v464 = vshll.u32 %v410, 16
      %v466 = vrot.slane %v464, 1
      %v467 = vsel %vm431, %v462, %v466
      %v468 = vshrl.u32 %v410, 16
      %v470 = vor.u32 %v468, %v466
      %v472 = vshll.u32 %v411, 16
      %v474 = vrot.slane %v472, 1
      %v475 = vsel %vm431, %v470, %v474
      %v476 = vshrl.u32 %v411, 16
      %v478 = vor.u32 %v476, %v474
      %v480 = vshll.u32 %v412, 16
      %v482 = vrot.slane %v480, 1
      %v483 = vsel %vm431, %v478, %v482
      %v484 = vshrl.u32 %v412, 16
      %v486 = vor.u32 %v484, %v482
      %v488 = vshll.u32 %v413, 16
      %v490 = vrot.slane %v488, 1
      %v491 = vsel %vm431, %v486, %v490
      %v492 = vshrl.u32 %v413, 16
      %v494 = vor.u32 %v492, %v490
      %v496 = vshll.u32 %v414, 16
      %v498 = vrot.slane %v496, 1
      %v499 = vsel %vm431, %v494, %v498
      %v500 = vshrl.u32 %v414, 16
      %v502 = vor.u32 %v500, %v498
      %v504 = vshll.u32 %v415, 16
      %v506 = vrot.slane %v504, 1
      %v507 = vsel %vm431, %v502, %v506
      %v508 = vshrl.u32 %v415, 16
      %v510 = vor.u32 %v508, %v506
      %v512 = vshll.u32 %v416, 16
      %v514 = vrot.slane %v512, 1
      %v515 = vsel %vm431, %v510, %v514
      %v516 = vshrl.u32 %v416, 16
      %v518 = vor.u32 %v516, %v514
      %v520 = vshll.u32 %v417, 16
      %v522 = vrot.slane %v520, 1
      %v523 = vsel %vm431, %v518, %v522
      %v524 = vshrl.u32 %v417, 16
      %v526 = vor.u32 %v524, %v522
      %v528 = vshll.u32 %v418, 16
      %v530 = vrot.slane %v528, 1
      %v531 = vsel %vm431, %v526, %v530
      %v532 = vshrl.u32 %v418, 16
      %v534 = vor.u32 %v532, %v530
      %v536 = vshll.u32 %v419, 16
      %v538 = vrot.slane %v536, 1
      %v539 = vsel %vm431, %v534, %v538
      %v540 = vshrl.u32 %v419, 16
      %v542 = vor.u32 %v540, %v538
      %v544 = vshll.u32 %v420, 16
      %v546 = vrot.slane %v544, 1
      %v547 = vsel %vm431, %v542, %v546
      %v548 = vshrl.u32 %v420, 16
      %v550 = vor.u32 %v548, %v546
      %v552 = vshll.u32 %v421, 16
      %v554 = vrot.slane %v552, 1
      %v555 = vsel %vm431, %v550, %v554
      %v556 = vshrl.u32 %v421, 16
      %v558 = vor.u32 %v556, %v554
      %v560 = vshll.u32 %v422, 16
      %v562 = vrot.slane %v560, 1
      %v563 = vsel %vm431, %v558, %v562
      %v564 = vshrl.u32 %v422, 16
      %v566 = vor.u32 %v564, %v562
      %v568 = vshll.u32 %v423, 16
      %v570 = vrot.slane %v568, 1
      %v571 = vsel %vm431, %v566, %v570
      %v572 = vshrl.u32 %v423, 16
      %v574 = vor.u32 %v572, %v570
      %v576 = vshll.u32 %v424, 16
      %v578 = vrot.slane %v576, 1
      %v579 = vsel %vm431, %v574, %v578
      %v580 = vshrl.u32 %v424, 16
      %v582 = vor.u32 %v580, %v578
      %v584 = vshll.u32 %v425, 16
      %v586 = vrot.slane %v584, 1
      %v587 = vsel %vm431, %v582, %v586
      %v588 = vshrl.u32 %v425, 16
      %v590 = vor.u32 %v588, %v586
      %v592 = vshll.u32 %v426, 16
      %v594 = vrot.slane %v592, 1
      %v595 = vsel %vm431, %v590, %v594
      %v596 = vshrl.u32 %v426, 16
      %v598 = vor.u32 %v596, %v594
      %v600 = vshll.u32 %v427, 16
      %v602 = vrot.slane %v600, 1
      %v603 = vsel %vm431, %v598, %v602
      %v604 = vshrl.u32 %v427, 16
      %v606 = vor.u32 %v604, %v602
      %v608 = vshll.u32 %v428, 16
      %v610 = vrot.slane %v608, 1
      %v611 = vsel %vm431, %v606, %v610
      %v612 = vshrl.u32 %v428, 16
      %v614 = vor.u32 %v612, %v610
      %v616 = vshll.u32 %v429, 16
      %v618 = vrot.slane %v616, 1
      %v619 = vsel %vm431, %v614, %v618
      %v620 = vshrl.u32 %v429, 16
      %v622 = vor.u32 %v620, %v618
      %v624 = vshll.u32 %v430, 16
      %v626 = vrot.slane %v624, 1
      %v627 = vsel %vm431, %v622, %v626
      %v633 = vunpack.c.l.b16 %v303
      %v634 = vunpack.c.l.b16 %v304
      %v635 = vunpack.c.l.b16 %v305
      %v636 = vunpack.c.l.b16 %v306
      %v637 = vunpack.c.l.b16 %v307
      %v638 = vpack.c.b16 %v634, %v633
      %v639 = vpack.c.b16 %v636, %v635
      %v640 = vpack.c.b16 %v637, %v637
      %vm643 = vcmask 293888
      %v645 = vsel %vm643, %v443, 0
      %v648 = vsel %vm643, %v451, 0
      %v651 = vsel %vm643, %v459, 0
      %v654 = vsel %vm643, %v467, 0
      %v657 = vsel %vm643, %v475, 0
      %v660 = vsel %vm643, %v483, 0
      %v663 = vsel %vm643, %v491, 0
      %v666 = vsel %vm643, %v499, 0
      %v669 = vsel %vm643, %v507, 0
      %v672 = vsel %vm643, %v515, 0
      %v675 = vsel %vm643, %v523, 0
      %v678 = vsel %vm643, %v531, 0
      %v681 = vsel %vm643, %v539, 0
      %v684 = vsel %vm643, %v547, 0
      %v687 = vsel %vm643, %v555, 0
      %v690 = vsel %vm643, %v563, 0
      %v693 = vsel %vm643, %v571, 0
      %v696 = vsel %vm643, %v579, 0
      %v699 = vsel %vm643, %v587, 0
      %v702 = vsel %vm643, %v595, 0
      %v705 = vsel %vm643, %v603, 0
      %v708 = vsel %vm643, %v611, 0
      %v711 = vsel %vm643, %v619, 0
      %v714 = vsel %vm643, %v627, 0
      %vm716 = vcmask 1041408
      %v718 = vsel %vm716, %v640, 0
      %720 = vmatprep.subr.bf16.mxu0 0
      %721 = vmatpush1.bf16.msra.mxu0 %v638
      %722 = vmatprep.subr.bf16.mxu0 0
      %723 = vmatpush1.bf16.msra.mxu0 %v639
      %724 = vmatprep.subr.bf16.mxu0 0
      %725 = vmatpush1.bf16.msra.mxu0 %v718
      %726 = vmatprep.subr.bf16.mxu0 0
      %727 = vmatpush1.bf16.msra.mxu0 0
      %728 = vmatprep.subr.bf16.mxu0 0
      %729 = vmatpush1.bf16.msra.mxu0 0
      %730 = vmatprep.subr.bf16.mxu0 0
      %731 = vmatpush1.bf16.msra.mxu0 0
      %732 = vmatprep.subr.bf16.mxu0 0
      %733 = vmatpush1.bf16.msra.mxu0 0
      %734 = vmatprep.subr.bf16.mxu0 0
      %735 = vmatpush1.bf16.msra.mxu0 0
      %736 = vmatprep.subr.bf16.mxu0 0
      %737 = vmatpush1.bf16.msra.mxu0 0
      %738 = vmatprep.subr.bf16.mxu0 0
      %739 = vmatpush1.bf16.msra.mxu0 0
      %740 = vmatprep.subr.bf16.mxu0 0
      %741 = vmatpush1.bf16.msra.mxu0 0
      %742 = vmatprep.subr.bf16.mxu0 0
      %743 = vmatpush1.bf16.msra.mxu0 0
      %744 = vmatprep.subr.bf16.mxu0 0
      %745 = vmatpush1.bf16.msra.mxu0 0
      %746 = vmatprep.subr.bf16.mxu0 0
      %747 = vmatpush1.bf16.msra.mxu0 0
      %748 = vmatprep.subr.bf16.mxu0 0
      %749 = vmatpush1.bf16.msra.mxu0 0
      %750 = vmatprep.subr.bf16.mxu0 0
      %751 = vmatpush1.bf16.msra.mxu0 0
      %752 = vmatprep.mubr.bf16.mxu0 0
      %753 = vmatmul.mubr.bf16.gmra.mrb[0].mxu0 %v645
      %v754 = vpop.f32.mrb[0].mxu0
      %v755 = vadd.f32 0.0, %v754
      %v756 = vpop.f32.mrb[0].mxu0
      %v757 = vpop.f32.mrb[0].mxu0
      %v758 = vadd.f32 0.0, %v757
      %v759 = vpop.f32.mrb[0].mxu0
      %760 = vmatprep.mubr.bf16.mxu0 0
      %761 = vmatmul.mubr.bf16.gmra.mrb[0].mxu0 %v648
      %v762 = vpop.f32.mrb[0].mxu0
      %v763 = vadd.f32 0.0, %v762
      %v764 = vpop.f32.mrb[0].mxu0
      %v765 = vpop.f32.mrb[0].mxu0
      %v766 = vadd.f32 0.0, %v765
      %v767 = vpop.f32.mrb[0].mxu0
      %768 = vmatprep.mubr.bf16.mxu0 0
      %769 = vmatmul.mubr.bf16.gmra.mrb[0].mxu0 %v651
      %v770 = vpop.f32.mrb[0].mxu0
      %v771 = vadd.f32 0.0, %v770
      %v772 = vpop.f32.mrb[0].mxu0
      %v773 = vpop.f32.mrb[0].mxu0
      %v774 = vadd.f32 0.0, %v773
      %v775 = vpop.f32.mrb[0].mxu0
      %776 = vmatprep.mubr.bf16.mxu0 0
      %777 = vmatmul.mubr.bf16.gmra.mrb[0].mxu0 %v654
      %v778 = vpop.f32.mrb[0].mxu0
      %v779 = vadd.f32 0.0, %v778
      %v780 = vpop.f32.mrb[0].mxu0
      %v781 = vpop.f32.mrb[0].mxu0
      %v782 = vadd.f32 0.0, %v781
      %v783 = vpop.f32.mrb[0].mxu0
      %784 = vmatprep.mubr.bf16.mxu0 0
      %785 = vmatmul.mubr.bf16.gmra.mrb[0].mxu0 %v657
      %v786 = vpop.f32.mrb[0].mxu0
      %v787 = vadd.f32 0.0, %v786
      %v788 = vpop.f32.mrb[0].mxu0
      %v789 = vpop.f32.mrb[0].mxu0
      %v790 = vadd.f32 0.0, %v789
      %v791 = vpop.f32.mrb[0].mxu0
      %792 = vmatprep.mubr.bf16.mxu0 0
      %793 = vmatmul.mubr.bf16.gmra.mrb[0].mxu0 %v660
      %v794 = vpop.f32.mrb[0].mxu0
      %v795 = vadd.f32 0.0, %v794
      %v796 = vpop.f32.mrb[0].mxu0
      %v797 = vpop.f32.mrb[0].mxu0
      %v798 = vadd.f32 0.0, %v797
      %v799 = vpop.f32.mrb[0].mxu0
      %800 = vmatprep.mubr.bf16.mxu0 0
      %801 = vmatmul.mubr.bf16.gmra.mrb[0].mxu0 %v663
      %v802 = vpop.f32.mrb[0].mxu0
      %v803 = vadd.f32 0.0, %v802
      %v804 = vpop.f32.mrb[0].mxu0
      %v805 = vpop.f32.mrb[0].mxu0
      %v806 = vadd.f32 0.0, %v805
      %v807 = vpop.f32.mrb[0].mxu0
      %808 = vmatprep.mubr.bf16.mxu0 0
      %809 = vmatmul.mubr.bf16.gmra.mrb[0].mxu0 %v666
      %v810 = vpop.f32.mrb[0].mxu0
      %v811 = vadd.f32 0.0, %v810
      %v812 = vpop.f32.mrb[0].mxu0
      %v813 = vpop.f32.mrb[0].mxu0
      %v814 = vadd.f32 0.0, %v813
      %v815 = vpop.f32.mrb[0].mxu0
      %816 = vmatprep.mubr.bf16.mxu0 0
      %817 = vmatmul.mubr.bf16.gmra.mrb[0].mxu0 %v669
      %v818 = vpop.f32.mrb[0].mxu0
      %v819 = vadd.f32 0.0, %v818
      %v820 = vpop.f32.mrb[0].mxu0
      %v821 = vpop.f32.mrb[0].mxu0
      %v822 = vadd.f32 0.0, %v821
      %v823 = vpop.f32.mrb[0].mxu0
      %824 = vmatprep.mubr.bf16.mxu0 0
      %825 = vmatmul.mubr.bf16.gmra.mrb[0].mxu0 %v672
      %v826 = vpop.f32.mrb[0].mxu0
      %v827 = vadd.f32 0.0, %v826
      %v828 = vpop.f32.mrb[0].mxu0
      %v829 = vpop.f32.mrb[0].mxu0
      %v830 = vadd.f32 0.0, %v829
      %v831 = vpop.f32.mrb[0].mxu0
      %832 = vmatprep.mubr.bf16.mxu0 0
      %833 = vmatmul.mubr.bf16.gmra.mrb[0].mxu0 %v675
      %v834 = vpop.f32.mrb[0].mxu0
      %v835 = vadd.f32 0.0, %v834
      %v836 = vpop.f32.mrb[0].mxu0
      %v837 = vpop.f32.mrb[0].mxu0
      %v838 = vadd.f32 0.0, %v837
      %v839 = vpop.f32.mrb[0].mxu0
      %840 = vmatprep.mubr.bf16.mxu0 0
      %841 = vmatmul.mubr.bf16.gmra.mrb[0].mxu0 %v678
      %v842 = vpop.f32.mrb[0].mxu0
      %v843 = vadd.f32 0.0, %v842
      %v844 = vpop.f32.mrb[0].mxu0
      %v845 = vpop.f32.mrb[0].mxu0
      %v846 = vadd.f32 0.0, %v845
      %v847 = vpop.f32.mrb[0].mxu0
      %848 = vmatprep.mubr.bf16.mxu0 0
      %849 = vmatmul.mubr.bf16.gmra.mrb[0].mxu0 %v681
      %v850 = vpop.f32.mrb[0].mxu0
      %v851 = vadd.f32 0.0, %v850
      %v852 = vpop.f32.mrb[0].mxu0
      %v853 = vpop.f32.mrb[0].mxu0
      %v854 = vadd.f32 0.0, %v853
      %v855 = vpop.f32.mrb[0].mxu0
      %856 = vmatprep.mubr.bf16.mxu0 0
      %857 = vmatmul.mubr.bf16.gmra.mrb[0].mxu0 %v684
      %v858 = vpop.f32.mrb[0].mxu0
      %v859 = vadd.f32 0.0, %v858
      %v860 = vpop.f32.mrb[0].mxu0
      %v861 = vpop.f32.mrb[0].mxu0
      %v862 = vadd.f32 0.0, %v861
      %v863 = vpop.f32.mrb[0].mxu0
      %864 = vmatprep.mubr.bf16.mxu0 0
      %865 = vmatmul.mubr.bf16.gmra.mrb[0].mxu0 %v687
      %v866 = vpop.f32.mrb[0].mxu0
      %v867 = vadd.f32 0.0, %v866
      %v868 = vpop.f32.mrb[0].mxu0
      %v869 = vpop.f32.mrb[0].mxu0
      %v870 = vadd.f32 0.0, %v869
      %v871 = vpop.f32.mrb[0].mxu0
      %872 = vmatprep.mubr.bf16.mxu0 0
      %873 = vmatmul.mubr.bf16.gmra.mrb[0].mxu0 %v690
      %v874 = vpop.f32.mrb[0].mxu0
      %v875 = vadd.f32 0.0, %v874
      %v876 = vpop.f32.mrb[0].mxu0
      %v877 = vpop.f32.mrb[0].mxu0
      %v878 = vadd.f32 0.0, %v877
      %v879 = vpop.f32.mrb[0].mxu0
      %880 = vmatprep.mubr.bf16.mxu0 0
      %881 = vmatmul.mubr.bf16.gmra.mrb[0].mxu0 %v693
      %v882 = vpop.f32.mrb[0].mxu0
      %v883 = vadd.f32 0.0, %v882
      %v884 = vpop.f32.mrb[0].mxu0
      %v885 = vpop.f32.mrb[0].mxu0
      %v886 = vadd.f32 0.0, %v885
      %v887 = vpop.f32.mrb[0].mxu0
      %888 = vmatprep.mubr.bf16.mxu0 0
      %889 = vmatmul.mubr.bf16.gmra.mrb[0].mxu0 %v696
      %v890 = vpop.f32.mrb[0].mxu0
      %v891 = vadd.f32 0.0, %v890
      %v892 = vpop.f32.mrb[0].mxu0
      %v893 = vpop.f32.mrb[0].mxu0
      %v894 = vadd.f32 0.0, %v893
      %v895 = vpop.f32.mrb[0].mxu0
      %896 = vmatprep.mubr.bf16.mxu0 0
      %897 = vmatmul.mubr.bf16.gmra.mrb[0].mxu0 %v699
      %v898 = vpop.f32.mrb[0].mxu0
      %v899 = vadd.f32 0.0, %v898
      %v900 = vpop.f32.mrb[0].mxu0
      %v901 = vpop.f32.mrb[0].mxu0
      %v902 = vadd.f32 0.0, %v901
      %v903 = vpop.f32.mrb[0].mxu0
      %904 = vmatprep.mubr.bf16.mxu0 0
      %905 = vmatmul.mubr.bf16.gmra.mrb[0].mxu0 %v702
      %v906 = vpop.f32.mrb[0].mxu0
      %v907 = vadd.f32 0.0, %v906
      %v908 = vpop.f32.mrb[0].mxu0
      %v909 = vpop.f32.mrb[0].mxu0
      %v910 = vadd.f32 0.0, %v909
      %v911 = vpop.f32.mrb[0].mxu0
      %912 = vmatprep.mubr.bf16.mxu0 0
      %913 = vmatmul.mubr.bf16.gmra.mrb[0].mxu0 %v705
      %v914 = vpop.f32.mrb[0].mxu0
      %v915 = vadd.f32 0.0, %v914
      %v916 = vpop.f32.mrb[0].mxu0
      %v917 = vpop.f32.mrb[0].mxu0
      %v918 = vadd.f32 0.0, %v917
      %v919 = vpop.f32.mrb[0].mxu0
      %920 = vmatprep.mubr.bf16.mxu0 0
      %921 = vmatmul.mubr.bf16.gmra.mrb[0].mxu0 %v708
      %v922 = vpop.f32.mrb[0].mxu0
      %v923 = vadd.f32 0.0, %v922
      %v924 = vpop.f32.mrb[0].mxu0
      %v925 = vpop.f32.mrb[0].mxu0
      %v926 = vadd.f32 0.0, %v925
      %v927 = vpop.f32.mrb[0].mxu0
      %928 = vmatprep.mubr.bf16.mxu0 0
      %929 = vmatmul.mubr.bf16.gmra.mrb[0].mxu0 %v711
      %v930 = vpop.f32.mrb[0].mxu0
      %v931 = vadd.f32 0.0, %v930
      %v932 = vpop.f32.mrb[0].mxu0
      %v933 = vpop.f32.mrb[0].mxu0
      %v934 = vadd.f32 0.0, %v933
      %v935 = vpop.f32.mrb[0].mxu0
      %936 = vmatprep.mubr.bf16.mxu0 0
      %937 = vmatmul.mubr.bf16.gmra.mrb[0].mxu0 %v714
      %v938 = vpop.f32.mrb[0].mxu0
      %v939 = vadd.f32 0.0, %v938
      %v940 = vpop.f32.mrb[0].mxu0
      %v941 = vpop.f32.mrb[0].mxu0
      %v942 = vadd.f32 0.0, %v941
      %v943 = vpop.f32.mrb[0].mxu0
      %944 = vdwg.mxu0
      %v950 = vunpack.c.l.b16 %v296
      %v951 = vunpack.c.l.b16 %v297
      %v952 = vunpack.c.l.b16 %v298
      %v953 = vunpack.c.l.b16 %v299
      %v954 = vunpack.c.l.b16 %v300
      %v955 = vpack.c.b16 %v951, %v950
      %v956 = vpack.c.b16 %v953, %v952
      %v957 = vpack.c.b16 %v954, %v954
      %v960 = vsel %vm643, %v406, 0
      %v962 = vsel %vm643, %v407, 0
      %v964 = vsel %vm643, %v408, 0
      %v966 = vsel %vm643, %v409, 0
      %v968 = vsel %vm643, %v410, 0
      %v970 = vsel %vm643, %v411, 0
      %v972 = vsel %vm643, %v412, 0
      %v974 = vsel %vm643, %v413, 0
      %v976 = vsel %vm643, %v414, 0
      %v978 = vsel %vm643, %v415, 0
      %v980 = vsel %vm643, %v416, 0
      %v982 = vsel %vm643, %v417, 0
      %v984 = vsel %vm643, %v418, 0
      %v986 = vsel %vm643, %v419, 0
      %v988 = vsel %vm643, %v420, 0
      %v990 = vsel %vm643, %v421, 0
      %v992 = vsel %vm643, %v422, 0
      %v994 = vsel %vm643, %v423, 0
      %v996 = vsel %vm643, %v424, 0
      %v998 = vsel %vm643, %v425, 0
      %v1000 = vsel %vm643, %v426, 0
      %v1002 = vsel %vm643, %v427, 0
      %v1004 = vsel %vm643, %v428, 0
      %v1006 = vsel %vm643, %v429, 0
      %v1009 = vsel %vm716, %v957, 0
      %1011 = vmatprep.subr.bf16.mxu0 0
      %1012 = vmatpush1.bf16.msra.mxu0 %v955
      %1013 = vmatprep.subr.bf16.mxu0 0
      %1014 = vmatpush1.bf16.msra.mxu0 %v956
      %1015 = vmatprep.subr.bf16.mxu0 0
      %1016 = vmatpush1.bf16.msra.mxu0 %v1009
      %1017 = vmatprep.subr.bf16.mxu0 0
      %1018 = vmatpush1.bf16.msra.mxu0 0
      %1019 = vmatprep.subr.bf16.mxu0 0
      %1020 = vmatpush1.bf16.msra.mxu0 0
      %1021 = vmatprep.subr.bf16.mxu0 0
      %1022 = vmatpush1.bf16.msra.mxu0 0
      %1023 = vmatprep.subr.bf16.mxu0 0
      %1024 = vmatpush1.bf16.msra.mxu0 0
      %1025 = vmatprep.subr.bf16.mxu0 0
      %1026 = vmatpush1.bf16.msra.mxu0 0
      %1027 = vmatprep.subr.bf16.mxu0 0
      %1028 = vmatpush1.bf16.msra.mxu0 0
      %1029 = vmatprep.subr.bf16.mxu0 0
      %1030 = vmatpush1.bf16.msra.mxu0 0
      %1031 = vmatprep.subr.bf16.mxu0 0
      %1032 = vmatpush1.bf16.msra.mxu0 0
      %1033 = vmatprep.subr.bf16.mxu0 0
      %1034 = vmatpush1.bf16.msra.mxu0 0
      %1035 = vmatprep.subr.bf16.mxu0 0
      %1036 = vmatpush1.bf16.msra.mxu0 0
      %1037 = vmatprep.subr.bf16.mxu0 0
      %1038 = vmatpush1.bf16.msra.mxu0 0
      %1039 = vmatprep.subr.bf16.mxu0 0
      %1040 = vmatpush1.bf16.msra.mxu0 0
      %1041 = vmatprep.subr.bf16.mxu0 0
      %1042 = vmatpush1.bf16.msra.mxu0 0
      %1043 = vmatprep.mubr.bf16.mxu0 0
      %1044 = vmatmul.mubr.bf16.gmra.mrb[0].mxu0 %v960
      %v1045 = vpop.f32.mrb[0].mxu0
      %v1046 = vadd.f32 %v755, %v1045
      %v1047 = vpop.f32.mrb[0].mxu0
      %v1048 = vpop.f32.mrb[0].mxu0
      %v1049 = vadd.f32 %v758, %v1048
      %v1050 = vpop.f32.mrb[0].mxu0
      %1051 = vmatprep.mubr.bf16.mxu0 0
      %1052 = vmatmul.mubr.bf16.gmra.mrb[0].mxu0 %v962
      %v1053 = vpop.f32.mrb[0].mxu0
      %v1054 = vadd.f32 %v763, %v1053
      %v1055 = vpop.f32.mrb[0].mxu0
      %v1056 = vpop.f32.mrb[0].mxu0
      %v1057 = vadd.f32 %v766, %v1056
      %v1058 = vpop.f32.mrb[0].mxu0
      %1059 = vmatprep.mubr.bf16.mxu0 0
      %1060 = vmatmul.mubr.bf16.gmra.mrb[0].mxu0 %v964
      %v1061 = vpop.f32.mrb[0].mxu0
      %v1062 = vadd.f32 %v771, %v1061
      %v1063 = vpop.f32.mrb[0].mxu0
      %v1064 = vpop.f32.mrb[0].mxu0
      %v1065 = vadd.f32 %v774, %v1064
      %v1066 = vpop.f32.mrb[0].mxu0
      %1067 = vmatprep.mubr.bf16.mxu0 0
      %1068 = vmatmul.mubr.bf16.gmra.mrb[0].mxu0 %v966
      %v1069 = vpop.f32.mrb[0].mxu0
      %v1070 = vadd.f32 %v779, %v1069
      %v1071 = vpop.f32.mrb[0].mxu0
      %v1072 = vpop.f32.mrb[0].mxu0
      %v1073 = vadd.f32 %v782, %v1072
      %v1074 = vpop.f32.mrb[0].mxu0
      %1075 = vmatprep.mubr.bf16.mxu0 0
      %1076 = vmatmul.mubr.bf16.gmra.mrb[0].mxu0 %v968
      %v1077 = vpop.f32.mrb[0].mxu0
      %v1078 = vadd.f32 %v787, %v1077
      %v1079 = vpop.f32.mrb[0].mxu0
      %v1080 = vpop.f32.mrb[0].mxu0
      %v1081 = vadd.f32 %v790, %v1080
      %v1082 = vpop.f32.mrb[0].mxu0
      %1083 = vmatprep.mubr.bf16.mxu0 0
      %1084 = vmatmul.mubr.bf16.gmra.mrb[0].mxu0 %v970
      %v1085 = vpop.f32.mrb[0].mxu0
      %v1086 = vadd.f32 %v795, %v1085
      %v1087 = vpop.f32.mrb[0].mxu0
      %v1088 = vpop.f32.mrb[0].mxu0
      %v1089 = vadd.f32 %v798, %v1088
      %v1090 = vpop.f32.mrb[0].mxu0
      %1091 = vmatprep.mubr.bf16.mxu0 0
      %1092 = vmatmul.mubr.bf16.gmra.mrb[0].mxu0 %v972
      %v1093 = vpop.f32.mrb[0].mxu0
      %v1094 = vadd.f32 %v803, %v1093
      %v1095 = vpop.f32.mrb[0].mxu0
      %v1096 = vpop.f32.mrb[0].mxu0
      %v1097 = vadd.f32 %v806, %v1096
      %v1098 = vpop.f32.mrb[0].mxu0
      %1099 = vmatprep.mubr.bf16.mxu0 0
      %1100 = vmatmul.mubr.bf16.gmra.mrb[0].mxu0 %v974
      %v1101 = vpop.f32.mrb[0].mxu0
      %v1102 = vadd.f32 %v811, %v1101
      %v1103 = vpop.f32.mrb[0].mxu0
      %v1104 = vpop.f32.mrb[0].mxu0
      %v1105 = vadd.f32 %v814, %v1104
      %v1106 = vpop.f32.mrb[0].mxu0
      %1107 = vmatprep.mubr.bf16.mxu0 0
      %1108 = vmatmul.mubr.bf16.gmra.mrb[0].mxu0 %v976
      %v1109 = vpop.f32.mrb[0].mxu0
      %v1110 = vadd.f32 %v819, %v1109
      %v1111 = vpop.f32.mrb[0].mxu0
      %v1112 = vpop.f32.mrb[0].mxu0
      %v1113 = vadd.f32 %v822, %v1112
      %v1114 = vpop.f32.mrb[0].mxu0
      %1115 = vmatprep.mubr.bf16.mxu0 0
      %1116 = vmatmul.mubr.bf16.gmra.mrb[0].mxu0 %v978
      %v1117 = vpop.f32.mrb[0].mxu0
      %v1118 = vadd.f32 %v827, %v1117
      %v1119 = vpop.f32.mrb[0].mxu0
      %v1120 = vpop.f32.mrb[0].mxu0
      %v1121 = vadd.f32 %v830, %v1120
      %v1122 = vpop.f32.mrb[0].mxu0
      %1123 = vmatprep.mubr.bf16.mxu0 0
      %1124 = vmatmul.mubr.bf16.gmra.mrb[0].mxu0 %v980
      %v1125 = vpop.f32.mrb[0].mxu0
      %v1126 = vadd.f32 %v835, %v1125
      %v1127 = vpop.f32.mrb[0].mxu0
      %v1128 = vpop.f32.mrb[0].mxu0
      %v1129 = vadd.f32 %v838, %v1128
      %v1130 = vpop.f32.mrb[0].mxu0
      %1131 = vmatprep.mubr.bf16.mxu0 0
      %1132 = vmatmul.mubr.bf16.gmra.mrb[0].mxu0 %v982
      %v1133 = vpop.f32.mrb[0].mxu0
      %v1134 = vadd.f32 %v843, %v1133
      %v1135 = vpop.f32.mrb[0].mxu0
      %v1136 = vpop.f32.mrb[0].mxu0
      %v1137 = vadd.f32 %v846, %v1136
      %v1138 = vpop.f32.mrb[0].mxu0
      %1139 = vmatprep.mubr.bf16.mxu0 0
      %1140 = vmatmul.mubr.bf16.gmra.mrb[0].mxu0 %v984
      %v1141 = vpop.f32.mrb[0].mxu0
      %v1142 = vadd.f32 %v851, %v1141
      %v1143 = vpop.f32.mrb[0].mxu0
      %v1144 = vpop.f32.mrb[0].mxu0
      %v1145 = vadd.f32 %v854, %v1144
      %v1146 = vpop.f32.mrb[0].mxu0
      %1147 = vmatprep.mubr.bf16.mxu0 0
      %1148 = vmatmul.mubr.bf16.gmra.mrb[0].mxu0 %v986
      %v1149 = vpop.f32.mrb[0].mxu0
      %v1150 = vadd.f32 %v859, %v1149
      %v1151 = vpop.f32.mrb[0].mxu0
      %v1152 = vpop.f32.mrb[0].mxu0
      %v1153 = vadd.f32 %v862, %v1152
      %v1154 = vpop.f32.mrb[0].mxu0
      %1155 = vmatprep.mubr.bf16.mxu0 0
      %1156 = vmatmul.mubr.bf16.gmra.mrb[0].mxu0 %v988
      %v1157 = vpop.f32.mrb[0].mxu0
      %v1158 = vadd.f32 %v867, %v1157
      %v1159 = vpop.f32.mrb[0].mxu0
      %v1160 = vpop.f32.mrb[0].mxu0
      %v1161 = vadd.f32 %v870, %v1160
      %v1162 = vpop.f32.mrb[0].mxu0
      %1163 = vmatprep.mubr.bf16.mxu0 0
      %1164 = vmatmul.mubr.bf16.gmra.mrb[0].mxu0 %v990
      %v1165 = vpop.f32.mrb[0].mxu0
      %v1166 = vadd.f32 %v875, %v1165
      %v1167 = vpop.f32.mrb[0].mxu0
      %v1168 = vpop.f32.mrb[0].mxu0
      %v1169 = vadd.f32 %v878, %v1168
      %v1170 = vpop.f32.mrb[0].mxu0
      %1171 = vmatprep.mubr.bf16.mxu0 0
      %1172 = vmatmul.mubr.bf16.gmra.mrb[0].mxu0 %v992
      %v1173 = vpop.f32.mrb[0].mxu0
      %v1174 = vadd.f32 %v883, %v1173
      %v1175 = vpop.f32.mrb[0].mxu0
      %v1176 = vpop.f32.mrb[0].mxu0
      %v1177 = vadd.f32 %v886, %v1176
      %v1178 = vpop.f32.mrb[0].mxu0
      %1179 = vmatprep.mubr.bf16.mxu0 0
      %1180 = vmatmul.mubr.bf16.gmra.mrb[0].mxu0 %v994
      %v1181 = vpop.f32.mrb[0].mxu0
      %v1182 = vadd.f32 %v891, %v1181
      %v1183 = vpop.f32.mrb[0].mxu0
      %v1184 = vpop.f32.mrb[0].mxu0
      %v1185 = vadd.f32 %v894, %v1184
      %v1186 = vpop.f32.mrb[0].mxu0
      %1187 = vmatprep.mubr.bf16.mxu0 0
      %1188 = vmatmul.mubr.bf16.gmra.mrb[0].mxu0 %v996
      %v1189 = vpop.f32.mrb[0].mxu0
      %v1190 = vadd.f32 %v899, %v1189
      %v1191 = vpop.f32.mrb[0].mxu0
      %v1192 = vpop.f32.mrb[0].mxu0
      %v1193 = vadd.f32 %v902, %v1192
      %v1194 = vpop.f32.mrb[0].mxu0
      %1195 = vmatprep.mubr.bf16.mxu0 0
      %1196 = vmatmul.mubr.bf16.gmra.mrb[0].mxu0 %v998
      %v1197 = vpop.f32.mrb[0].mxu0
      %v1198 = vadd.f32 %v907, %v1197
      %v1199 = vpop.f32.mrb[0].mxu0
      %v1200 = vpop.f32.mrb[0].mxu0
      %v1201 = vadd.f32 %v910, %v1200
      %v1202 = vpop.f32.mrb[0].mxu0
      %1203 = vmatprep.mubr.bf16.mxu0 0
      %1204 = vmatmul.mubr.bf16.gmra.mrb[0].mxu0 %v1000
      %v1205 = vpop.f32.mrb[0].mxu0
      %v1206 = vadd.f32 %v915, %v1205
      %v1207 = vpop.f32.mrb[0].mxu0
      %v1208 = vpop.f32.mrb[0].mxu0
      %v1209 = vadd.f32 %v918, %v1208
      %v1210 = vpop.f32.mrb[0].mxu0
      %1211 = vmatprep.mubr.bf16.mxu0 0
      %1212 = vmatmul.mubr.bf16.gmra.mrb[0].mxu0 %v1002
      %v1213 = vpop.f32.mrb[0].mxu0
      %v1214 = vadd.f32 %v923, %v1213
      %v1215 = vpop.f32.mrb[0].mxu0
      %v1216 = vpop.f32.mrb[0].mxu0
      %v1217 = vadd.f32 %v926, %v1216
      %v1218 = vpop.f32.mrb[0].mxu0
      %1219 = vmatprep.mubr.bf16.mxu0 0
      %1220 = vmatmul.mubr.bf16.gmra.mrb[0].mxu0 %v1004
      %v1221 = vpop.f32.mrb[0].mxu0
      %v1222 = vadd.f32 %v931, %v1221
      %v1223 = vpop.f32.mrb[0].mxu0
      %v1224 = vpop.f32.mrb[0].mxu0
      %v1225 = vadd.f32 %v934, %v1224
      %v1226 = vpop.f32.mrb[0].mxu0
      %1227 = vmatprep.mubr.bf16.mxu0 0
      %1228 = vmatmul.mubr.bf16.gmra.mrb[0].mxu0 %v1006
      %v1229 = vpop.f32.mrb[0].mxu0
      %v1230 = vadd.f32 %v939, %v1229
      %v1231 = vpop.f32.mrb[0].mxu0
      %v1232 = vpop.f32.mrb[0].mxu0
      %v1233 = vadd.f32 %v942, %v1232
      %v1234 = vpop.f32.mrb[0].mxu0
      %1235 = vdwg.mxu0
      %v1236 = vld [vmem:[%s231] sm:$0xe]
      %s1237 = scalar_lea.vmem %s236, 40
      %v1238 = vld [vmem:[%s1237] sm:$0xf]
      %v1239 = vld [vmem:[%s1237 + $0x4] sm:$0xf]
      %v1240 = vld [vmem:[%s1237 + $0x8] sm:$0xf]
      %v1241 = vld [vmem:[%s1237 + $0xc] sm:$0xf]
      %v1242 = vld [vmem:[%s1237 + $0x10] sm:$0x3]
      %v1244 = vunpack.c.l.b16 %v1236
      %v1245 = vpack.c.b16 %v358, %v1244
      %vm1246 = vcmask 1046528
      %v1247 = vrot.slane %v1245, 1
      %v1248 = vrot.slane %v407, 1
      %v1249 = vsel %vm1246, %v1247, %v1248
      %v1250 = vrot.slane %v408, 1
      %v1251 = vsel %vm1246, %v1248, %v1250
      %v1252 = vrot.slane %v409, 1
      %v1253 = vsel %vm1246, %v1250, %v1252
      %v1254 = vrot.slane %v410, 1
      %v1255 = vsel %vm1246, %v1252, %v1254
      %v1256 = vrot.slane %v411, 1
      %v1257 = vsel %vm1246, %v1254, %v1256
      %v1258 = vrot.slane %v412, 1
      %v1259 = vsel %vm1246, %v1256, %v1258
      %v1260 = vrot.slane %v413, 1
      %v1261 = vsel %vm1246, %v1258, %v1260
      %v1262 = vrot.slane %v414, 1
      %v1263 = vsel %vm1246, %v1260, %v1262
      %v1264 = vrot.slane %v415, 1
      %v1265 = vsel %vm1246, %v1262, %v1264
      %v1266 = vrot.slane %v416, 1
      %v1267 = vsel %vm1246, %v1264, %v1266
      %v1268 = vrot.slane %v417, 1
      %v1269 = vsel %vm1246, %v1266, %v1268
      %v1270 = vrot.slane %v418, 1
      %v1271 = vsel %vm1246, %v1268, %v1270
      %v1272 = vrot.slane %v419, 1
      %v1273 = vsel %vm1246, %v1270, %v1272
      %v1274 = vrot.slane %v420, 1
      %v1275 = vsel %vm1246, %v1272, %v1274
      %v1276 = vrot.slane %v421, 1
      %v1277 = vsel %vm1246, %v1274, %v1276
      %v1278 = vrot.slane %v422, 1
      %v1279 = vsel %vm1246, %v1276, %v1278
      %v1280 = vrot.slane %v423, 1
      %v1281 = vsel %vm1246, %v1278, %v1280
      %v1282 = vrot.slane %v424, 1
      %v1283 = vsel %vm1246, %v1280, %v1282
      %v1284 = vrot.slane %v425, 1
      %v1285 = vsel %vm1246, %v1282, %v1284
      %v1286 = vrot.slane %v426, 1
      %v1287 = vsel %vm1246, %v1284, %v1286
      %v1288 = vrot.slane %v427, 1
      %v1289 = vsel %vm1246, %v1286, %v1288
      %v1290 = vrot.slane %v428, 1
      %v1291 = vsel %vm1246, %v1288, %v1290
      %v1292 = vrot.slane %v429, 1
      %v1293 = vsel %vm1246, %v1290, %v1292
      %v1294 = vrot.slane %v430, 1
      %v1295 = vsel %vm1246, %v1292, %v1294
      %v1301 = vunpack.c.l.b16 %v1238
      %v1302 = vunpack.c.l.b16 %v1239
      %v1303 = vunpack.c.l.b16 %v1240
      %v1304 = vunpack.c.l.b16 %v1241
      %v1305 = vunpack.c.l.b16 %v1242
      %v1306 = vpack.c.b16 %v1302, %v1301
      %v1307 = vpack.c.b16 %v1304, %v1303
      %v1308 = vpack.c.b16 %v1305, %v1305
      %v1312 = vsel %vm643, %v1249, 0
      %v1315 = vsel %vm643, %v1251, 0
      %v1318 = vsel %vm643, %v1253, 0
      %v1321 = vsel %vm643, %v1255, 0
      %v1324 = vsel %vm643, %v1257, 0
      %v1327 = vsel %vm643, %v1259, 0
      %v1330 = vsel %vm643, %v1261, 0
      %v1333 = vsel %vm643, %v1263, 0
      %v1336 = vsel %vm643, %v1265, 0
      %v1339 = vsel %vm643, %v1267, 0
      %v1342 = vsel %vm643, %v1269, 0
      %v1345 = vsel %vm643, %v1271, 0
      %v1348 = vsel %vm643, %v1273, 0
      %v1351 = vsel %vm643, %v1275, 0
      %v1354 = vsel %vm643, %v1277, 0
      %v1357 = vsel %vm643, %v1279, 0
      %v1360 = vsel %vm643, %v1281, 0
      %v1363 = vsel %vm643, %v1283, 0
      %v1366 = vsel %vm643, %v1285, 0
      %v1369 = vsel %vm643, %v1287, 0
      %v1372 = vsel %vm643, %v1289, 0
      %v1375 = vsel %vm643, %v1291, 0
      %v1378 = vsel %vm643, %v1293, 0
      %v1381 = vsel %vm643, %v1295, 0
      %v1384 = vsel %vm716, %v1308, 0
      %1386 = vmatprep.subr.bf16.mxu0 0
      %1387 = vmatpush1.bf16.msra.mxu0 %v1306
      %1388 = vmatprep.subr.bf16.mxu0 0
      %1389 = vmatpush1.bf16.msra.mxu0 %v1307
      %1390 = vmatprep.subr.bf16.mxu0 0
      %1391 = vmatpush1.bf16.msra.mxu0 %v1384
      %1392 = vmatprep.subr.bf16.mxu0 0
      %1393 = vmatpush1.bf16.msra.mxu0 0
      %1394 = vmatprep.subr.bf16.mxu0 0
      %1395 = vmatpush1.bf16.msra.mxu0 0
      %1396 = vmatprep.subr.bf16.mxu0 0
      %1397 = vmatpush1.bf16.msra.mxu0 0
      %1398 = vmatprep.subr.bf16.mxu0 0
      %1399 = vmatpush1.bf16.msra.mxu0 0
      %1400 = vmatprep.subr.bf16.mxu0 0
      %1401 = vmatpush1.bf16.msra.mxu0 0
      %1402 = vmatprep.subr.bf16.mxu0 0
      %1403 = vmatpush1.bf16.msra.mxu0 0
      %1404 = vmatprep.subr.bf16.mxu0 0
      %1405 = vmatpush1.bf16.msra.mxu0 0
      %1406 = vmatprep.subr.bf16.mxu0 0
      %1407 = vmatpush1.bf16.msra.mxu0 0
      %1408 = vmatprep.subr.bf16.mxu0 0
      %1409 = vmatpush1.bf16.msra.mxu0 0
      %1410 = vmatprep.subr.bf16.mxu0 0
      %1411 = vmatpush1.bf16.msra.mxu0 0
      %1412 = vmatprep.subr.bf16.mxu0 0
      %1413 = vmatpush1.bf16.msra.mxu0 0
      %1414 = vmatprep.subr.bf16.mxu0 0
      %1415 = vmatpush1.bf16.msra.mxu0 0
      %1416 = vmatprep.subr.bf16.mxu0 0
      %1417 = vmatpush1.bf16.msra.mxu0 0
      %1418 = vmatprep.mubr.bf16.mxu0 0
      %1419 = vmatmul.mubr.bf16.gmra.mrb[0].mxu0 %v1312
      %v1420 = vpop.f32.mrb[0].mxu0
      %v1421 = vadd.f32 0.0, %v1420
      %v1422 = vpop.f32.mrb[0].mxu0
      %v1423 = vpop.f32.mrb[0].mxu0
      %v1424 = vadd.f32 0.0, %v1423
      %v1425 = vpop.f32.mrb[0].mxu0
      %1426 = vmatprep.mubr.bf16.mxu0 0
      %1427 = vmatmul.mubr.bf16.gmra.mrb[0].mxu0 %v1315
      %v1428 = vpop.f32.mrb[0].mxu0
      %v1429 = vadd.f32 0.0, %v1428
      %v1430 = vpop.f32.mrb[0].mxu0
      %v1431 = vpop.f32.mrb[0].mxu0
      %v1432 = vadd.f32 0.0, %v1431
      %v1433 = vpop.f32.mrb[0].mxu0
      %1434 = vmatprep.mubr.bf16.mxu0 0
      %1435 = vmatmul.mubr.bf16.gmra.mrb[0].mxu0 %v1318
      %v1436 = vpop.f32.mrb[0].mxu0
      %v1437 = vadd.f32 0.0, %v1436
      %v1438 = vpop.f32.mrb[0].mxu0
      %v1439 = vpop.f32.mrb[0].mxu0
      %v1440 = vadd.f32 0.0, %v1439
      %v1441 = vpop.f32.mrb[0].mxu0
      %1442 = vmatprep.mubr.bf16.mxu0 0
      %1443 = vmatmul.mubr.bf16.gmra.mrb[0].mxu0 %v1321
      %v1444 = vpop.f32.mrb[0].mxu0
      %v1445 = vadd.f32 0.0, %v1444
      %v1446 = vpop.f32.mrb[0].mxu0
      %v1447 = vpop.f32.mrb[0].mxu0
      %v1448 = vadd.f32 0.0, %v1447
      %v1449 = vpop.f32.mrb[0].mxu0
      %1450 = vmatprep.mubr.bf16.mxu0 0
      %1451 = vmatmul.mubr.bf16.gmra.mrb[0].mxu0 %v1324
      %v1452 = vpop.f32.mrb[0].mxu0
      %v1453 = vadd.f32 0.0, %v1452
      %v1454 = vpop.f32.mrb[0].mxu0
      %v1455 = vpop.f32.mrb[0].mxu0
      %v1456 = vadd.f32 0.0, %v1455
      %v1457 = vpop.f32.mrb[0].mxu0
      %1458 = vmatprep.mubr.bf16.mxu0 0
      %1459 = vmatmul.mubr.bf16.gmra.mrb[0].mxu0 %v1327
      %v1460 = vpop.f32.mrb[0].mxu0
      %v1461 = vadd.f32 0.0, %v1460
      %v1462 = vpop.f32.mrb[0].mxu0
      %v1463 = vpop.f32.mrb[0].mxu0
      %v1464 = vadd.f32 0.0, %v1463
      %v1465 = vpop.f32.mrb[0].mxu0
      %1466 = vmatprep.mubr.bf16.mxu0 0
      %1467 = vmatmul.mubr.bf16.gmra.mrb[0].mxu0 %v1330
      %v1468 = vpop.f32.mrb[0].mxu0
      %v1469 = vadd.f32 0.0, %v1468
      %v1470 = vpop.f32.mrb[0].mxu0
      %v1471 = vpop.f32.mrb[0].mxu0
      %v1472 = vadd.f32 0.0, %v1471
      %v1473 = vpop.f32.mrb[0].mxu0
      %1474 = vmatprep.mubr.bf16.mxu0 0
      %1475 = vmatmul.mubr.bf16.gmra.mrb[0].mxu0 %v1333
      %v1476 = vpop.f32.mrb[0].mxu0
      %v1477 = vadd.f32 0.0, %v1476
      %v1478 = vpop.f32.mrb[0].mxu0
      %v1479 = vpop.f32.mrb[0].mxu0
      %v1480 = vadd.f32 0.0, %v1479
      %v1481 = vpop.f32.mrb[0].mxu0
      %1482 = vmatprep.mubr.bf16.mxu0 0
      %1483 = vmatmul.mubr.bf16.gmra.mrb[0].mxu0 %v1336
      %v1484 = vpop.f32.mrb[0].mxu0
      %v1485 = vadd.f32 0.0, %v1484
      %v1486 = vpop.f32.mrb[0].mxu0
      %v1487 = vpop.f32.mrb[0].mxu0
      %v1488 = vadd.f32 0.0, %v1487
      %v1489 = vpop.f32.mrb[0].mxu0
      %1490 = vmatprep.mubr.bf16.mxu0 0
      %1491 = vmatmul.mubr.bf16.gmra.mrb[0].mxu0 %v1339
      %v1492 = vpop.f32.mrb[0].mxu0
      %v1493 = vadd.f32 0.0, %v1492
      %v1494 = vpop.f32.mrb[0].mxu0
      %v1495 = vpop.f32.mrb[0].mxu0
      %v1496 = vadd.f32 0.0, %v1495
      %v1497 = vpop.f32.mrb[0].mxu0
      %1498 = vmatprep.mubr.bf16.mxu0 0
      %1499 = vmatmul.mubr.bf16.gmra.mrb[0].mxu0 %v1342
      %v1500 = vpop.f32.mrb[0].mxu0
      %v1501 = vadd.f32 0.0, %v1500
      %v1502 = vpop.f32.mrb[0].mxu0
      %v1503 = vpop.f32.mrb[0].mxu0
      %v1504 = vadd.f32 0.0, %v1503
      %v1505 = vpop.f32.mrb[0].mxu0
      %1506 = vmatprep.mubr.bf16.mxu0 0
      %1507 = vmatmul.mubr.bf16.gmra.mrb[0].mxu0 %v1345
      %v1508 = vpop.f32.mrb[0].mxu0
      %v1509 = vadd.f32 0.0, %v1508
      %v1510 = vpop.f32.mrb[0].mxu0
      %v1511 = vpop.f32.mrb[0].mxu0
      %v1512 = vadd.f32 0.0, %v1511
      %v1513 = vpop.f32.mrb[0].mxu0
      %1514 = vmatprep.mubr.bf16.mxu0 0
      %1515 = vmatmul.mubr.bf16.gmra.mrb[0].mxu0 %v1348
      %v1516 = vpop.f32.mrb[0].mxu0
      %v1517 = vadd.f32 0.0, %v1516
      %v1518 = vpop.f32.mrb[0].mxu0
      %v1519 = vpop.f32.mrb[0].mxu0
      %v1520 = vadd.f32 0.0, %v1519
      %v1521 = vpop.f32.mrb[0].mxu0
      %1522 = vmatprep.mubr.bf16.mxu0 0
      %1523 = vmatmul.mubr.bf16.gmra.mrb[0].mxu0 %v1351
      %v1524 = vpop.f32.mrb[0].mxu0
      %v1525 = vadd.f32 0.0, %v1524
      %v1526 = vpop.f32.mrb[0].mxu0
      %v1527 = vpop.f32.mrb[0].mxu0
      %v1528 = vadd.f32 0.0, %v1527
      %v1529 = vpop.f32.mrb[0].mxu0
      %1530 = vmatprep.mubr.bf16.mxu0 0
      %1531 = vmatmul.mubr.bf16.gmra.mrb[0].mxu0 %v1354
      %v1532 = vpop.f32.mrb[0].mxu0
      %v1533 = vadd.f32 0.0, %v1532
      %v1534 = vpop.f32.mrb[0].mxu0
      %v1535 = vpop.f32.mrb[0].mxu0
      %v1536 = vadd.f32 0.0, %v1535
      %v1537 = vpop.f32.mrb[0].mxu0
      %1538 = vmatprep.mubr.bf16.mxu0 0
      %1539 = vmatmul.mubr.bf16.gmra.mrb[0].mxu0 %v1357
      %v1540 = vpop.f32.mrb[0].mxu0
      %v1541 = vadd.f32 0.0, %v1540
      %v1542 = vpop.f32.mrb[0].mxu0
      %v1543 = vpop.f32.mrb[0].mxu0
      %v1544 = vadd.f32 0.0, %v1543
      %v1545 = vpop.f32.mrb[0].mxu0
      %1546 = vmatprep.mubr.bf16.mxu0 0
      %1547 = vmatmul.mubr.bf16.gmra.mrb[0].mxu0 %v1360
      %v1548 = vpop.f32.mrb[0].mxu0
      %v1549 = vadd.f32 0.0, %v1548
      %v1550 = vpop.f32.mrb[0].mxu0
      %v1551 = vpop.f32.mrb[0].mxu0
      %v1552 = vadd.f32 0.0, %v1551
      %v1553 = vpop.f32.mrb[0].mxu0
      %1554 = vmatprep.mubr.bf16.mxu0 0
      %1555 = vmatmul.mubr.bf16.gmra.mrb[0].mxu0 %v1363
      %v1556 = vpop.f32.mrb[0].mxu0
      %v1557 = vadd.f32 0.0, %v1556
      %v1558 = vpop.f32.mrb[0].mxu0
      %v1559 = vpop.f32.mrb[0].mxu0
      %v1560 = vadd.f32 0.0, %v1559
      %v1561 = vpop.f32.mrb[0].mxu0
      %1562 = vmatprep.mubr.bf16.mxu0 0
      %1563 = vmatmul.mubr.bf16.gmra.mrb[0].mxu0 %v1366
      %v1564 = vpop.f32.mrb[0].mxu0
      %v1565 = vadd.f32 0.0, %v1564
      %v1566 = vpop.f32.mrb[0].mxu0
      %v1567 = vpop.f32.mrb[0].mxu0
      %v1568 = vadd.f32 0.0, %v1567
      %v1569 = vpop.f32.mrb[0].mxu0
      %1570 = vmatprep.mubr.bf16.mxu0 0
      %1571 = vmatmul.mubr.bf16.gmra.mrb[0].mxu0 %v1369
      %v1572 = vpop.f32.mrb[0].mxu0
      %v1573 = vadd.f32 0.0, %v1572
      %v1574 = vpop.f32.mrb[0].mxu0
      %v1575 = vpop.f32.mrb[0].mxu0
      %v1576 = vadd.f32 0.0, %v1575
      %v1577 = vpop.f32.mrb[0].mxu0
      %1578 = vmatprep.mubr.bf16.mxu0 0
      %1579 = vmatmul.mubr.bf16.gmra.mrb[0].mxu0 %v1372
      %v1580 = vpop.f32.mrb[0].mxu0
      %v1581 = vadd.f32 0.0, %v1580
      %v1582 = vpop.f32.mrb[0].mxu0
      %v1583 = vpop.f32.mrb[0].mxu0
      %v1584 = vadd.f32 0.0, %v1583
      %v1585 = vpop.f32.mrb[0].mxu0
      %1586 = vmatprep.mubr.bf16.mxu0 0
      %1587 = vmatmul.mubr.bf16.gmra.mrb[0].mxu0 %v1375
      %v1588 = vpop.f32.mrb[0].mxu0
      %v1589 = vadd.f32 0.0, %v1588
      %v1590 = vpop.f32.mrb[0].mxu0
      %v1591 = vpop.f32.mrb[0].mxu0
      %v1592 = vadd.f32 0.0, %v1591
      %v1593 = vpop.f32.mrb[0].mxu0
      %1594 = vmatprep.mubr.bf16.mxu0 0
      %1595 = vmatmul.mubr.bf16.gmra.mrb[0].mxu0 %v1378
      %v1596 = vpop.f32.mrb[0].mxu0
      %v1597 = vadd.f32 0.0, %v1596
      %v1598 = vpop.f32.mrb[0].mxu0
      %v1599 = vpop.f32.mrb[0].mxu0
      %v1600 = vadd.f32 0.0, %v1599
      %v1601 = vpop.f32.mrb[0].mxu0
      %1602 = vmatprep.mubr.bf16.mxu0 0
      %1603 = vmatmul.mubr.bf16.gmra.mrb[0].mxu0 %v1381
      %v1604 = vpop.f32.mrb[0].mxu0
      %v1605 = vadd.f32 0.0, %v1604
      %v1606 = vpop.f32.mrb[0].mxu0
      %v1607 = vpop.f32.mrb[0].mxu0
      %v1608 = vadd.f32 0.0, %v1607
      %v1609 = vpop.f32.mrb[0].mxu0
      %1610 = vdwg.mxu0
      %v1611 = vadd.f32 %v1046, %v1421
      %v1612 = vadd.f32 %v1049, %v1424
      %v1613 = vadd.f32 %v1054, %v1429
      %v1614 = vadd.f32 %v1057, %v1432
      %v1615 = vadd.f32 %v1062, %v1437
      %v1616 = vadd.f32 %v1065, %v1440
      %v1617 = vadd.f32 %v1070, %v1445
      %v1618 = vadd.f32 %v1073, %v1448
      %v1619 = vadd.f32 %v1078, %v1453
      %v1620 = vadd.f32 %v1081, %v1456
      %v1621 = vadd.f32 %v1086, %v1461
      %v1622 = vadd.f32 %v1089, %v1464
      %v1623 = vadd.f32 %v1094, %v1469
      %v1624 = vadd.f32 %v1097, %v1472
      %v1625 = vadd.f32 %v1102, %v1477
      %v1626 = vadd.f32 %v1105, %v1480
      %v1627 = vadd.f32 %v1110, %v1485
      %v1628 = vadd.f32 %v1113, %v1488
      %v1629 = vadd.f32 %v1118, %v1493
      %v1630 = vadd.f32 %v1121, %v1496
      %v1631 = vadd.f32 %v1126, %v1501
      %v1632 = vadd.f32 %v1129, %v1504
      %v1633 = vadd.f32 %v1134, %v1509
      %v1634 = vadd.f32 %v1137, %v1512
      %v1635 = vadd.f32 %v1142, %v1517
      %v1636 = vadd.f32 %v1145, %v1520
      %v1637 = vadd.f32 %v1150, %v1525
      %v1638 = vadd.f32 %v1153, %v1528
      %v1639 = vadd.f32 %v1158, %v1533
      %v1640 = vadd.f32 %v1161, %v1536
      %v1641 = vadd.f32 %v1166, %v1541
      %v1642 = vadd.f32 %v1169, %v1544
      %v1643 = vadd.f32 %v1174, %v1549
      %v1644 = vadd.f32 %v1177, %v1552
      %v1645 = vadd.f32 %v1182, %v1557
      %v1646 = vadd.f32 %v1185, %v1560
      %v1647 = vadd.f32 %v1190, %v1565
      %v1648 = vadd.f32 %v1193, %v1568
      %v1649 = vadd.f32 %v1198, %v1573
      %v1650 = vadd.f32 %v1201, %v1576
      %v1651 = vadd.f32 %v1206, %v1581
      %v1652 = vadd.f32 %v1209, %v1584
      %v1653 = vadd.f32 %v1214, %v1589
      %v1654 = vadd.f32 %v1217, %v1592
      %v1655 = vadd.f32 %v1222, %v1597
      %v1656 = vadd.f32 %v1225, %v1600
      %v1657 = vadd.f32 %v1230, %v1605
      %v1658 = vadd.f32 %v1233, %v1608
      %v1659 = vld [vmem:[%s231 + $0xc] sm:$0xf]
      %v1660 = vld [vmem:[%s231 + $0x10] sm:$0xf]
      %v1661 = vld [vmem:[%s231 + $0x14] sm:$0xf]
      %v1662 = vld [vmem:[%s231 + $0x18] sm:$0xf]
      %v1663 = vld [vmem:[%s231 + $0x1c] sm:$0xf]
      %v1664 = vld [vmem:[%s231 + $0x20] sm:$0xf]
      %v1665 = vld [vmem:[%s231 + $0x24] sm:$0xf]
      %v1666 = vld [vmem:[%s231 + $0x28] sm:$0xf]
      %v1667 = vld [vmem:[%s231 + $0x2c] sm:$0xf]
      %v1668 = vld [vmem:[%s231 + $0x30] sm:$0xf]
      %v1669 = vld [vmem:[%s231 + $0x34] sm:$0xf]
      %v1670 = vld [vmem:[%s231 + $0x38] sm:$0xf]
      %v1671 = vld [vmem:[%s231 + $0x3c] sm:$0xf]
      %v1672 = vld [vmem:[%s231 + $0x40] sm:$0xf]
      %v1673 = vld [vmem:[%s231 + $0x44] sm:$0xf]
      %v1674 = vld [vmem:[%s231 + $0x48] sm:$0xf]
      %v1675 = vld [vmem:[%s231 + $0x4c] sm:$0xf]
      %v1676 = vld [vmem:[%s231 + $0x50] sm:$0xf]
      %v1677 = vld [vmem:[%s231 + $0x54] sm:$0xf]
      %v1678 = vld [vmem:[%s231 + $0x58] sm:$0xf]
      %v1679 = vld [vmem:[%s231 + $0x5c] sm:$0xf]
      %v1680 = vld [vmem:[%s231 + $0x60] sm:$0xf]
      %v1681 = vld [vmem:[%s231 + $0x64] sm:$0xf]
      %v1682 = vld [vmem:[%s231 + $0x68] sm:$0xf]
      %v1683 = vld [vmem:[%s231 + $0x6c] sm:$0xf]
      %v1684 = vld [vmem:[%s231 + $0x70] sm:$0xf]
      %v1685 = vld [vmem:[%s231 + $0x74] sm:$0xf]
      %v1686 = vld [vmem:[%s231 + $0x78] sm:$0xf]
      %v1687 = vld [vmem:[%s231 + $0x7c] sm:$0xf]
      %v1688 = vld [vmem:[%s231 + $0x80] sm:$0xf]
      %v1689 = vld [vmem:[%s231 + $0x84] sm:$0xf]
      %v1690 = vld [vmem:[%s231 + $0x88] sm:$0xf]
      %v1691 = vld [vmem:[%s231 + $0x8c] sm:$0xf]
      %v1692 = vld [vmem:[%s231 + $0x90] sm:$0xf]
      %v1693 = vld [vmem:[%s231 + $0x94] sm:$0xf]
      %v1694 = vld [vmem:[%s231 + $0x98] sm:$0xf]
      %v1695 = vld [vmem:[%s231 + $0x9c] sm:$0xf]
      %v1696 = vld [vmem:[%s231 + $0xa0] sm:$0xf]
      %v1697 = vld [vmem:[%s231 + $0xa4] sm:$0xf]
      %v1698 = vld [vmem:[%s231 + $0xa8] sm:$0xf]
      %v1699 = vld [vmem:[%s231 + $0xac] sm:$0xf]
      %v1700 = vld [vmem:[%s231 + $0xb0] sm:$0xf]
      %v1701 = vld [vmem:[%s231 + $0xb4] sm:$0xf]
      %v1702 = vld [vmem:[%s231 + $0xb8] sm:$0xf]
      %v1703 = vld [vmem:[%s231 + $0xbc] sm:$0xf]
      %v1704 = vld [vmem:[%s231 + $0xc0] sm:$0xf]
      %v1705 = vld [vmem:[%s231 + $0xc4] sm:$0xf]
      %v1706 = vld [vmem:[%s231 + $0xc8] sm:$0xf]
      %s1707 = scalar_lea.vmem %s236, 60
      %v1708 = vld [vmem:[%s1707] sm:$0xf]
      %v1709 = vld [vmem:[%s1707 + $0x4] sm:$0xf]
      %v1710 = vld [vmem:[%s1707 + $0x8] sm:$0xf]
      %v1711 = vld [vmem:[%s1707 + $0xc] sm:$0xf]
      %v1712 = vld [vmem:[%s1707 + $0x10] sm:$0x3]
      %v1761 = vunpack.c.l.b16 %v1659
      %v1762 = vunpack.c.l.b16 %v1660
      %v1763 = vunpack.c.l.b16 %v1661
      %v1764 = vunpack.c.l.b16 %v1662
      %v1765 = vunpack.c.l.b16 %v1663
      %v1766 = vunpack.c.l.b16 %v1664
      %v1767 = vunpack.c.l.b16 %v1665
      %v1768 = vunpack.c.l.b16 %v1666
      %v1769 = vunpack.c.l.b16 %v1667
      %v1770 = vunpack.c.l.b16 %v1668
      %v1771 = vunpack.c.l.b16 %v1669
      %v1772 = vunpack.c.l.b16 %v1670
      %v1773 = vunpack.c.l.b16 %v1671
      %v1774 = vunpack.c.l.b16 %v1672
      %v1775 = vunpack.c.l.b16 %v1673
      %v1776 = vunpack.c.l.b16 %v1674
      %v1777 = vunpack.c.l.b16 %v1675
      %v1778 = vunpack.c.l.b16 %v1676
      %v1779 = vunpack.c.l.b16 %v1677
      %v1780 = vunpack.c.l.b16 %v1678
      %v1781 = vunpack.c.l.b16 %v1679
      %v1782 = vunpack.c.l.b16 %v1680
      %v1783 = vunpack.c.l.b16 %v1681
      %v1784 = vunpack.c.l.b16 %v1682
      %v1785 = vunpack.c.l.b16 %v1683
      %v1786 = vunpack.c.l.b16 %v1684
      %v1787 = vunpack.c.l.b16 %v1685
      %v1788 = vunpack.c.l.b16 %v1686
      %v1789 = vunpack.c.l.b16 %v1687
      %v1790 = vunpack.c.l.b16 %v1688
      %v1791 = vunpack.c.l.b16 %v1689
      %v1792 = vunpack.c.l.b16 %v1690
      %v1793 = vunpack.c.l.b16 %v1691
      %v1794 = vunpack.c.l.b16 %v1692
      %v1795 = vunpack.c.l.b16 %v1693
      %v1796 = vunpack.c.l.b16 %v1694
      %v1797 = vunpack.c.l.b16 %v1695
      %v1798 = vunpack.c.l.b16 %v1696
      %v1799 = vunpack.c.l.b16 %v1697
      %v1800 = vunpack.c.l.b16 %v1698
      %v1801 = vunpack.c.l.b16 %v1699
      %v1802 = vunpack.c.l.b16 %v1700
      %v1803 = vunpack.c.l.b16 %v1701
      %v1804 = vunpack.c.l.b16 %v1702
      %v1805 = vunpack.c.l.b16 %v1703
      %v1806 = vunpack.c.l.b16 %v1704
      %v1807 = vunpack.c.l.b16 %v1705
      %v1808 = vunpack.c.l.b16 %v1706
      %v1809 = vpack.c.b16 %v1762, %v1761
      %v1810 = vpack.c.b16 %v1764, %v1763
      %v1811 = vpack.c.b16 %v1766, %v1765
      %v1812 = vpack.c.b16 %v1768, %v1767
      %v1813 = vpack.c.b16 %v1770, %v1769
      %v1814 = vpack.c.b16 %v1772, %v1771
      %v1815 = vpack.c.b16 %v1774, %v1773
      %v1816 = vpack.c.b16 %v1776, %v1775
      %v1817 = vpack.c.b16 %v1778, %v1777
      %v1818 = vpack.c.b16 %v1780, %v1779
      %v1819 = vpack.c.b16 %v1782, %v1781
      %v1820 = vpack.c.b16 %v1784, %v1783
      %v1821 = vpack.c.b16 %v1786, %v1785
      %v1822 = vpack.c.b16 %v1788, %v1787
      %v1823 = vpack.c.b16 %v1790, %v1789
      %v1824 = vpack.c.b16 %v1792, %v1791
      %v1825 = vpack.c.b16 %v1794, %v1793
      %v1826 = vpack.c.b16 %v1796, %v1795
      %v1827 = vpack.c.b16 %v1798, %v1797
      %v1828 = vpack.c.b16 %v1800, %v1799
      %v1829 = vpack.c.b16 %v1802, %v1801
      %v1830 = vpack.c.b16 %v1804, %v1803
      %v1831 = vpack.c.b16 %v1806, %v1805
      %v1832 = vpack.c.b16 %v1808, %v1807
      %v1838 = vunpack.c.l.b16 %v1708
      %v1839 = vunpack.c.l.b16 %v1709
      %v1840 = vunpack.c.l.b16 %v1710
      %v1841 = vunpack.c.l.b16 %v1711
      %v1842 = vunpack.c.l.b16 %v1712
      %v1843 = vpack.c.b16 %v1839, %v1838
      %v1844 = vpack.c.b16 %v1841, %v1840
      %v1845 = vpack.c.b16 %v1842, %v1842
      %v1849 = vsel %vm643, %v1809, 0
      %v1852 = vsel %vm643, %v1810, 0
      %v1855 = vsel %vm643, %v1811, 0
      %v1858 = vsel %vm643, %v1812, 0
      %v1861 = vsel %vm643, %v1813, 0
      %v1864 = vsel %vm643, %v1814, 0
      %v1867 = vsel %vm643, %v1815, 0
      %v1870 = vsel %vm643, %v1816, 0
      %v1873 = vsel %vm643, %v1817, 0
      %v1876 = vsel %vm643, %v1818, 0
      %v1879 = vsel %vm643, %v1819, 0
      %v1882 = vsel %vm643, %v1820, 0
      %v1885 = vsel %vm643, %v1821, 0
      %v1888 = vsel %vm643, %v1822, 0
      %v1891 = vsel %vm643, %v1823, 0
      %v1894 = vsel %vm643, %v1824, 0
      %v1897 = vsel %vm643, %v1825, 0
      %v1900 = vsel %vm643, %v1826, 0
      %v1903 = vsel %vm643, %v1827, 0
      %v1906 = vsel %vm643, %v1828, 0
      %v1909 = vsel %vm643, %v1829, 0
      %v1912 = vsel %vm643, %v1830, 0
      %v1915 = vsel %vm643, %v1831, 0
      %v1918 = vsel %vm643, %v1832, 0
      %v1921 = vsel %vm716, %v1845, 0
      %1923 = vmatprep.subr.bf16.mxu0 0
      %1924 = vmatpush1.bf16.msra.mxu0 %v1843
      %1925 = vmatprep.subr.bf16.mxu0 0
      %1926 = vmatpush1.bf16.msra.mxu0 %v1844
      %1927 = vmatprep.subr.bf16.mxu0 0
      %1928 = vmatpush1.bf16.msra.mxu0 %v1921
      %1929 = vmatprep.subr.bf16.mxu0 0
      %1930 = vmatpush1.bf16.msra.mxu0 0
      %1931 = vmatprep.subr.bf16.mxu0 0
      %1932 = vmatpush1.bf16.msra.mxu0 0
      %1933 = vmatprep.subr.bf16.mxu0 0
      %1934 = vmatpush1.bf16.msra.mxu0 0
      %1935 = vmatprep.subr.bf16.mxu0 0
      %1936 = vmatpush1.bf16.msra.mxu0 0
      %1937 = vmatprep.subr.bf16.mxu0 0
      %1938 = vmatpush1.bf16.msra.mxu0 0
      %1939 = vmatprep.subr.bf16.mxu0 0
      %1940 = vmatpush1.bf16.msra.mxu0 0
      %1941 = vmatprep.subr.bf16.mxu0 0
      %1942 = vmatpush1.bf16.msra.mxu0 0
      %1943 = vmatprep.subr.bf16.mxu0 0
      %1944 = vmatpush1.bf16.msra.mxu0 0
      %1945 = vmatprep.subr.bf16.mxu0 0
      %1946 = vmatpush1.bf16.msra.mxu0 0
      %1947 = vmatprep.subr.bf16.mxu0 0
      %1948 = vmatpush1.bf16.msra.mxu0 0
      %1949 = vmatprep.subr.bf16.mxu0 0
      %1950 = vmatpush1.bf16.msra.mxu0 0
      %1951 = vmatprep.subr.bf16.mxu0 0
      %1952 = vmatpush1.bf16.msra.mxu0 0
      %1953 = vmatprep.subr.bf16.mxu0 0
      %1954 = vmatpush1.bf16.msra.mxu0 0
      %1955 = vmatprep.mubr.bf16.mxu0 0
      %1956 = vmatmul.mubr.bf16.gmra.mrb[0].mxu0 %v1849
      %v1957 = vpop.f32.mrb[0].mxu0
      %v1958 = vadd.f32 0.0, %v1957
      %v1959 = vpop.f32.mrb[0].mxu0
      %v1960 = vpop.f32.mrb[0].mxu0
      %v1961 = vadd.f32 0.0, %v1960
      %v1962 = vpop.f32.mrb[0].mxu0
      %1963 = vmatprep.mubr.bf16.mxu0 0
      %1964 = vmatmul.mubr.bf16.gmra.mrb[0].mxu0 %v1852
      %v1965 = vpop.f32.mrb[0].mxu0
      %v1966 = vadd.f32 0.0, %v1965
      %v1967 = vpop.f32.mrb[0].mxu0
      %v1968 = vpop.f32.mrb[0].mxu0
      %v1969 = vadd.f32 0.0, %v1968
      %v1970 = vpop.f32.mrb[0].mxu0
      %1971 = vmatprep.mubr.bf16.mxu0 0
      %1972 = vmatmul.mubr.bf16.gmra.mrb[0].mxu0 %v1855
      %v1973 = vpop.f32.mrb[0].mxu0
      %v1974 = vadd.f32 0.0, %v1973
      %v1975 = vpop.f32.mrb[0].mxu0
      %v1976 = vpop.f32.mrb[0].mxu0
      %v1977 = vadd.f32 0.0, %v1976
      %v1978 = vpop.f32.mrb[0].mxu0
      %1979 = vmatprep.mubr.bf16.mxu0 0
      %1980 = vmatmul.mubr.bf16.gmra.mrb[0].mxu0 %v1858
      %v1981 = vpop.f32.mrb[0].mxu0
      %v1982 = vadd.f32 0.0, %v1981
      %v1983 = vpop.f32.mrb[0].mxu0
      %v1984 = vpop.f32.mrb[0].mxu0
      %v1985 = vadd.f32 0.0, %v1984
      %v1986 = vpop.f32.mrb[0].mxu0
      %1987 = vmatprep.mubr.bf16.mxu0 0
      %1988 = vmatmul.mubr.bf16.gmra.mrb[0].mxu0 %v1861
      %v1989 = vpop.f32.mrb[0].mxu0
      %v1990 = vadd.f32 0.0, %v1989
      %v1991 = vpop.f32.mrb[0].mxu0
      %v1992 = vpop.f32.mrb[0].mxu0
      %v1993 = vadd.f32 0.0, %v1992
      %v1994 = vpop.f32.mrb[0].mxu0
      %1995 = vmatprep.mubr.bf16.mxu0 0
      %1996 = vmatmul.mubr.bf16.gmra.mrb[0].mxu0 %v1864
      %v1997 = vpop.f32.mrb[0].mxu0
      %v1998 = vadd.f32 0.0, %v1997
      %v1999 = vpop.f32.mrb[0].mxu0
      %v2000 = vpop.f32.mrb[0].mxu0
      %v2001 = vadd.f32 0.0, %v2000
      %v2002 = vpop.f32.mrb[0].mxu0
      %2003 = vmatprep.mubr.bf16.mxu0 0
      %2004 = vmatmul.mubr.bf16.gmra.mrb[0].mxu0 %v1867
      %v2005 = vpop.f32.mrb[0].mxu0
      %v2006 = vadd.f32 0.0, %v2005
      %v2007 = vpop.f32.mrb[0].mxu0
      %v2008 = vpop.f32.mrb[0].mxu0
      %v2009 = vadd.f32 0.0, %v2008
      %v2010 = vpop.f32.mrb[0].mxu0
      %2011 = vmatprep.mubr.bf16.mxu0 0
      %2012 = vmatmul.mubr.bf16.gmra.mrb[0].mxu0 %v1870
      %v2013 = vpop.f32.mrb[0].mxu0
      %v2014 = vadd.f32 0.0, %v2013
      %v2015 = vpop.f32.mrb[0].mxu0
      %v2016 = vpop.f32.mrb[0].mxu0
      %v2017 = vadd.f32 0.0, %v2016
      %v2018 = vpop.f32.mrb[0].mxu0
      %2019 = vmatprep.mubr.bf16.mxu0 0
      %2020 = vmatmul.mubr.bf16.gmra.mrb[0].mxu0 %v1873
      %v2021 = vpop.f32.mrb[0].mxu0
      %v2022 = vadd.f32 0.0, %v2021
      %v2023 = vpop.f32.mrb[0].mxu0
      %v2024 = vpop.f32.mrb[0].mxu0
      %v2025 = vadd.f32 0.0, %v2024
      %v2026 = vpop.f32.mrb[0].mxu0
      %2027 = vmatprep.mubr.bf16.mxu0 0
      %2028 = vmatmul.mubr.bf16.gmra.mrb[0].mxu0 %v1876
      %v2029 = vpop.f32.mrb[0].mxu0
      %v2030 = vadd.f32 0.0, %v2029
      %v2031 = vpop.f32.mrb[0].mxu0
      %v2032 = vpop.f32.mrb[0].mxu0
      %v2033 = vadd.f32 0.0, %v2032
      %v2034 = vpop.f32.mrb[0].mxu0
      %2035 = vmatprep.mubr.bf16.mxu0 0
      %2036 = vmatmul.mubr.bf16.gmra.mrb[0].mxu0 %v1879
      %v2037 = vpop.f32.mrb[0].mxu0
      %v2038 = vadd.f32 0.0, %v2037
      %v2039 = vpop.f32.mrb[0].mxu0
      %v2040 = vpop.f32.mrb[0].mxu0
      %v2041 = vadd.f32 0.0, %v2040
      %v2042 = vpop.f32.mrb[0].mxu0
      %2043 = vmatprep.mubr.bf16.mxu0 0
      %2044 = vmatmul.mubr.bf16.gmra.mrb[0].mxu0 %v1882
      %v2045 = vpop.f32.mrb[0].mxu0
      %v2046 = vadd.f32 0.0, %v2045
      %v2047 = vpop.f32.mrb[0].mxu0
      %v2048 = vpop.f32.mrb[0].mxu0
      %v2049 = vadd.f32 0.0, %v2048
      %v2050 = vpop.f32.mrb[0].mxu0
      %2051 = vmatprep.mubr.bf16.mxu0 0
      %2052 = vmatmul.mubr.bf16.gmra.mrb[0].mxu0 %v1885
      %v2053 = vpop.f32.mrb[0].mxu0
      %v2054 = vadd.f32 0.0, %v2053
      %v2055 = vpop.f32.mrb[0].mxu0
      %v2056 = vpop.f32.mrb[0].mxu0
      %v2057 = vadd.f32 0.0, %v2056
      %v2058 = vpop.f32.mrb[0].mxu0
      %2059 = vmatprep.mubr.bf16.mxu0 0
      %2060 = vmatmul.mubr.bf16.gmra.mrb[0].mxu0 %v1888
      %v2061 = vpop.f32.mrb[0].mxu0
      %v2062 = vadd.f32 0.0, %v2061
      %v2063 = vpop.f32.mrb[0].mxu0
      %v2064 = vpop.f32.mrb[0].mxu0
      %v2065 = vadd.f32 0.0, %v2064
      %v2066 = vpop.f32.mrb[0].mxu0
      %2067 = vmatprep.mubr.bf16.mxu0 0
      %2068 = vmatmul.mubr.bf16.gmra.mrb[0].mxu0 %v1891
      %v2069 = vpop.f32.mrb[0].mxu0
      %v2070 = vadd.f32 0.0, %v2069
      %v2071 = vpop.f32.mrb[0].mxu0
      %v2072 = vpop.f32.mrb[0].mxu0
      %v2073 = vadd.f32 0.0, %v2072
      %v2074 = vpop.f32.mrb[0].mxu0
      %2075 = vmatprep.mubr.bf16.mxu0 0
      %2076 = vmatmul.mubr.bf16.gmra.mrb[0].mxu0 %v1894
      %v2077 = vpop.f32.mrb[0].mxu0
      %v2078 = vadd.f32 0.0, %v2077
      %v2079 = vpop.f32.mrb[0].mxu0
      %v2080 = vpop.f32.mrb[0].mxu0
      %v2081 = vadd.f32 0.0, %v2080
      %v2082 = vpop.f32.mrb[0].mxu0
      %2083 = vmatprep.mubr.bf16.mxu0 0
      %2084 = vmatmul.mubr.bf16.gmra.mrb[0].mxu0 %v1897
      %v2085 = vpop.f32.mrb[0].mxu0
      %v2086 = vadd.f32 0.0, %v2085
      %v2087 = vpop.f32.mrb[0].mxu0
      %v2088 = vpop.f32.mrb[0].mxu0
      %v2089 = vadd.f32 0.0, %v2088
      %v2090 = vpop.f32.mrb[0].mxu0
      %2091 = vmatprep.mubr.bf16.mxu0 0
      %2092 = vmatmul.mubr.bf16.gmra.mrb[0].mxu0 %v1900
      %v2093 = vpop.f32.mrb[0].mxu0
      %v2094 = vadd.f32 0.0, %v2093
      %v2095 = vpop.f32.mrb[0].mxu0
      %v2096 = vpop.f32.mrb[0].mxu0
      %v2097 = vadd.f32 0.0, %v2096
      %v2098 = vpop.f32.mrb[0].mxu0
      %2099 = vmatprep.mubr.bf16.mxu0 0
      %2100 = vmatmul.mubr.bf16.gmra.mrb[0].mxu0 %v1903
      %v2101 = vpop.f32.mrb[0].mxu0
      %v2102 = vadd.f32 0.0, %v2101
      %v2103 = vpop.f32.mrb[0].mxu0
      %v2104 = vpop.f32.mrb[0].mxu0
      %v2105 = vadd.f32 0.0, %v2104
      %v2106 = vpop.f32.mrb[0].mxu0
      %2107 = vmatprep.mubr.bf16.mxu0 0
      %2108 = vmatmul.mubr.bf16.gmra.mrb[0].mxu0 %v1906
      %v2109 = vpop.f32.mrb[0].mxu0
      %v2110 = vadd.f32 0.0, %v2109
      %v2111 = vpop.f32.mrb[0].mxu0
      %v2112 = vpop.f32.mrb[0].mxu0
      %v2113 = vadd.f32 0.0, %v2112
      %v2114 = vpop.f32.mrb[0].mxu0
      %2115 = vmatprep.mubr.bf16.mxu0 0
      %2116 = vmatmul.mubr.bf16.gmra.mrb[0].mxu0 %v1909
      %v2117 = vpop.f32.mrb[0].mxu0
      %v2118 = vadd.f32 0.0, %v2117
      %v2119 = vpop.f32.mrb[0].mxu0
      %v2120 = vpop.f32.mrb[0].mxu0
      %v2121 = vadd.f32 0.0, %v2120
      %v2122 = vpop.f32.mrb[0].mxu0
      %2123 = vmatprep.mubr.bf16.mxu0 0
      %2124 = vmatmul.mubr.bf16.gmra.mrb[0].mxu0 %v1912
      %v2125 = vpop.f32.mrb[0].mxu0
      %v2126 = vadd.f32 0.0, %v2125
      %v2127 = vpop.f32.mrb[0].mxu0
      %v2128 = vpop.f32.mrb[0].mxu0
      %v2129 = vadd.f32 0.0, %v2128
      %v2130 = vpop.f32.mrb[0].mxu0
      %2131 = vmatprep.mubr.bf16.mxu0 0
      %2132 = vmatmul.mubr.bf16.gmra.mrb[0].mxu0 %v1915
      %v2133 = vpop.f32.mrb[0].mxu0
      %v2134 = vadd.f32 0.0, %v2133
      %v2135 = vpop.f32.mrb[0].mxu0
      %v2136 = vpop.f32.mrb[0].mxu0
      %v2137 = vadd.f32 0.0, %v2136
      %v2138 = vpop.f32.mrb[0].mxu0
      %2139 = vmatprep.mubr.bf16.mxu0 0
      %2140 = vmatmul.mubr.bf16.gmra.mrb[0].mxu0 %v1918
      %v2141 = vpop.f32.mrb[0].mxu0
      %v2142 = vadd.f32 0.0, %v2141
      %v2143 = vpop.f32.mrb[0].mxu0
      %v2144 = vpop.f32.mrb[0].mxu0
      %v2145 = vadd.f32 0.0, %v2144
      %v2146 = vpop.f32.mrb[0].mxu0
      %2147 = vdwg.mxu0
      %v2148 = vadd.f32 %v1611, %v1958
      %v2149 = vadd.f32 %v1612, %v1961
      %v2150 = vadd.f32 %v1613, %v1966
      %v2151 = vadd.f32 %v1614, %v1969
      %v2152 = vadd.f32 %v1615, %v1974
      %v2153 = vadd.f32 %v1616, %v1977
      %v2154 = vadd.f32 %v1617, %v1982
      %v2155 = vadd.f32 %v1618, %v1985
      %v2156 = vadd.f32 %v1619, %v1990
      %v2157 = vadd.f32 %v1620, %v1993
      %v2158 = vadd.f32 %v1621, %v1998
      %v2159 = vadd.f32 %v1622, %v2001
      %v2160 = vadd.f32 %v1623, %v2006
      %v2161 = vadd.f32 %v1624, %v2009
      %v2162 = vadd.f32 %v1625, %v2014
      %v2163 = vadd.f32 %v1626, %v2017
      %v2164 = vadd.f32 %v1627, %v2022
      %v2165 = vadd.f32 %v1628, %v2025
      %v2166 = vadd.f32 %v1629, %v2030
      %v2167 = vadd.f32 %v1630, %v2033
      %v2168 = vadd.f32 %v1631, %v2038
      %v2169 = vadd.f32 %v1632, %v2041
      %v2170 = vadd.f32 %v1633, %v2046
      %v2171 = vadd.f32 %v1634, %v2049
      %v2172 = vadd.f32 %v1635, %v2054
      %v2173 = vadd.f32 %v1636, %v2057
      %v2174 = vadd.f32 %v1637, %v2062
      %v2175 = vadd.f32 %v1638, %v2065
      %v2176 = vadd.f32 %v1639, %v2070
      %v2177 = vadd.f32 %v1640, %v2073
      %v2178 = vadd.f32 %v1641, %v2078
      %v2179 = vadd.f32 %v1642, %v2081
      %v2180 = vadd.f32 %v1643, %v2086
      %v2181 = vadd.f32 %v1644, %v2089
      %v2182 = vadd.f32 %v1645, %v2094
      %v2183 = vadd.f32 %v1646, %v2097
      %v2184 = vadd.f32 %v1647, %v2102
      %v2185 = vadd.f32 %v1648, %v2105
      %v2186 = vadd.f32 %v1649, %v2110
      %v2187 = vadd.f32 %v1650, %v2113
      %v2188 = vadd.f32 %v1651, %v2118
      %v2189 = vadd.f32 %v1652, %v2121
      %v2190 = vadd.f32 %v1653, %v2126
      %v2191 = vadd.f32 %v1654, %v2129
      %v2192 = vadd.f32 %v1655, %v2134
      %v2193 = vadd.f32 %v1656, %v2137
      %v2194 = vadd.f32 %v1657, %v2142
      %v2195 = vadd.f32 %v1658, %v2145
      %v2196 = vld [vmem:[%s231 + $0xc] sm:$0xf]
      %v2197 = vld [vmem:[%s231 + $0x10] sm:$0xf]
      %v2198 = vld [vmem:[%s231 + $0x14] sm:$0xf]
      %v2199 = vld [vmem:[%s231 + $0x18] sm:$0xf]
      %v2200 = vld [vmem:[%s231 + $0x1c] sm:$0xf]
      %v2201 = vld [vmem:[%s231 + $0x20] sm:$0xf]
      %v2202 = vld [vmem:[%s231 + $0x24] sm:$0xf]
      %v2203 = vld [vmem:[%s231 + $0x28] sm:$0xf]
      %v2204 = vld [vmem:[%s231 + $0x2c] sm:$0xf]
      %v2205 = vld [vmem:[%s231 + $0x30] sm:$0xf]
      %v2206 = vld [vmem:[%s231 + $0x34] sm:$0xf]
      %v2207 = vld [vmem:[%s231 + $0x38] sm:$0xf]
      %v2208 = vld [vmem:[%s231 + $0x3c] sm:$0xf]
      %v2209 = vld [vmem:[%s231 + $0x40] sm:$0xf]
      %v2210 = vld [vmem:[%s231 + $0x44] sm:$0xf]
      %v2211 = vld [vmem:[%s231 + $0x48] sm:$0xf]
      %v2212 = vld [vmem:[%s231 + $0x4c] sm:$0xf]
      %v2213 = vld [vmem:[%s231 + $0x50] sm:$0xf]
      %v2214 = vld [vmem:[%s231 + $0x54] sm:$0xf]
      %v2215 = vld [vmem:[%s231 + $0x58] sm:$0xf]
      %v2216 = vld [vmem:[%s231 + $0x5c] sm:$0xf]
      %v2217 = vld [vmem:[%s231 + $0x60] sm:$0xf]
      %v2218 = vld [vmem:[%s231 + $0x64] sm:$0xf]
      %v2219 = vld [vmem:[%s231 + $0x68] sm:$0xf]
      %v2220 = vld [vmem:[%s231 + $0x6c] sm:$0xf]
      %v2221 = vld [vmem:[%s231 + $0x70] sm:$0xf]
      %v2222 = vld [vmem:[%s231 + $0x74] sm:$0xf]
      %v2223 = vld [vmem:[%s231 + $0x78] sm:$0xf]
      %v2224 = vld [vmem:[%s231 + $0x7c] sm:$0xf]
      %v2225 = vld [vmem:[%s231 + $0x80] sm:$0xf]
      %v2226 = vld [vmem:[%s231 + $0x84] sm:$0xf]
      %v2227 = vld [vmem:[%s231 + $0x88] sm:$0xf]
      %v2228 = vld [vmem:[%s231 + $0x8c] sm:$0xf]
      %v2229 = vld [vmem:[%s231 + $0x90] sm:$0xf]
      %v2230 = vld [vmem:[%s231 + $0x94] sm:$0xf]
      %v2231 = vld [vmem:[%s231 + $0x98] sm:$0xf]
      %v2232 = vld [vmem:[%s231 + $0x9c] sm:$0xf]
      %v2233 = vld [vmem:[%s231 + $0xa0] sm:$0xf]
      %v2234 = vld [vmem:[%s231 + $0xa4] sm:$0xf]
      %v2235 = vld [vmem:[%s231 + $0xa8] sm:$0xf]
      %v2236 = vld [vmem:[%s231 + $0xac] sm:$0xf]
      %v2237 = vld [vmem:[%s231 + $0xb0] sm:$0xf]
      %v2238 = vld [vmem:[%s231 + $0xb4] sm:$0xf]
      %v2239 = vld [vmem:[%s231 + $0xb8] sm:$0xf]
      %v2240 = vld [vmem:[%s231 + $0xbc] sm:$0xf]
      %v2241 = vld [vmem:[%s231 + $0xc0] sm:$0xf]
      %v2242 = vld [vmem:[%s231 + $0xc4] sm:$0xf]
      %v2243 = vld [vmem:[%s231 + $0xc8] sm:$0xf]
      %v2244 = vld [vmem:[%s231 + $0xcc] sm:$0x1]
      %s2245 = scalar_lea.vmem %s236, 80
      %v2246 = vld [vmem:[%s2245] sm:$0xf]
      %v2247 = vld [vmem:[%s2245 + $0x4] sm:$0xf]
      %v2248 = vld [vmem:[%s2245 + $0x8] sm:$0xf]
      %v2249 = vld [vmem:[%s2245 + $0xc] sm:$0xf]
      %v2250 = vld [vmem:[%s2245 + $0x10] sm:$0x3]
      %v2300 = vunpack.c.l.b16 %v2196
      %v2301 = vunpack.c.l.b16 %v2197
      %v2302 = vunpack.c.l.b16 %v2198
      %v2303 = vunpack.c.l.b16 %v2199
      %v2304 = vunpack.c.l.b16 %v2200
      %v2305 = vunpack.c.l.b16 %v2201
      %v2306 = vunpack.c.l.b16 %v2202
      %v2307 = vunpack.c.l.b16 %v2203
      %v2308 = vunpack.c.l.b16 %v2204
      %v2309 = vunpack.c.l.b16 %v2205
      %v2310 = vunpack.c.l.b16 %v2206
      %v2311 = vunpack.c.l.b16 %v2207
      %v2312 = vunpack.c.l.b16 %v2208
      %v2313 = vunpack.c.l.b16 %v2209
      %v2314 = vunpack.c.l.b16 %v2210
      %v2315 = vunpack.c.l.b16 %v2211
      %v2316 = vunpack.c.l.b16 %v2212
      %v2317 = vunpack.c.l.b16 %v2213
      %v2318 = vunpack.c.l.b16 %v2214
      %v2319 = vunpack.c.l.b16 %v2215
      %v2320 = vunpack.c.l.b16 %v2216
      %v2321 = vunpack.c.l.b16 %v2217
      %v2322 = vunpack.c.l.b16 %v2218
      %v2323 = vunpack.c.l.b16 %v2219
      %v2324 = vunpack.c.l.b16 %v2220
      %v2325 = vunpack.c.l.b16 %v2221
      %v2326 = vunpack.c.l.b16 %v2222
      %v2327 = vunpack.c.l.b16 %v2223
      %v2328 = vunpack.c.l.b16 %v2224
      %v2329 = vunpack.c.l.b16 %v2225
      %v2330 = vunpack.c.l.b16 %v2226
      %v2331 = vunpack.c.l.b16 %v2227
      %v2332 = vunpack.c.l.b16 %v2228
      %v2333 = vunpack.c.l.b16 %v2229
      %v2334 = vunpack.c.l.b16 %v2230
      %v2335 = vunpack.c.l.b16 %v2231
      %v2336 = vunpack.c.l.b16 %v2232
      %v2337 = vunpack.c.l.b16 %v2233
      %v2338 = vunpack.c.l.b16 %v2234
      %v2339 = vunpack.c.l.b16 %v2235
      %v2340 = vunpack.c.l.b16 %v2236
      %v2341 = vunpack.c.l.b16 %v2237
      %v2342 = vunpack.c.l.b16 %v2238
      %v2343 = vunpack.c.l.b16 %v2239
      %v2344 = vunpack.c.l.b16 %v2240
      %v2345 = vunpack.c.l.b16 %v2241
      %v2346 = vunpack.c.l.b16 %v2242
      %v2347 = vunpack.c.l.b16 %v2243
      %v2348 = vunpack.c.l.b16 %v2244
      %v2349 = vpack.c.b16 %v2301, %v2300
      %v2350 = vpack.c.b16 %v2303, %v2302
      %v2351 = vpack.c.b16 %v2305, %v2304
      %v2352 = vpack.c.b16 %v2307, %v2306
      %v2353 = vpack.c.b16 %v2309, %v2308
      %v2354 = vpack.c.b16 %v2311, %v2310
      %v2355 = vpack.c.b16 %v2313, %v2312
      %v2356 = vpack.c.b16 %v2315, %v2314
      %v2357 = vpack.c.b16 %v2317, %v2316
      %v2358 = vpack.c.b16 %v2319, %v2318
      %v2359 = vpack.c.b16 %v2321, %v2320
      %v2360 = vpack.c.b16 %v2323, %v2322
      %v2361 = vpack.c.b16 %v2325, %v2324
      %v2362 = vpack.c.b16 %v2327, %v2326
      %v2363 = vpack.c.b16 %v2329, %v2328
      %v2364 = vpack.c.b16 %v2331, %v2330
      %v2365 = vpack.c.b16 %v2333, %v2332
      %v2366 = vpack.c.b16 %v2335, %v2334
      %v2367 = vpack.c.b16 %v2337, %v2336
      %v2368 = vpack.c.b16 %v2339, %v2338
      %v2369 = vpack.c.b16 %v2341, %v2340
      %v2370 = vpack.c.b16 %v2343, %v2342
      %v2371 = vpack.c.b16 %v2345, %v2344
      %v2372 = vpack.c.b16 %v2347, %v2346
      %v2373 = vpack.c.b16 %v2348, %v2348
      %v2375 = vshrl.u32 %v2349, 16
      %v2377 = vshll.u32 %v2349, 16
      %v2379 = vrot.slane %v2377, 1
      %v2380 = vor.u32 %v2375, %v2379
      %v2382 = vshll.u32 %v2350, 16
      %v2384 = vrot.slane %v2382, 1
      %v2385 = vsel %vm431, %v2380, %v2384
      %v2386 = vshrl.u32 %v2350, 16
      %v2388 = vor.u32 %v2386, %v2384
      %v2390 = vshll.u32 %v2351, 16
      %v2392 = vrot.slane %v2390, 1
      %v2393 = vsel %vm431, %v2388, %v2392
      %v2394 = vshrl.u32 %v2351, 16
      %v2396 = vor.u32 %v2394, %v2392
      %v2398 = vshll.u32 %v2352, 16
      %v2400 = vrot.slane %v2398, 1
      %v2401 = vsel %vm431, %v2396, %v2400
      %v2402 = vshrl.u32 %v2352, 16
      %v2404 = vor.u32 %v2402, %v2400
      %v2406 = vshll.u32 %v2353, 16
      %v2408 = vrot.slane %v2406, 1
      %v2409 = vsel %vm431, %v2404, %v2408
      %v2410 = vshrl.u32 %v2353, 16
      %v2412 = vor.u32 %v2410, %v2408
      %v2414 = vshll.u32 %v2354, 16
      %v2416 = vrot.slane %v2414, 1
      %v2417 = vsel %vm431, %v2412, %v2416
      %v2418 = vshrl.u32 %v2354, 16
      %v2420 = vor.u32 %v2418, %v2416
      %v2422 = vshll.u32 %v2355, 16
      %v2424 = vrot.slane %v2422, 1
      %v2425 = vsel %vm431, %v2420, %v2424
      %v2426 = vshrl.u32 %v2355, 16
      %v2428 = vor.u32 %v2426, %v2424
      %v2430 = vshll.u32 %v2356, 16
      %v2432 = vrot.slane %v2430, 1
      %v2433 = vsel %vm431, %v2428, %v2432
      %v2434 = vshrl.u32 %v2356, 16
      %v2436 = vor.u32 %v2434, %v2432
      %v2438 = vshll.u32 %v2357, 16
      %v2440 = vrot.slane %v2438, 1
      %v2441 = vsel %vm431, %v2436, %v2440
      %v2442 = vshrl.u32 %v2357, 16
      %v2444 = vor.u32 %v2442, %v2440
      %v2446 = vshll.u32 %v2358, 16
      %v2448 = vrot.slane %v2446, 1
      %v2449 = vsel %vm431, %v2444, %v2448
      %v2450 = vshrl.u32 %v2358, 16
      %v2452 = vor.u32 %v2450, %v2448
      %v2454 = vshll.u32 %v2359, 16
      %v2456 = vrot.slane %v2454, 1
      %v2457 = vsel %vm431, %v2452, %v2456
      %v2458 = vshrl.u32 %v2359, 16
      %v2460 = vor.u32 %v2458, %v2456
      %v2462 = vshll.u32 %v2360, 16
      %v2464 = vrot.slane %v2462, 1
      %v2465 = vsel %vm431, %v2460, %v2464
      %v2466 = vshrl.u32 %v2360, 16
      %v2468 = vor.u32 %v2466, %v2464
      %v2470 = vshll.u32 %v2361, 16
      %v2472 = vrot.slane %v2470, 1
      %v2473 = vsel %vm431, %v2468, %v2472
      %v2474 = vshrl.u32 %v2361, 16
      %v2476 = vor.u32 %v2474, %v2472
      %v2478 = vshll.u32 %v2362, 16
      %v2480 = vrot.slane %v2478, 1
      %v2481 = vsel %vm431, %v2476, %v2480
      %v2482 = vshrl.u32 %v2362, 16
      %v2484 = vor.u32 %v2482, %v2480
      %v2486 = vshll.u32 %v2363, 16
      %v2488 = vrot.slane %v2486, 1
      %v2489 = vsel %vm431, %v2484, %v2488
      %v2490 = vshrl.u32 %v2363, 16
      %v2492 = vor.u32 %v2490, %v2488
      %v2494 = vshll.u32 %v2364, 16
      %v2496 = vrot.slane %v2494, 1
      %v2497 = vsel %vm431, %v2492, %v2496
      %v2498 = vshrl.u32 %v2364, 16
      %v2500 = vor.u32 %v2498, %v2496
      %v2502 = vshll.u32 %v2365, 16
      %v2504 = vrot.slane %v2502, 1
      %v2505 = vsel %vm431, %v2500, %v2504
      %v2506 = vshrl.u32 %v2365, 16
      %v2508 = vor.u32 %v2506, %v2504
      %v2510 = vshll.u32 %v2366, 16
      %v2512 = vrot.slane %v2510, 1
      %v2513 = vsel %vm431, %v2508, %v2512
      %v2514 = vshrl.u32 %v2366, 16
      %v2516 = vor.u32 %v2514, %v2512
      %v2518 = vshll.u32 %v2367, 16
      %v2520 = vrot.slane %v2518, 1
      %v2521 = vsel %vm431, %v2516, %v2520
      %v2522 = vshrl.u32 %v2367, 16
      %v2524 = vor.u32 %v2522, %v2520
      %v2526 = vshll.u32 %v2368, 16
      %v2528 = vrot.slane %v2526, 1
      %v2529 = vsel %vm431, %v2524, %v2528
      %v2530 = vshrl.u32 %v2368, 16
      %v2532 = vor.u32 %v2530, %v2528
      %v2534 = vshll.u32 %v2369, 16
      %v2536 = vrot.slane %v2534, 1
      %v2537 = vsel %vm431, %v2532, %v2536
      %v2538 = vshrl.u32 %v2369, 16
      %v2540 = vor.u32 %v2538, %v2536
      %v2542 = vshll.u32 %v2370, 16
      %v2544 = vrot.slane %v2542, 1
      %v2545 = vsel %vm431, %v2540, %v2544
      %v2546 = vshrl.u32 %v2370, 16
      %v2548 = vor.u32 %v2546, %v2544
      %v2550 = vshll.u32 %v2371, 16
      %v2552 = vrot.slane %v2550, 1
      %v2553 = vsel %vm431, %v2548, %v2552
      %v2554 = vshrl.u32 %v2371, 16
      %v2556 = vor.u32 %v2554, %v2552
      %v2558 = vshll.u32 %v2372, 16
      %v2560 = vrot.slane %v2558, 1
      %v2561 = vsel %vm431, %v2556, %v2560
      %v2562 = vshrl.u32 %v2372, 16
      %v2564 = vor.u32 %v2562, %v2560
      %v2566 = vshll.u32 %v2373, 16
      %v2568 = vrot.slane %v2566, 1
      %v2569 = vsel %vm431, %v2564, %v2568
      %v2575 = vunpack.c.l.b16 %v2246
      %v2576 = vunpack.c.l.b16 %v2247
      %v2577 = vunpack.c.l.b16 %v2248
      %v2578 = vunpack.c.l.b16 %v2249
      %v2579 = vunpack.c.l.b16 %v2250
      %v2580 = vpack.c.b16 %v2576, %v2575
      %v2581 = vpack.c.b16 %v2578, %v2577
      %v2582 = vpack.c.b16 %v2579, %v2579
      %v2586 = vsel %vm643, %v2385, 0
      %v2589 = vsel %vm643, %v2393, 0
      %v2592 = vsel %vm643, %v2401, 0
      %v2595 = vsel %vm643, %v2409, 0
      %v2598 = vsel %vm643, %v2417, 0
      %v2601 = vsel %vm643, %v2425, 0
      %v2604 = vsel %vm643, %v2433, 0
      %v2607 = vsel %vm643, %v2441, 0
      %v2610 = vsel %vm643, %v2449, 0
      %v2613 = vsel %vm643, %v2457, 0
      %v2616 = vsel %vm643, %v2465, 0
      %v2619 = vsel %vm643, %v2473, 0
      %v2622 = vsel %vm643, %v2481, 0
      %v2625 = vsel %vm643, %v2489, 0
      %v2628 = vsel %vm643, %v2497, 0
      %v2631 = vsel %vm643, %v2505, 0
      %v2634 = vsel %vm643, %v2513, 0
      %v2637 = vsel %vm643, %v2521, 0
      %v2640 = vsel %vm643, %v2529, 0
      %v2643 = vsel %vm643, %v2537, 0
      %v2646 = vsel %vm643, %v2545, 0
      %v2649 = vsel %vm643, %v2553, 0
      %v2652 = vsel %vm643, %v2561, 0
      %v2655 = vsel %vm643, %v2569, 0
      %v2658 = vsel %vm716, %v2582, 0
      %2660 = vmatprep.subr.bf16.mxu0 0
      %2661 = vmatpush1.bf16.msra.mxu0 %v2580
      %2662 = vmatprep.subr.bf16.mxu0 0
      %2663 = vmatpush1.bf16.msra.mxu0 %v2581
      %2664 = vmatprep.subr.bf16.mxu0 0
      %2665 = vmatpush1.bf16.msra.mxu0 %v2658
      %2666 = vmatprep.subr.bf16.mxu0 0
      %2667 = vmatpush1.bf16.msra.mxu0 0
      %2668 = vmatprep.subr.bf16.mxu0 0
      %2669 = vmatpush1.bf16.msra.mxu0 0
      %2670 = vmatprep.subr.bf16.mxu0 0
      %2671 = vmatpush1.bf16.msra.mxu0 0
      %2672 = vmatprep.subr.bf16.mxu0 0
      %2673 = vmatpush1.bf16.msra.mxu0 0
      %2674 = vmatprep.subr.bf16.mxu0 0
      %2675 = vmatpush1.bf16.msra.mxu0 0
      %2676 = vmatprep.subr.bf16.mxu0 0
      %2677 = vmatpush1.bf16.msra.mxu0 0
      %2678 = vmatprep.subr.bf16.mxu0 0
      %2679 = vmatpush1.bf16.msra.mxu0 0
      %2680 = vmatprep.subr.bf16.mxu0 0
      %2681 = vmatpush1.bf16.msra.mxu0 0
      %2682 = vmatprep.subr.bf16.mxu0 0
      %2683 = vmatpush1.bf16.msra.mxu0 0
      %2684 = vmatprep.subr.bf16.mxu0 0
      %2685 = vmatpush1.bf16.msra.mxu0 0
      %2686 = vmatprep.subr.bf16.mxu0 0
      %2687 = vmatpush1.bf16.msra.mxu0 0
      %2688 = vmatprep.subr.bf16.mxu0 0
      %2689 = vmatpush1.bf16.msra.mxu0 0
      %2690 = vmatprep.subr.bf16.mxu0 0
      %2691 = vmatpush1.bf16.msra.mxu0 0
      %2692 = vmatprep.mubr.bf16.mxu0 0
      %2693 = vmatmul.mubr.bf16.gmra.mrb[0].mxu0 %v2586
      %v2694 = vpop.f32.mrb[0].mxu0
      %v2695 = vadd.f32 0.0, %v2694
      %v2696 = vpop.f32.mrb[0].mxu0
      %v2697 = vpop.f32.mrb[0].mxu0
      %v2698 = vadd.f32 0.0, %v2697
      %v2699 = vpop.f32.mrb[0].mxu0
      %2700 = vmatprep.mubr.bf16.mxu0 0
      %2701 = vmatmul.mubr.bf16.gmra.mrb[0].mxu0 %v2589
      %v2702 = vpop.f32.mrb[0].mxu0
      %v2703 = vadd.f32 0.0, %v2702
      %v2704 = vpop.f32.mrb[0].mxu0
      %v2705 = vpop.f32.mrb[0].mxu0
      %v2706 = vadd.f32 0.0, %v2705
      %v2707 = vpop.f32.mrb[0].mxu0
      %2708 = vmatprep.mubr.bf16.mxu0 0
      %2709 = vmatmul.mubr.bf16.gmra.mrb[0].mxu0 %v2592
      %v2710 = vpop.f32.mrb[0].mxu0
      %v2711 = vadd.f32 0.0, %v2710
      %v2712 = vpop.f32.mrb[0].mxu0
      %v2713 = vpop.f32.mrb[0].mxu0
      %v2714 = vadd.f32 0.0, %v2713
      %v2715 = vpop.f32.mrb[0].mxu0
      %2716 = vmatprep.mubr.bf16.mxu0 0
      %2717 = vmatmul.mubr.bf16.gmra.mrb[0].mxu0 %v2595
      %v2718 = vpop.f32.mrb[0].mxu0
      %v2719 = vadd.f32 0.0, %v2718
      %v2720 = vpop.f32.mrb[0].mxu0
      %v2721 = vpop.f32.mrb[0].mxu0
      %v2722 = vadd.f32 0.0, %v2721
      %v2723 = vpop.f32.mrb[0].mxu0
      %2724 = vmatprep.mubr.bf16.mxu0 0
      %2725 = vmatmul.mubr.bf16.gmra.mrb[0].mxu0 %v2598
      %v2726 = vpop.f32.mrb[0].mxu0
      %v2727 = vadd.f32 0.0, %v2726
      %v2728 = vpop.f32.mrb[0].mxu0
      %v2729 = vpop.f32.mrb[0].mxu0
      %v2730 = vadd.f32 0.0, %v2729
      %v2731 = vpop.f32.mrb[0].mxu0
      %2732 = vmatprep.mubr.bf16.mxu0 0
      %2733 = vmatmul.mubr.bf16.gmra.mrb[0].mxu0 %v2601
      %v2734 = vpop.f32.mrb[0].mxu0
      %v2735 = vadd.f32 0.0, %v2734
      %v2736 = vpop.f32.mrb[0].mxu0
      %v2737 = vpop.f32.mrb[0].mxu0
      %v2738 = vadd.f32 0.0, %v2737
      %v2739 = vpop.f32.mrb[0].mxu0
      %2740 = vmatprep.mubr.bf16.mxu0 0
      %2741 = vmatmul.mubr.bf16.gmra.mrb[0].mxu0 %v2604
      %v2742 = vpop.f32.mrb[0].mxu0
      %v2743 = vadd.f32 0.0, %v2742
      %v2744 = vpop.f32.mrb[0].mxu0
      %v2745 = vpop.f32.mrb[0].mxu0
      %v2746 = vadd.f32 0.0, %v2745
      %v2747 = vpop.f32.mrb[0].mxu0
      %2748 = vmatprep.mubr.bf16.mxu0 0
      %2749 = vmatmul.mubr.bf16.gmra.mrb[0].mxu0 %v2607
      %v2750 = vpop.f32.mrb[0].mxu0
      %v2751 = vadd.f32 0.0, %v2750
      %v2752 = vpop.f32.mrb[0].mxu0
      %v2753 = vpop.f32.mrb[0].mxu0
      %v2754 = vadd.f32 0.0, %v2753
      %v2755 = vpop.f32.mrb[0].mxu0
      %2756 = vmatprep.mubr.bf16.mxu0 0
      %2757 = vmatmul.mubr.bf16.gmra.mrb[0].mxu0 %v2610
      %v2758 = vpop.f32.mrb[0].mxu0
      %v2759 = vadd.f32 0.0, %v2758
      %v2760 = vpop.f32.mrb[0].mxu0
      %v2761 = vpop.f32.mrb[0].mxu0
      %v2762 = vadd.f32 0.0, %v2761
      %v2763 = vpop.f32.mrb[0].mxu0
      %2764 = vmatprep.mubr.bf16.mxu0 0
      %2765 = vmatmul.mubr.bf16.gmra.mrb[0].mxu0 %v2613
      %v2766 = vpop.f32.mrb[0].mxu0
      %v2767 = vadd.f32 0.0, %v2766
      %v2768 = vpop.f32.mrb[0].mxu0
      %v2769 = vpop.f32.mrb[0].mxu0
      %v2770 = vadd.f32 0.0, %v2769
      %v2771 = vpop.f32.mrb[0].mxu0
      %2772 = vmatprep.mubr.bf16.mxu0 0
      %2773 = vmatmul.mubr.bf16.gmra.mrb[0].mxu0 %v2616
      %v2774 = vpop.f32.mrb[0].mxu0
      %v2775 = vadd.f32 0.0, %v2774
      %v2776 = vpop.f32.mrb[0].mxu0
      %v2777 = vpop.f32.mrb[0].mxu0
      %v2778 = vadd.f32 0.0, %v2777
      %v2779 = vpop.f32.mrb[0].mxu0
      %2780 = vmatprep.mubr.bf16.mxu0 0
      %2781 = vmatmul.mubr.bf16.gmra.mrb[0].mxu0 %v2619
      %v2782 = vpop.f32.mrb[0].mxu0
      %v2783 = vadd.f32 0.0, %v2782
      %v2784 = vpop.f32.mrb[0].mxu0
      %v2785 = vpop.f32.mrb[0].mxu0
      %v2786 = vadd.f32 0.0, %v2785
      %v2787 = vpop.f32.mrb[0].mxu0
      %2788 = vmatprep.mubr.bf16.mxu0 0
      %2789 = vmatmul.mubr.bf16.gmra.mrb[0].mxu0 %v2622
      %v2790 = vpop.f32.mrb[0].mxu0
      %v2791 = vadd.f32 0.0, %v2790
      %v2792 = vpop.f32.mrb[0].mxu0
      %v2793 = vpop.f32.mrb[0].mxu0
      %v2794 = vadd.f32 0.0, %v2793
      %v2795 = vpop.f32.mrb[0].mxu0
      %2796 = vmatprep.mubr.bf16.mxu0 0
      %2797 = vmatmul.mubr.bf16.gmra.mrb[0].mxu0 %v2625
      %v2798 = vpop.f32.mrb[0].mxu0
      %v2799 = vadd.f32 0.0, %v2798
      %v2800 = vpop.f32.mrb[0].mxu0
      %v2801 = vpop.f32.mrb[0].mxu0
      %v2802 = vadd.f32 0.0, %v2801
      %v2803 = vpop.f32.mrb[0].mxu0
      %2804 = vmatprep.mubr.bf16.mxu0 0
      %2805 = vmatmul.mubr.bf16.gmra.mrb[0].mxu0 %v2628
      %v2806 = vpop.f32.mrb[0].mxu0
      %v2807 = vadd.f32 0.0, %v2806
      %v2808 = vpop.f32.mrb[0].mxu0
      %v2809 = vpop.f32.mrb[0].mxu0
      %v2810 = vadd.f32 0.0, %v2809
      %v2811 = vpop.f32.mrb[0].mxu0
      %2812 = vmatprep.mubr.bf16.mxu0 0
      %2813 = vmatmul.mubr.bf16.gmra.mrb[0].mxu0 %v2631
      %v2814 = vpop.f32.mrb[0].mxu0
      %v2815 = vadd.f32 0.0, %v2814
      %v2816 = vpop.f32.mrb[0].mxu0
      %v2817 = vpop.f32.mrb[0].mxu0
      %v2818 = vadd.f32 0.0, %v2817
      %v2819 = vpop.f32.mrb[0].mxu0
      %2820 = vmatprep.mubr.bf16.mxu0 0
      %2821 = vmatmul.mubr.bf16.gmra.mrb[0].mxu0 %v2634
      %v2822 = vpop.f32.mrb[0].mxu0
      %v2823 = vadd.f32 0.0, %v2822
      %v2824 = vpop.f32.mrb[0].mxu0
      %v2825 = vpop.f32.mrb[0].mxu0
      %v2826 = vadd.f32 0.0, %v2825
      %v2827 = vpop.f32.mrb[0].mxu0
      %2828 = vmatprep.mubr.bf16.mxu0 0
      %2829 = vmatmul.mubr.bf16.gmra.mrb[0].mxu0 %v2637
      %v2830 = vpop.f32.mrb[0].mxu0
      %v2831 = vadd.f32 0.0, %v2830
      %v2832 = vpop.f32.mrb[0].mxu0
      %v2833 = vpop.f32.mrb[0].mxu0
      %v2834 = vadd.f32 0.0, %v2833
      %v2835 = vpop.f32.mrb[0].mxu0
      %2836 = vmatprep.mubr.bf16.mxu0 0
      %2837 = vmatmul.mubr.bf16.gmra.mrb[0].mxu0 %v2640
      %v2838 = vpop.f32.mrb[0].mxu0
      %v2839 = vadd.f32 0.0, %v2838
      %v2840 = vpop.f32.mrb[0].mxu0
      %v2841 = vpop.f32.mrb[0].mxu0
      %v2842 = vadd.f32 0.0, %v2841
      %v2843 = vpop.f32.mrb[0].mxu0
      %2844 = vmatprep.mubr.bf16.mxu0 0
      %2845 = vmatmul.mubr.bf16.gmra.mrb[0].mxu0 %v2643
      %v2846 = vpop.f32.mrb[0].mxu0
      %v2847 = vadd.f32 0.0, %v2846
      %v2848 = vpop.f32.mrb[0].mxu0
      %v2849 = vpop.f32.mrb[0].mxu0
      %v2850 = vadd.f32 0.0, %v2849
      %v2851 = vpop.f32.mrb[0].mxu0
      %2852 = vmatprep.mubr.bf16.mxu0 0
      %2853 = vmatmul.mubr.bf16.gmra.mrb[0].mxu0 %v2646
      %v2854 = vpop.f32.mrb[0].mxu0
      %v2855 = vadd.f32 0.0, %v2854
      %v2856 = vpop.f32.mrb[0].mxu0
      %v2857 = vpop.f32.mrb[0].mxu0
      %v2858 = vadd.f32 0.0, %v2857
      %v2859 = vpop.f32.mrb[0].mxu0
      %2860 = vmatprep.mubr.bf16.mxu0 0
      %2861 = vmatmul.mubr.bf16.gmra.mrb[0].mxu0 %v2649
      %v2862 = vpop.f32.mrb[0].mxu0
      %v2863 = vadd.f32 0.0, %v2862
      %v2864 = vpop.f32.mrb[0].mxu0
      %v2865 = vpop.f32.mrb[0].mxu0
      %v2866 = vadd.f32 0.0, %v2865
      %v2867 = vpop.f32.mrb[0].mxu0
      %2868 = vmatprep.mubr.bf16.mxu0 0
      %2869 = vmatmul.mubr.bf16.gmra.mrb[0].mxu0 %v2652
      %v2870 = vpop.f32.mrb[0].mxu0
      %v2871 = vadd.f32 0.0, %v2870
      %v2872 = vpop.f32.mrb[0].mxu0
      %v2873 = vpop.f32.mrb[0].mxu0
      %v2874 = vadd.f32 0.0, %v2873
      %v2875 = vpop.f32.mrb[0].mxu0
      %2876 = vmatprep.mubr.bf16.mxu0 0
      %2877 = vmatmul.mubr.bf16.gmra.mrb[0].mxu0 %v2655
      %v2878 = vpop.f32.mrb[0].mxu0
      %v2879 = vadd.f32 0.0, %v2878
      %v2880 = vpop.f32.mrb[0].mxu0
      %v2881 = vpop.f32.mrb[0].mxu0
      %v2882 = vadd.f32 0.0, %v2881
      %v2883 = vpop.f32.mrb[0].mxu0
      %2884 = vdwg.mxu0
      %v2885 = vadd.f32 %v2148, %v2695
      %v2886 = vadd.f32 %v2149, %v2698
      %v2887 = vadd.f32 %v2150, %v2703
      %v2888 = vadd.f32 %v2151, %v2706
      %v2889 = vadd.f32 %v2152, %v2711
      %v2890 = vadd.f32 %v2153, %v2714
      %v2891 = vadd.f32 %v2154, %v2719
      %v2892 = vadd.f32 %v2155, %v2722
      %v2893 = vadd.f32 %v2156, %v2727
      %v2894 = vadd.f32 %v2157, %v2730
      %v2895 = vadd.f32 %v2158, %v2735
      %v2896 = vadd.f32 %v2159, %v2738
      %v2897 = vadd.f32 %v2160, %v2743
      %v2898 = vadd.f32 %v2161, %v2746
      %v2899 = vadd.f32 %v2162, %v2751
      %v2900 = vadd.f32 %v2163, %v2754
      %v2901 = vadd.f32 %v2164, %v2759
      %v2902 = vadd.f32 %v2165, %v2762
      %v2903 = vadd.f32 %v2166, %v2767
      %v2904 = vadd.f32 %v2167, %v2770
      %v2905 = vadd.f32 %v2168, %v2775
      %v2906 = vadd.f32 %v2169, %v2778
      %v2907 = vadd.f32 %v2170, %v2783
      %v2908 = vadd.f32 %v2171, %v2786
      %v2909 = vadd.f32 %v2172, %v2791
      %v2910 = vadd.f32 %v2173, %v2794
      %v2911 = vadd.f32 %v2174, %v2799
      %v2912 = vadd.f32 %v2175, %v2802
      %v2913 = vadd.f32 %v2176, %v2807
      %v2914 = vadd.f32 %v2177, %v2810
      %v2915 = vadd.f32 %v2178, %v2815
      %v2916 = vadd.f32 %v2179, %v2818
      %v2917 = vadd.f32 %v2180, %v2823
      %v2918 = vadd.f32 %v2181, %v2826
      %v2919 = vadd.f32 %v2182, %v2831
      %v2920 = vadd.f32 %v2183, %v2834
      %v2921 = vadd.f32 %v2184, %v2839
      %v2922 = vadd.f32 %v2185, %v2842
      %v2923 = vadd.f32 %v2186, %v2847
      %v2924 = vadd.f32 %v2187, %v2850
      %v2925 = vadd.f32 %v2188, %v2855
      %v2926 = vadd.f32 %v2189, %v2858
      %v2927 = vadd.f32 %v2190, %v2863
      %v2928 = vadd.f32 %v2191, %v2866
      %v2929 = vadd.f32 %v2192, %v2871
      %v2930 = vadd.f32 %v2193, %v2874
      %v2931 = vadd.f32 %v2194, %v2879
      %v2932 = vadd.f32 %v2195, %v2882
      %v2933 = vld [vmem:[%s231 + $0xc] sm:$0xe]
      %s2934 = scalar_lea.vmem %s236, 100
      %v2935 = vld [vmem:[%s2934] sm:$0xf]
      %v2936 = vld [vmem:[%s2934 + $0x4] sm:$0xf]
      %v2937 = vld [vmem:[%s2934 + $0x8] sm:$0xf]
      %v2938 = vld [vmem:[%s2934 + $0xc] sm:$0xf]
      %v2939 = vld [vmem:[%s2934 + $0x10] sm:$0x3]
      %v2941 = vunpack.c.l.b16 %v2933
      %v2942 = vpack.c.b16 %v2301, %v2941
      %v2943 = vrot.slane %v2942, 1
      %v2944 = vrot.slane %v2350, 1
      %v2945 = vsel %vm1246, %v2943, %v2944
      %v2946 = vrot.slane %v2351, 1
      %v2947 = vsel %vm1246, %v2944, %v2946
      %v2948 = vrot.slane %v2352, 1
      %v2949 = vsel %vm1246, %v2946, %v2948
      %v2950 = vrot.slane %v2353, 1
      %v2951 = vsel %vm1246, %v2948, %v2950
      %v2952 = vrot.slane %v2354, 1
      %v2953 = vsel %vm1246, %v2950, %v2952
      %v2954 = vrot.slane %v2355, 1
      %v2955 = vsel %vm1246, %v2952, %v2954
      %v2956 = vrot.slane %v2356, 1
      %v2957 = vsel %vm1246, %v2954, %v2956
      %v2958 = vrot.slane %v2357, 1
      %v2959 = vsel %vm1246, %v2956, %v2958
      %v2960 = vrot.slane %v2358, 1
      %v2961 = vsel %vm1246, %v2958, %v2960
      %v2962 = vrot.slane %v2359, 1
      %v2963 = vsel %vm1246, %v2960, %v2962
      %v2964 = vrot.slane %v2360, 1
      %v2965 = vsel %vm1246, %v2962, %v2964
      %v2966 = vrot.slane %v2361, 1
      %v2967 = vsel %vm1246, %v2964, %v2966
      %v2968 = vrot.slane %v2362, 1
      %v2969 = vsel %vm1246, %v2966, %v2968
      %v2970 = vrot.slane %v2363, 1
      %v2971 = vsel %vm1246, %v2968, %v2970
      %v2972 = vrot.slane %v2364, 1
      %v2973 = vsel %vm1246, %v2970, %v2972
      %v2974 = vrot.slane %v2365, 1
      %v2975 = vsel %vm1246, %v2972, %v2974
      %v2976 = vrot.slane %v2366, 1
      %v2977 = vsel %vm1246, %v2974, %v2976
      %v2978 = vrot.slane %v2367, 1
      %v2979 = vsel %vm1246, %v2976, %v2978
      %v2980 = vrot.slane %v2368, 1
      %v2981 = vsel %vm1246, %v2978, %v2980
      %v2982 = vrot.slane %v2369, 1
      %v2983 = vsel %vm1246, %v2980, %v2982
      %v2984 = vrot.slane %v2370, 1
      %v2985 = vsel %vm1246, %v2982, %v2984
      %v2986 = vrot.slane %v2371, 1
      %v2987 = vsel %vm1246, %v2984, %v2986
      %v2988 = vrot.slane %v2372, 1
      %v2989 = vsel %vm1246, %v2986, %v2988
      %v2990 = vrot.slane %v2373, 1
      %v2991 = vsel %vm1246, %v2988, %v2990
      %v2997 = vunpack.c.l.b16 %v2935
      %v2998 = vunpack.c.l.b16 %v2936
      %v2999 = vunpack.c.l.b16 %v2937
      %v3000 = vunpack.c.l.b16 %v2938
      %v3001 = vunpack.c.l.b16 %v2939
      %v3002 = vpack.c.b16 %v2998, %v2997
      %v3003 = vpack.c.b16 %v3000, %v2999
      %v3004 = vpack.c.b16 %v3001, %v3001
      %v3008 = vsel %vm643, %v2945, 0
      %v3011 = vsel %vm643, %v2947, 0
      %v3014 = vsel %vm643, %v2949, 0
      %v3017 = vsel %vm643, %v2951, 0
      %v3020 = vsel %vm643, %v2953, 0
      %v3023 = vsel %vm643, %v2955, 0
      %v3026 = vsel %vm643, %v2957, 0
      %v3029 = vsel %vm643, %v2959, 0
      %v3032 = vsel %vm643, %v2961, 0
      %v3035 = vsel %vm643, %v2963, 0
      %v3038 = vsel %vm643, %v2965, 0
      %v3041 = vsel %vm643, %v2967, 0
      %v3044 = vsel %vm643, %v2969, 0
      %v3047 = vsel %vm643, %v2971, 0
      %v3050 = vsel %vm643, %v2973, 0
      %v3053 = vsel %vm643, %v2975, 0
      %v3056 = vsel %vm643, %v2977, 0
      %v3059 = vsel %vm643, %v2979, 0
      %v3062 = vsel %vm643, %v2981, 0
      %v3065 = vsel %vm643, %v2983, 0
      %v3068 = vsel %vm643, %v2985, 0
      %v3071 = vsel %vm643, %v2987, 0
      %v3074 = vsel %vm643, %v2989, 0
      %v3077 = vsel %vm643, %v2991, 0
      %v3080 = vsel %vm716, %v3004, 0
      %3082 = vmatprep.subr.bf16.mxu0 0
      %3083 = vmatpush1.bf16.msra.mxu0 %v3002
      %3084 = vmatprep.subr.bf16.mxu0 0
      %3085 = vmatpush1.bf16.msra.mxu0 %v3003
      %3086 = vmatprep.subr.bf16.mxu0 0
      %3087 = vmatpush1.bf16.msra.mxu0 %v3080
      %3088 = vmatprep.subr.bf16.mxu0 0
      %3089 = vmatpush1.bf16.msra.mxu0 0
      %3090 = vmatprep.subr.bf16.mxu0 0
      %3091 = vmatpush1.bf16.msra.mxu0 0
      %3092 = vmatprep.subr.bf16.mxu0 0
      %3093 = vmatpush1.bf16.msra.mxu0 0
      %3094 = vmatprep.subr.bf16.mxu0 0
      %3095 = vmatpush1.bf16.msra.mxu0 0
      %3096 = vmatprep.subr.bf16.mxu0 0
      %3097 = vmatpush1.bf16.msra.mxu0 0
      %3098 = vmatprep.subr.bf16.mxu0 0
      %3099 = vmatpush1.bf16.msra.mxu0 0
      %3100 = vmatprep.subr.bf16.mxu0 0
      %3101 = vmatpush1.bf16.msra.mxu0 0
      %3102 = vmatprep.subr.bf16.mxu0 0
      %3103 = vmatpush1.bf16.msra.mxu0 0
      %3104 = vmatprep.subr.bf16.mxu0 0
      %3105 = vmatpush1.bf16.msra.mxu0 0
      %3106 = vmatprep.subr.bf16.mxu0 0
      %3107 = vmatpush1.bf16.msra.mxu0 0
      %3108 = vmatprep.subr.bf16.mxu0 0
      %3109 = vmatpush1.bf16.msra.mxu0 0
      %3110 = vmatprep.subr.bf16.mxu0 0
      %3111 = vmatpush1.bf16.msra.mxu0 0
      %3112 = vmatprep.subr.bf16.mxu0 0
      %3113 = vmatpush1.bf16.msra.mxu0 0
      %3114 = vmatprep.mubr.bf16.mxu0 0
      %3115 = vmatmul.mubr.bf16.gmra.mrb[0].mxu0 %v3008
      %v3116 = vpop.f32.mrb[0].mxu0
      %v3117 = vadd.f32 0.0, %v3116
      %v3118 = vpop.f32.mrb[0].mxu0
      %v3119 = vpop.f32.mrb[0].mxu0
      %v3120 = vadd.f32 0.0, %v3119
      %v3121 = vpop.f32.mrb[0].mxu0
      %3122 = vmatprep.mubr.bf16.mxu0 0
      %3123 = vmatmul.mubr.bf16.gmra.mrb[0].mxu0 %v3011
      %v3124 = vpop.f32.mrb[0].mxu0
      %v3125 = vadd.f32 0.0, %v3124
      %v3126 = vpop.f32.mrb[0].mxu0
      %v3127 = vpop.f32.mrb[0].mxu0
      %v3128 = vadd.f32 0.0, %v3127
      %v3129 = vpop.f32.mrb[0].mxu0
      %3130 = vmatprep.mubr.bf16.mxu0 0
      %3131 = vmatmul.mubr.bf16.gmra.mrb[0].mxu0 %v3014
      %v3132 = vpop.f32.mrb[0].mxu0
      %v3133 = vadd.f32 0.0, %v3132
      %v3134 = vpop.f32.mrb[0].mxu0
      %v3135 = vpop.f32.mrb[0].mxu0
      %v3136 = vadd.f32 0.0, %v3135
      %v3137 = vpop.f32.mrb[0].mxu0
      %3138 = vmatprep.mubr.bf16.mxu0 0
      %3139 = vmatmul.mubr.bf16.gmra.mrb[0].mxu0 %v3017
      %v3140 = vpop.f32.mrb[0].mxu0
      %v3141 = vadd.f32 0.0, %v3140
      %v3142 = vpop.f32.mrb[0].mxu0
      %v3143 = vpop.f32.mrb[0].mxu0
      %v3144 = vadd.f32 0.0, %v3143
      %v3145 = vpop.f32.mrb[0].mxu0
      %3146 = vmatprep.mubr.bf16.mxu0 0
      %3147 = vmatmul.mubr.bf16.gmra.mrb[0].mxu0 %v3020
      %v3148 = vpop.f32.mrb[0].mxu0
      %v3149 = vadd.f32 0.0, %v3148
      %v3150 = vpop.f32.mrb[0].mxu0
      %v3151 = vpop.f32.mrb[0].mxu0
      %v3152 = vadd.f32 0.0, %v3151
      %v3153 = vpop.f32.mrb[0].mxu0
      %3154 = vmatprep.mubr.bf16.mxu0 0
      %3155 = vmatmul.mubr.bf16.gmra.mrb[0].mxu0 %v3023
      %v3156 = vpop.f32.mrb[0].mxu0
      %v3157 = vadd.f32 0.0, %v3156
      %v3158 = vpop.f32.mrb[0].mxu0
      %v3159 = vpop.f32.mrb[0].mxu0
      %v3160 = vadd.f32 0.0, %v3159
      %v3161 = vpop.f32.mrb[0].mxu0
      %3162 = vmatprep.mubr.bf16.mxu0 0
      %3163 = vmatmul.mubr.bf16.gmra.mrb[0].mxu0 %v3026
      %v3164 = vpop.f32.mrb[0].mxu0
      %v3165 = vadd.f32 0.0, %v3164
      %v3166 = vpop.f32.mrb[0].mxu0
      %v3167 = vpop.f32.mrb[0].mxu0
      %v3168 = vadd.f32 0.0, %v3167
      %v3169 = vpop.f32.mrb[0].mxu0
      %3170 = vmatprep.mubr.bf16.mxu0 0
      %3171 = vmatmul.mubr.bf16.gmra.mrb[0].mxu0 %v3029
      %v3172 = vpop.f32.mrb[0].mxu0
      %v3173 = vadd.f32 0.0, %v3172
      %v3174 = vpop.f32.mrb[0].mxu0
      %v3175 = vpop.f32.mrb[0].mxu0
      %v3176 = vadd.f32 0.0, %v3175
      %v3177 = vpop.f32.mrb[0].mxu0
      %3178 = vmatprep.mubr.bf16.mxu0 0
      %3179 = vmatmul.mubr.bf16.gmra.mrb[0].mxu0 %v3032
      %v3180 = vpop.f32.mrb[0].mxu0
      %v3181 = vadd.f32 0.0, %v3180
      %v3182 = vpop.f32.mrb[0].mxu0
      %v3183 = vpop.f32.mrb[0].mxu0
      %v3184 = vadd.f32 0.0, %v3183
      %v3185 = vpop.f32.mrb[0].mxu0
      %3186 = vmatprep.mubr.bf16.mxu0 0
      %3187 = vmatmul.mubr.bf16.gmra.mrb[0].mxu0 %v3035
      %v3188 = vpop.f32.mrb[0].mxu0
      %v3189 = vadd.f32 0.0, %v3188
      %v3190 = vpop.f32.mrb[0].mxu0
      %v3191 = vpop.f32.mrb[0].mxu0
      %v3192 = vadd.f32 0.0, %v3191
      %v3193 = vpop.f32.mrb[0].mxu0
      %3194 = vmatprep.mubr.bf16.mxu0 0
      %3195 = vmatmul.mubr.bf16.gmra.mrb[0].mxu0 %v3038
      %v3196 = vpop.f32.mrb[0].mxu0
      %v3197 = vadd.f32 0.0, %v3196
      %v3198 = vpop.f32.mrb[0].mxu0
      %v3199 = vpop.f32.mrb[0].mxu0
      %v3200 = vadd.f32 0.0, %v3199
      %v3201 = vpop.f32.mrb[0].mxu0
      %3202 = vmatprep.mubr.bf16.mxu0 0
      %3203 = vmatmul.mubr.bf16.gmra.mrb[0].mxu0 %v3041
      %v3204 = vpop.f32.mrb[0].mxu0
      %v3205 = vadd.f32 0.0, %v3204
      %v3206 = vpop.f32.mrb[0].mxu0
      %v3207 = vpop.f32.mrb[0].mxu0
      %v3208 = vadd.f32 0.0, %v3207
      %v3209 = vpop.f32.mrb[0].mxu0
      %3210 = vmatprep.mubr.bf16.mxu0 0
      %3211 = vmatmul.mubr.bf16.gmra.mrb[0].mxu0 %v3044
      %v3212 = vpop.f32.mrb[0].mxu0
      %v3213 = vadd.f32 0.0, %v3212
      %v3214 = vpop.f32.mrb[0].mxu0
      %v3215 = vpop.f32.mrb[0].mxu0
      %v3216 = vadd.f32 0.0, %v3215
      %v3217 = vpop.f32.mrb[0].mxu0
      %3218 = vmatprep.mubr.bf16.mxu0 0
      %3219 = vmatmul.mubr.bf16.gmra.mrb[0].mxu0 %v3047
      %v3220 = vpop.f32.mrb[0].mxu0
      %v3221 = vadd.f32 0.0, %v3220
      %v3222 = vpop.f32.mrb[0].mxu0
      %v3223 = vpop.f32.mrb[0].mxu0
      %v3224 = vadd.f32 0.0, %v3223
      %v3225 = vpop.f32.mrb[0].mxu0
      %3226 = vmatprep.mubr.bf16.mxu0 0
      %3227 = vmatmul.mubr.bf16.gmra.mrb[0].mxu0 %v3050
      %v3228 = vpop.f32.mrb[0].mxu0
      %v3229 = vadd.f32 0.0, %v3228
      %v3230 = vpop.f32.mrb[0].mxu0
      %v3231 = vpop.f32.mrb[0].mxu0
      %v3232 = vadd.f32 0.0, %v3231
      %v3233 = vpop.f32.mrb[0].mxu0
      %3234 = vmatprep.mubr.bf16.mxu0 0
      %3235 = vmatmul.mubr.bf16.gmra.mrb[0].mxu0 %v3053
      %v3236 = vpop.f32.mrb[0].mxu0
      %v3237 = vadd.f32 0.0, %v3236
      %v3238 = vpop.f32.mrb[0].mxu0
      %v3239 = vpop.f32.mrb[0].mxu0
      %v3240 = vadd.f32 0.0, %v3239
      %v3241 = vpop.f32.mrb[0].mxu0
      %3242 = vmatprep.mubr.bf16.mxu0 0
      %3243 = vmatmul.mubr.bf16.gmra.mrb[0].mxu0 %v3056
      %v3244 = vpop.f32.mrb[0].mxu0
      %v3245 = vadd.f32 0.0, %v3244
      %v3246 = vpop.f32.mrb[0].mxu0
      %v3247 = vpop.f32.mrb[0].mxu0
      %v3248 = vadd.f32 0.0, %v3247
      %v3249 = vpop.f32.mrb[0].mxu0
      %3250 = vmatprep.mubr.bf16.mxu0 0
      %3251 = vmatmul.mubr.bf16.gmra.mrb[0].mxu0 %v3059
      %v3252 = vpop.f32.mrb[0].mxu0
      %v3253 = vadd.f32 0.0, %v3252
      %v3254 = vpop.f32.mrb[0].mxu0
      %v3255 = vpop.f32.mrb[0].mxu0
      %v3256 = vadd.f32 0.0, %v3255
      %v3257 = vpop.f32.mrb[0].mxu0
      %3258 = vmatprep.mubr.bf16.mxu0 0
      %3259 = vmatmul.mubr.bf16.gmra.mrb[0].mxu0 %v3062
      %v3260 = vpop.f32.mrb[0].mxu0
      %v3261 = vadd.f32 0.0, %v3260
      %v3262 = vpop.f32.mrb[0].mxu0
      %v3263 = vpop.f32.mrb[0].mxu0
      %v3264 = vadd.f32 0.0, %v3263
      %v3265 = vpop.f32.mrb[0].mxu0
      %3266 = vmatprep.mubr.bf16.mxu0 0
      %3267 = vmatmul.mubr.bf16.gmra.mrb[0].mxu0 %v3065
      %v3268 = vpop.f32.mrb[0].mxu0
      %v3269 = vadd.f32 0.0, %v3268
      %v3270 = vpop.f32.mrb[0].mxu0
      %v3271 = vpop.f32.mrb[0].mxu0
      %v3272 = vadd.f32 0.0, %v3271
      %v3273 = vpop.f32.mrb[0].mxu0
      %3274 = vmatprep.mubr.bf16.mxu0 0
      %3275 = vmatmul.mubr.bf16.gmra.mrb[0].mxu0 %v3068
      %v3276 = vpop.f32.mrb[0].mxu0
      %v3277 = vadd.f32 0.0, %v3276
      %v3278 = vpop.f32.mrb[0].mxu0
      %v3279 = vpop.f32.mrb[0].mxu0
      %v3280 = vadd.f32 0.0, %v3279
      %v3281 = vpop.f32.mrb[0].mxu0
      %3282 = vmatprep.mubr.bf16.mxu0 0
      %3283 = vmatmul.mubr.bf16.gmra.mrb[0].mxu0 %v3071
      %v3284 = vpop.f32.mrb[0].mxu0
      %v3285 = vadd.f32 0.0, %v3284
      %v3286 = vpop.f32.mrb[0].mxu0
      %v3287 = vpop.f32.mrb[0].mxu0
      %v3288 = vadd.f32 0.0, %v3287
      %v3289 = vpop.f32.mrb[0].mxu0
      %3290 = vmatprep.mubr.bf16.mxu0 0
      %3291 = vmatmul.mubr.bf16.gmra.mrb[0].mxu0 %v3074
      %v3292 = vpop.f32.mrb[0].mxu0
      %v3293 = vadd.f32 0.0, %v3292
      %v3294 = vpop.f32.mrb[0].mxu0
      %v3295 = vpop.f32.mrb[0].mxu0
      %v3296 = vadd.f32 0.0, %v3295
      %v3297 = vpop.f32.mrb[0].mxu0
      %3298 = vmatprep.mubr.bf16.mxu0 0
      %3299 = vmatmul.mubr.bf16.gmra.mrb[0].mxu0 %v3077
      %v3300 = vpop.f32.mrb[0].mxu0
      %v3301 = vadd.f32 0.0, %v3300
      %v3302 = vpop.f32.mrb[0].mxu0
      %v3303 = vpop.f32.mrb[0].mxu0
      %v3304 = vadd.f32 0.0, %v3303
      %v3305 = vpop.f32.mrb[0].mxu0
      %3306 = vdwg.mxu0
      %v3307 = vadd.f32 %v2885, %v3117
      %v3308 = vadd.f32 %v2886, %v3120
      %v3309 = vadd.f32 %v2887, %v3125
      %v3310 = vadd.f32 %v2888, %v3128
      %v3311 = vadd.f32 %v2889, %v3133
      %v3312 = vadd.f32 %v2890, %v3136
      %v3313 = vadd.f32 %v2891, %v3141
      %v3314 = vadd.f32 %v2892, %v3144
      %v3315 = vadd.f32 %v2893, %v3149
      %v3316 = vadd.f32 %v2894, %v3152
      %v3317 = vadd.f32 %v2895, %v3157
      %v3318 = vadd.f32 %v2896, %v3160
      %v3319 = vadd.f32 %v2897, %v3165
      %v3320 = vadd.f32 %v2898, %v3168
      %v3321 = vadd.f32 %v2899, %v3173
      %v3322 = vadd.f32 %v2900, %v3176
      %v3323 = vadd.f32 %v2901, %v3181
      %v3324 = vadd.f32 %v2902, %v3184
      %v3325 = vadd.f32 %v2903, %v3189
      %v3326 = vadd.f32 %v2904, %v3192
      %v3327 = vadd.f32 %v2905, %v3197
      %v3328 = vadd.f32 %v2906, %v3200
      %v3329 = vadd.f32 %v2907, %v3205
      %v3330 = vadd.f32 %v2908, %v3208
      %v3331 = vadd.f32 %v2909, %v3213
      %v3332 = vadd.f32 %v2910, %v3216
      %v3333 = vadd.f32 %v2911, %v3221
      %v3334 = vadd.f32 %v2912, %v3224
      %v3335 = vadd.f32 %v2913, %v3229
      %v3336 = vadd.f32 %v2914, %v3232
      %v3337 = vadd.f32 %v2915, %v3237
      %v3338 = vadd.f32 %v2916, %v3240
      %v3339 = vadd.f32 %v2917, %v3245
      %v3340 = vadd.f32 %v2918, %v3248
      %v3341 = vadd.f32 %v2919, %v3253
      %v3342 = vadd.f32 %v2920, %v3256
      %v3343 = vadd.f32 %v2921, %v3261
      %v3344 = vadd.f32 %v2922, %v3264
      %v3345 = vadd.f32 %v2923, %v3269
      %v3346 = vadd.f32 %v2924, %v3272
      %v3347 = vadd.f32 %v2925, %v3277
      %v3348 = vadd.f32 %v2926, %v3280
      %v3349 = vadd.f32 %v2927, %v3285
      %v3350 = vadd.f32 %v2928, %v3288
      %v3351 = vadd.f32 %v2929, %v3293
      %v3352 = vadd.f32 %v2930, %v3296
      %v3353 = vadd.f32 %v2931, %v3301
      %v3354 = vadd.f32 %v2932, %v3304
      %v3355 = vld [vmem:[%s231 + $0x18] sm:$0xf]
      %v3356 = vld [vmem:[%s231 + $0x1c] sm:$0xf]
      %v3357 = vld [vmem:[%s231 + $0x20] sm:$0xf]
      %v3358 = vld [vmem:[%s231 + $0x24] sm:$0xf]
      %v3359 = vld [vmem:[%s231 + $0x28] sm:$0xf]
      %v3360 = vld [vmem:[%s231 + $0x2c] sm:$0xf]
      %v3361 = vld [vmem:[%s231 + $0x30] sm:$0xf]
      %v3362 = vld [vmem:[%s231 + $0x34] sm:$0xf]
      %v3363 = vld [vmem:[%s231 + $0x38] sm:$0xf]
      %v3364 = vld [vmem:[%s231 + $0x3c] sm:$0xf]
      %v3365 = vld [vmem:[%s231 + $0x40] sm:$0xf]
      %v3366 = vld [vmem:[%s231 + $0x44] sm:$0xf]
      %v3367 = vld [vmem:[%s231 + $0x48] sm:$0xf]
      %v3368 = vld [vmem:[%s231 + $0x4c] sm:$0xf]
      %v3369 = vld [vmem:[%s231 + $0x50] sm:$0xf]
      %v3370 = vld [vmem:[%s231 + $0x54] sm:$0xf]
      %v3371 = vld [vmem:[%s231 + $0x58] sm:$0xf]
      %v3372 = vld [vmem:[%s231 + $0x5c] sm:$0xf]
      %v3373 = vld [vmem:[%s231 + $0x60] sm:$0xf]
      %v3374 = vld [vmem:[%s231 + $0x64] sm:$0xf]
      %v3375 = vld [vmem:[%s231 + $0x68] sm:$0xf]
      %v3376 = vld [vmem:[%s231 + $0x6c] sm:$0xf]
      %v3377 = vld [vmem:[%s231 + $0x70] sm:$0xf]
      %v3378 = vld [vmem:[%s231 + $0x74] sm:$0xf]
      %v3379 = vld [vmem:[%s231 + $0x78] sm:$0xf]
      %v3380 = vld [vmem:[%s231 + $0x7c] sm:$0xf]
      %v3381 = vld [vmem:[%s231 + $0x80] sm:$0xf]
      %v3382 = vld [vmem:[%s231 + $0x84] sm:$0xf]
      %v3383 = vld [vmem:[%s231 + $0x88] sm:$0xf]
      %v3384 = vld [vmem:[%s231 + $0x8c] sm:$0xf]
      %v3385 = vld [vmem:[%s231 + $0x90] sm:$0xf]
      %v3386 = vld [vmem:[%s231 + $0x94] sm:$0xf]
      %v3387 = vld [vmem:[%s231 + $0x98] sm:$0xf]
      %v3388 = vld [vmem:[%s231 + $0x9c] sm:$0xf]
      %v3389 = vld [vmem:[%s231 + $0xa0] sm:$0xf]
      %v3390 = vld [vmem:[%s231 + $0xa4] sm:$0xf]
      %v3391 = vld [vmem:[%s231 + $0xa8] sm:$0xf]
      %v3392 = vld [vmem:[%s231 + $0xac] sm:$0xf]
      %v3393 = vld [vmem:[%s231 + $0xb0] sm:$0xf]
      %v3394 = vld [vmem:[%s231 + $0xb4] sm:$0xf]
      %v3395 = vld [vmem:[%s231 + $0xb8] sm:$0xf]
      %v3396 = vld [vmem:[%s231 + $0xbc] sm:$0xf]
      %v3397 = vld [vmem:[%s231 + $0xc0] sm:$0xf]
      %v3398 = vld [vmem:[%s231 + $0xc4] sm:$0xf]
      %v3399 = vld [vmem:[%s231 + $0xc8] sm:$0xf]
      %v3400 = vld [vmem:[%s231 + $0xcc] sm:$0xf]
      %v3401 = vld [vmem:[%s231 + $0xd0] sm:$0xf]
      %v3402 = vld [vmem:[%s231 + $0xd4] sm:$0xf]
      %s3403 = scalar_lea.vmem %s236, 120
      %v3404 = vld [vmem:[%s3403] sm:$0xf]
      %v3405 = vld [vmem:[%s3403 + $0x4] sm:$0xf]
      %v3406 = vld [vmem:[%s3403 + $0x8] sm:$0xf]
      %v3407 = vld [vmem:[%s3403 + $0xc] sm:$0xf]
      %v3408 = vld [vmem:[%s3403 + $0x10] sm:$0x3]
      %v3457 = vunpack.c.l.b16 %v3355
      %v3458 = vunpack.c.l.b16 %v3356
      %v3459 = vunpack.c.l.b16 %v3357
      %v3460 = vunpack.c.l.b16 %v3358
      %v3461 = vunpack.c.l.b16 %v3359
      %v3462 = vunpack.c.l.b16 %v3360
      %v3463 = vunpack.c.l.b16 %v3361
      %v3464 = vunpack.c.l.b16 %v3362
      %v3465 = vunpack.c.l.b16 %v3363
      %v3466 = vunpack.c.l.b16 %v3364
      %v3467 = vunpack.c.l.b16 %v3365
      %v3468 = vunpack.c.l.b16 %v3366
      %v3469 = vunpack.c.l.b16 %v3367
      %v3470 = vunpack.c.l.b16 %v3368
      %v3471 = vunpack.c.l.b16 %v3369
      %v3472 = vunpack.c.l.b16 %v3370
      %v3473 = vunpack.c.l.b16 %v3371
      %v3474 = vunpack.c.l.b16 %v3372
      %v3475 = vunpack.c.l.b16 %v3373
      %v3476 = vunpack.c.l.b16 %v3374
      %v3477 = vunpack.c.l.b16 %v3375
      %v3478 = vunpack.c.l.b16 %v3376
      %v3479 = vunpack.c.l.b16 %v3377
      %v3480 = vunpack.c.l.b16 %v3378
      %v3481 = vunpack.c.l.b16 %v3379
      %v3482 = vunpack.c.l.b16 %v3380
      %v3483 = vunpack.c.l.b16 %v3381
      %v3484 = vunpack.c.l.b16 %v3382
      %v3485 = vunpack.c.l.b16 %v3383
      %v3486 = vunpack.c.l.b16 %v3384
      %v3487 = vunpack.c.l.b16 %v3385
      %v3488 = vunpack.c.l.b16 %v3386
      %v3489 = vunpack.c.l.b16 %v3387
      %v3490 = vunpack.c.l.b16 %v3388
      %v3491 = vunpack.c.l.b16 %v3389
      %v3492 = vunpack.c.l.b16 %v3390
      %v3493 = vunpack.c.l.b16 %v3391
      %v3494 = vunpack.c.l.b16 %v3392
      %v3495 = vunpack.c.l.b16 %v3393
      %v3496 = vunpack.c.l.b16 %v3394
      %v3497 = vunpack.c.l.b16 %v3395
      %v3498 = vunpack.c.l.b16 %v3396
      %v3499 = vunpack.c.l.b16 %v3397
      %v3500 = vunpack.c.l.b16 %v3398
      %v3501 = vunpack.c.l.b16 %v3399
      %v3502 = vunpack.c.l.b16 %v3400
      %v3503 = vunpack.c.l.b16 %v3401
      %v3504 = vunpack.c.l.b16 %v3402
      %v3505 = vpack.c.b16 %v3458, %v3457
      %v3506 = vpack.c.b16 %v3460, %v3459
      %v3507 = vpack.c.b16 %v3462, %v3461
      %v3508 = vpack.c.b16 %v3464, %v3463
      %v3509 = vpack.c.b16 %v3466, %v3465
      %v3510 = vpack.c.b16 %v3468, %v3467
      %v3511 = vpack.c.b16 %v3470, %v3469
      %v3512 = vpack.c.b16 %v3472, %v3471
      %v3513 = vpack.c.b16 %v3474, %v3473
      %v3514 = vpack.c.b16 %v3476, %v3475
      %v3515 = vpack.c.b16 %v3478, %v3477
      %v3516 = vpack.c.b16 %v3480, %v3479
      %v3517 = vpack.c.b16 %v3482, %v3481
      %v3518 = vpack.c.b16 %v3484, %v3483
      %v3519 = vpack.c.b16 %v3486, %v3485
      %v3520 = vpack.c.b16 %v3488, %v3487
      %v3521 = vpack.c.b16 %v3490, %v3489
      %v3522 = vpack.c.b16 %v3492, %v3491
      %v3523 = vpack.c.b16 %v3494, %v3493
      %v3524 = vpack.c.b16 %v3496, %v3495
      %v3525 = vpack.c.b16 %v3498, %v3497
      %v3526 = vpack.c.b16 %v3500, %v3499
      %v3527 = vpack.c.b16 %v3502, %v3501
      %v3528 = vpack.c.b16 %v3504, %v3503
      %v3534 = vunpack.c.l.b16 %v3404
      %v3535 = vunpack.c.l.b16 %v3405
      %v3536 = vunpack.c.l.b16 %v3406
      %v3537 = vunpack.c.l.b16 %v3407
      %v3538 = vunpack.c.l.b16 %v3408
      %v3539 = vpack.c.b16 %v3535, %v3534
      %v3540 = vpack.c.b16 %v3537, %v3536
      %v3541 = vpack.c.b16 %v3538, %v3538
      %v3545 = vsel %vm643, %v3505, 0
      %v3548 = vsel %vm643, %v3506, 0
      %v3551 = vsel %vm643, %v3507, 0
      %v3554 = vsel %vm643, %v3508, 0
      %v3557 = vsel %vm643, %v3509, 0
      %v3560 = vsel %vm643, %v3510, 0
      %v3563 = vsel %vm643, %v3511, 0
      %v3566 = vsel %vm643, %v3512, 0
      %v3569 = vsel %vm643, %v3513, 0
      %v3572 = vsel %vm643, %v3514, 0
      %v3575 = vsel %vm643, %v3515, 0
      %v3578 = vsel %vm643, %v3516, 0
      %v3581 = vsel %vm643, %v3517, 0
      %v3584 = vsel %vm643, %v3518, 0
      %v3587 = vsel %vm643, %v3519, 0
      %v3590 = vsel %vm643, %v3520, 0
      %v3593 = vsel %vm643, %v3521, 0
      %v3596 = vsel %vm643, %v3522, 0
      %v3599 = vsel %vm643, %v3523, 0
      %v3602 = vsel %vm643, %v3524, 0
      %v3605 = vsel %vm643, %v3525, 0
      %v3608 = vsel %vm643, %v3526, 0
      %v3611 = vsel %vm643, %v3527, 0
      %v3614 = vsel %vm643, %v3528, 0
      %v3617 = vsel %vm716, %v3541, 0
      %3619 = vmatprep.subr.bf16.mxu0 0
      %3620 = vmatpush1.bf16.msra.mxu0 %v3539
      %3621 = vmatprep.subr.bf16.mxu0 0
      %3622 = vmatpush1.bf16.msra.mxu0 %v3540
      %3623 = vmatprep.subr.bf16.mxu0 0
      %3624 = vmatpush1.bf16.msra.mxu0 %v3617
      %3625 = vmatprep.subr.bf16.mxu0 0
      %3626 = vmatpush1.bf16.msra.mxu0 0
      %3627 = vmatprep.subr.bf16.mxu0 0
      %3628 = vmatpush1.bf16.msra.mxu0 0
      %3629 = vmatprep.subr.bf16.mxu0 0
      %3630 = vmatpush1.bf16.msra.mxu0 0
      %3631 = vmatprep.subr.bf16.mxu0 0
      %3632 = vmatpush1.bf16.msra.mxu0 0
      %3633 = vmatprep.subr.bf16.mxu0 0
      %3634 = vmatpush1.bf16.msra.mxu0 0
      %3635 = vmatprep.subr.bf16.mxu0 0
      %3636 = vmatpush1.bf16.msra.mxu0 0
      %3637 = vmatprep.subr.bf16.mxu0 0
      %3638 = vmatpush1.bf16.msra.mxu0 0
      %3639 = vmatprep.subr.bf16.mxu0 0
      %3640 = vmatpush1.bf16.msra.mxu0 0
      %3641 = vmatprep.subr.bf16.mxu0 0
      %3642 = vmatpush1.bf16.msra.mxu0 0
      %3643 = vmatprep.subr.bf16.mxu0 0
      %3644 = vmatpush1.bf16.msra.mxu0 0
      %3645 = vmatprep.subr.bf16.mxu0 0
      %3646 = vmatpush1.bf16.msra.mxu0 0
      %3647 = vmatprep.subr.bf16.mxu0 0
      %3648 = vmatpush1.bf16.msra.mxu0 0
      %3649 = vmatprep.subr.bf16.mxu0 0
      %3650 = vmatpush1.bf16.msra.mxu0 0
      %3651 = vmatprep.mubr.bf16.mxu0 0
      %3652 = vmatmul.mubr.bf16.gmra.mrb[0].mxu0 %v3545
      %v3653 = vpop.f32.mrb[0].mxu0
      %v3654 = vadd.f32 0.0, %v3653
      %v3655 = vpop.f32.mrb[0].mxu0
      %v3656 = vpop.f32.mrb[0].mxu0
      %v3657 = vadd.f32 0.0, %v3656
      %v3658 = vpop.f32.mrb[0].mxu0
      %3659 = vmatprep.mubr.bf16.mxu0 0
      %3660 = vmatmul.mubr.bf16.gmra.mrb[0].mxu0 %v3548
      %v3661 = vpop.f32.mrb[0].mxu0
      %v3662 = vadd.f32 0.0, %v3661
      %v3663 = vpop.f32.mrb[0].mxu0
      %v3664 = vpop.f32.mrb[0].mxu0
      %v3665 = vadd.f32 0.0, %v3664
      %v3666 = vpop.f32.mrb[0].mxu0
      %3667 = vmatprep.mubr.bf16.mxu0 0
      %3668 = vmatmul.mubr.bf16.gmra.mrb[0].mxu0 %v3551
      %v3669 = vpop.f32.mrb[0].mxu0
      %v3670 = vadd.f32 0.0, %v3669
      %v3671 = vpop.f32.mrb[0].mxu0
      %v3672 = vpop.f32.mrb[0].mxu0
      %v3673 = vadd.f32 0.0, %v3672
      %v3674 = vpop.f32.mrb[0].mxu0
      %3675 = vmatprep.mubr.bf16.mxu0 0
      %3676 = vmatmul.mubr.bf16.gmra.mrb[0].mxu0 %v3554
      %v3677 = vpop.f32.mrb[0].mxu0
      %v3678 = vadd.f32 0.0, %v3677
      %v3679 = vpop.f32.mrb[0].mxu0
      %v3680 = vpop.f32.mrb[0].mxu0
      %v3681 = vadd.f32 0.0, %v3680
      %v3682 = vpop.f32.mrb[0].mxu0
      %3683 = vmatprep.mubr.bf16.mxu0 0
      %3684 = vmatmul.mubr.bf16.gmra.mrb[0].mxu0 %v3557
      %v3685 = vpop.f32.mrb[0].mxu0
      %v3686 = vadd.f32 0.0, %v3685
      %v3687 = vpop.f32.mrb[0].mxu0
      %v3688 = vpop.f32.mrb[0].mxu0
      %v3689 = vadd.f32 0.0, %v3688
      %v3690 = vpop.f32.mrb[0].mxu0
      %3691 = vmatprep.mubr.bf16.mxu0 0
      %3692 = vmatmul.mubr.bf16.gmra.mrb[0].mxu0 %v3560
      %v3693 = vpop.f32.mrb[0].mxu0
      %v3694 = vadd.f32 0.0, %v3693
      %v3695 = vpop.f32.mrb[0].mxu0
      %v3696 = vpop.f32.mrb[0].mxu0
      %v3697 = vadd.f32 0.0, %v3696
      %v3698 = vpop.f32.mrb[0].mxu0
      %3699 = vmatprep.mubr.bf16.mxu0 0
      %3700 = vmatmul.mubr.bf16.gmra.mrb[0].mxu0 %v3563
      %v3701 = vpop.f32.mrb[0].mxu0
      %v3702 = vadd.f32 0.0, %v3701
      %v3703 = vpop.f32.mrb[0].mxu0
      %v3704 = vpop.f32.mrb[0].mxu0
      %v3705 = vadd.f32 0.0, %v3704
      %v3706 = vpop.f32.mrb[0].mxu0
      %3707 = vmatprep.mubr.bf16.mxu0 0
      %3708 = vmatmul.mubr.bf16.gmra.mrb[0].mxu0 %v3566
      %v3709 = vpop.f32.mrb[0].mxu0
      %v3710 = vadd.f32 0.0, %v3709
      %v3711 = vpop.f32.mrb[0].mxu0
      %v3712 = vpop.f32.mrb[0].mxu0
      %v3713 = vadd.f32 0.0, %v3712
      %v3714 = vpop.f32.mrb[0].mxu0
      %3715 = vmatprep.mubr.bf16.mxu0 0
      %3716 = vmatmul.mubr.bf16.gmra.mrb[0].mxu0 %v3569
      %v3717 = vpop.f32.mrb[0].mxu0
      %v3718 = vadd.f32 0.0, %v3717
      %v3719 = vpop.f32.mrb[0].mxu0
      %v3720 = vpop.f32.mrb[0].mxu0
      %v3721 = vadd.f32 0.0, %v3720
      %v3722 = vpop.f32.mrb[0].mxu0
      %3723 = vmatprep.mubr.bf16.mxu0 0
      %3724 = vmatmul.mubr.bf16.gmra.mrb[0].mxu0 %v3572
      %v3725 = vpop.f32.mrb[0].mxu0
      %v3726 = vadd.f32 0.0, %v3725
      %v3727 = vpop.f32.mrb[0].mxu0
      %v3728 = vpop.f32.mrb[0].mxu0
      %v3729 = vadd.f32 0.0, %v3728
      %v3730 = vpop.f32.mrb[0].mxu0
      %3731 = vmatprep.mubr.bf16.mxu0 0
      %3732 = vmatmul.mubr.bf16.gmra.mrb[0].mxu0 %v3575
      %v3733 = vpop.f32.mrb[0].mxu0
      %v3734 = vadd.f32 0.0, %v3733
      %v3735 = vpop.f32.mrb[0].mxu0
      %v3736 = vpop.f32.mrb[0].mxu0
      %v3737 = vadd.f32 0.0, %v3736
      %v3738 = vpop.f32.mrb[0].mxu0
      %3739 = vmatprep.mubr.bf16.mxu0 0
      %3740 = vmatmul.mubr.bf16.gmra.mrb[0].mxu0 %v3578
      %v3741 = vpop.f32.mrb[0].mxu0
      %v3742 = vadd.f32 0.0, %v3741
      %v3743 = vpop.f32.mrb[0].mxu0
      %v3744 = vpop.f32.mrb[0].mxu0
      %v3745 = vadd.f32 0.0, %v3744
      %v3746 = vpop.f32.mrb[0].mxu0
      %3747 = vmatprep.mubr.bf16.mxu0 0
      %3748 = vmatmul.mubr.bf16.gmra.mrb[0].mxu0 %v3581
      %v3749 = vpop.f32.mrb[0].mxu0
      %v3750 = vadd.f32 0.0, %v3749
      %v3751 = vpop.f32.mrb[0].mxu0
      %v3752 = vpop.f32.mrb[0].mxu0
      %v3753 = vadd.f32 0.0, %v3752
      %v3754 = vpop.f32.mrb[0].mxu0
      %3755 = vmatprep.mubr.bf16.mxu0 0
      %3756 = vmatmul.mubr.bf16.gmra.mrb[0].mxu0 %v3584
      %v3757 = vpop.f32.mrb[0].mxu0
      %v3758 = vadd.f32 0.0, %v3757
      %v3759 = vpop.f32.mrb[0].mxu0
      %v3760 = vpop.f32.mrb[0].mxu0
      %v3761 = vadd.f32 0.0, %v3760
      %v3762 = vpop.f32.mrb[0].mxu0
      %3763 = vmatprep.mubr.bf16.mxu0 0
      %3764 = vmatmul.mubr.bf16.gmra.mrb[0].mxu0 %v3587
      %v3765 = vpop.f32.mrb[0].mxu0
      %v3766 = vadd.f32 0.0, %v3765
      %v3767 = vpop.f32.mrb[0].mxu0
      %v3768 = vpop.f32.mrb[0].mxu0
      %v3769 = vadd.f32 0.0, %v3768
      %v3770 = vpop.f32.mrb[0].mxu0
      %3771 = vmatprep.mubr.bf16.mxu0 0
      %3772 = vmatmul.mubr.bf16.gmra.mrb[0].mxu0 %v3590
      %v3773 = vpop.f32.mrb[0].mxu0
      %v3774 = vadd.f32 0.0, %v3773
      %v3775 = vpop.f32.mrb[0].mxu0
      %v3776 = vpop.f32.mrb[0].mxu0
      %v3777 = vadd.f32 0.0, %v3776
      %v3778 = vpop.f32.mrb[0].mxu0
      %3779 = vmatprep.mubr.bf16.mxu0 0
      %3780 = vmatmul.mubr.bf16.gmra.mrb[0].mxu0 %v3593
      %v3781 = vpop.f32.mrb[0].mxu0
      %v3782 = vadd.f32 0.0, %v3781
      %v3783 = vpop.f32.mrb[0].mxu0
      %v3784 = vpop.f32.mrb[0].mxu0
      %v3785 = vadd.f32 0.0, %v3784
      %v3786 = vpop.f32.mrb[0].mxu0
      %3787 = vmatprep.mubr.bf16.mxu0 0
      %3788 = vmatmul.mubr.bf16.gmra.mrb[0].mxu0 %v3596
      %v3789 = vpop.f32.mrb[0].mxu0
      %v3790 = vadd.f32 0.0, %v3789
      %v3791 = vpop.f32.mrb[0].mxu0
      %v3792 = vpop.f32.mrb[0].mxu0
      %v3793 = vadd.f32 0.0, %v3792
      %v3794 = vpop.f32.mrb[0].mxu0
      %3795 = vmatprep.mubr.bf16.mxu0 0
      %3796 = vmatmul.mubr.bf16.gmra.mrb[0].mxu0 %v3599
      %v3797 = vpop.f32.mrb[0].mxu0
      %v3798 = vadd.f32 0.0, %v3797
      %v3799 = vpop.f32.mrb[0].mxu0
      %v3800 = vpop.f32.mrb[0].mxu0
      %v3801 = vadd.f32 0.0, %v3800
      %v3802 = vpop.f32.mrb[0].mxu0
      %3803 = vmatprep.mubr.bf16.mxu0 0
      %3804 = vmatmul.mubr.bf16.gmra.mrb[0].mxu0 %v3602
      %v3805 = vpop.f32.mrb[0].mxu0
      %v3806 = vadd.f32 0.0, %v3805
      %v3807 = vpop.f32.mrb[0].mxu0
      %v3808 = vpop.f32.mrb[0].mxu0
      %v3809 = vadd.f32 0.0, %v3808
      %v3810 = vpop.f32.mrb[0].mxu0
      %3811 = vmatprep.mubr.bf16.mxu0 0
      %3812 = vmatmul.mubr.bf16.gmra.mrb[0].mxu0 %v3605
      %v3813 = vpop.f32.mrb[0].mxu0
      %v3814 = vadd.f32 0.0, %v3813
      %v3815 = vpop.f32.mrb[0].mxu0
      %v3816 = vpop.f32.mrb[0].mxu0
      %v3817 = vadd.f32 0.0, %v3816
      %v3818 = vpop.f32.mrb[0].mxu0
      %3819 = vmatprep.mubr.bf16.mxu0 0
      %3820 = vmatmul.mubr.bf16.gmra.mrb[0].mxu0 %v3608
      %v3821 = vpop.f32.mrb[0].mxu0
      %v3822 = vadd.f32 0.0, %v3821
      %v3823 = vpop.f32.mrb[0].mxu0
      %v3824 = vpop.f32.mrb[0].mxu0
      %v3825 = vadd.f32 0.0, %v3824
      %v3826 = vpop.f32.mrb[0].mxu0
      %3827 = vmatprep.mubr.bf16.mxu0 0
      %3828 = vmatmul.mubr.bf16.gmra.mrb[0].mxu0 %v3611
      %v3829 = vpop.f32.mrb[0].mxu0
      %v3830 = vadd.f32 0.0, %v3829
      %v3831 = vpop.f32.mrb[0].mxu0
      %v3832 = vpop.f32.mrb[0].mxu0
      %v3833 = vadd.f32 0.0, %v3832
      %v3834 = vpop.f32.mrb[0].mxu0
      %3835 = vmatprep.mubr.bf16.mxu0 0
      %3836 = vmatmul.mubr.bf16.gmra.mrb[0].mxu0 %v3614
      %v3837 = vpop.f32.mrb[0].mxu0
      %v3838 = vadd.f32 0.0, %v3837
      %v3839 = vpop.f32.mrb[0].mxu0
      %v3840 = vpop.f32.mrb[0].mxu0
      %v3841 = vadd.f32 0.0, %v3840
      %v3842 = vpop.f32.mrb[0].mxu0
      %3843 = vdwg.mxu0
      %v3844 = vadd.f32 %v3307, %v3654
      %v3845 = vadd.f32 %v3308, %v3657
      %v3846 = vadd.f32 %v3309, %v3662
      %v3847 = vadd.f32 %v3310, %v3665
      %v3848 = vadd.f32 %v3311, %v3670
      %v3849 = vadd.f32 %v3312, %v3673
      %v3850 = vadd.f32 %v3313, %v3678
      %v3851 = vadd.f32 %v3314, %v3681
      %v3852 = vadd.f32 %v3315, %v3686
      %v3853 = vadd.f32 %v3316, %v3689
      %v3854 = vadd.f32 %v3317, %v3694
      %v3855 = vadd.f32 %v3318, %v3697
      %v3856 = vadd.f32 %v3319, %v3702
      %v3857 = vadd.f32 %v3320, %v3705
      %v3858 = vadd.f32 %v3321, %v3710
      %v3859 = vadd.f32 %v3322, %v3713
      %v3860 = vadd.f32 %v3323, %v3718
      %v3861 = vadd.f32 %v3324, %v3721
      %v3862 = vadd.f32 %v3325, %v3726
      %v3863 = vadd.f32 %v3326, %v3729
      %v3864 = vadd.f32 %v3327, %v3734
      %v3865 = vadd.f32 %v3328, %v3737
      %v3866 = vadd.f32 %v3329, %v3742
      %v3867 = vadd.f32 %v3330, %v3745
      %v3868 = vadd.f32 %v3331, %v3750
      %v3869 = vadd.f32 %v3332, %v3753
      %v3870 = vadd.f32 %v3333, %v3758
      %v3871 = vadd.f32 %v3334, %v3761
      %v3872 = vadd.f32 %v3335, %v3766
      %v3873 = vadd.f32 %v3336, %v3769
      %v3874 = vadd.f32 %v3337, %v3774
      %v3875 = vadd.f32 %v3338, %v3777
      %v3876 = vadd.f32 %v3339, %v3782
      %v3877 = vadd.f32 %v3340, %v3785
      %v3878 = vadd.f32 %v3341, %v3790
      %v3879 = vadd.f32 %v3342, %v3793
      %v3880 = vadd.f32 %v3343, %v3798
      %v3881 = vadd.f32 %v3344, %v3801
      %v3882 = vadd.f32 %v3345, %v3806
      %v3883 = vadd.f32 %v3346, %v3809
      %v3884 = vadd.f32 %v3347, %v3814
      %v3885 = vadd.f32 %v3348, %v3817
      %v3886 = vadd.f32 %v3349, %v3822
      %v3887 = vadd.f32 %v3350, %v3825
      %v3888 = vadd.f32 %v3351, %v3830
      %v3889 = vadd.f32 %v3352, %v3833
      %v3890 = vadd.f32 %v3353, %v3838
      %v3891 = vadd.f32 %v3354, %v3841
      %v3892 = vld [vmem:[%s231 + $0x18] sm:$0xf]
      %v3893 = vld [vmem:[%s231 + $0x1c] sm:$0xf]
      %v3894 = vld [vmem:[%s231 + $0x20] sm:$0xf]
      %v3895 = vld [vmem:[%s231 + $0x24] sm:$0xf]
      %v3896 = vld [vmem:[%s231 + $0x28] sm:$0xf]
      %v3897 = vld [vmem:[%s231 + $0x2c] sm:$0xf]
      %v3898 = vld [vmem:[%s231 + $0x30] sm:$0xf]
      %v3899 = vld [vmem:[%s231 + $0x34] sm:$0xf]
      %v3900 = vld [vmem:[%s231 + $0x38] sm:$0xf]
      %v3901 = vld [vmem:[%s231 + $0x3c] sm:$0xf]
      %v3902 = vld [vmem:[%s231 + $0x40] sm:$0xf]
      %v3903 = vld [vmem:[%s231 + $0x44] sm:$0xf]
      %v3904 = vld [vmem:[%s231 + $0x48] sm:$0xf]
      %v3905 = vld [vmem:[%s231 + $0x4c] sm:$0xf]
      %v3906 = vld [vmem:[%s231 + $0x50] sm:$0xf]
      %v3907 = vld [vmem:[%s231 + $0x54] sm:$0xf]
      %v3908 = vld [vmem:[%s231 + $0x58] sm:$0xf]
      %v3909 = vld [vmem:[%s231 + $0x5c] sm:$0xf]
      %v3910 = vld [vmem:[%s231 + $0x60] sm:$0xf]
      %v3911 = vld [vmem:[%s231 + $0x64] sm:$0xf]
      %v3912 = vld [vmem:[%s231 + $0x68] sm:$0xf]
      %v3913 = vld [vmem:[%s231 + $0x6c] sm:$0xf]
      %v3914 = vld [vmem:[%s231 + $0x70] sm:$0xf]
      %v3915 = vld [vmem:[%s231 + $0x74] sm:$0xf]
      %v3916 = vld [vmem:[%s231 + $0x78] sm:$0xf]
      %v3917 = vld [vmem:[%s231 + $0x7c] sm:$0xf]
      %v3918 = vld [vmem:[%s231 + $0x80] sm:$0xf]
      %v3919 = vld [vmem:[%s231 + $0x84] sm:$0xf]
      %v3920 = vld [vmem:[%s231 + $0x88] sm:$0xf]
      %v3921 = vld [vmem:[%s231 + $0x8c] sm:$0xf]
      %v3922 = vld [vmem:[%s231 + $0x90] sm:$0xf]
      %v3923 = vld [vmem:[%s231 + $0x94] sm:$0xf]
      %v3924 = vld [vmem:[%s231 + $0x98] sm:$0xf]
      %v3925 = vld [vmem:[%s231 + $0x9c] sm:$0xf]
      %v3926 = vld [vmem:[%s231 + $0xa0] sm:$0xf]
      %v3927 = vld [vmem:[%s231 + $0xa4] sm:$0xf]
      %v3928 = vld [vmem:[%s231 + $0xa8] sm:$0xf]
      %v3929 = vld [vmem:[%s231 + $0xac] sm:$0xf]
      %v3930 = vld [vmem:[%s231 + $0xb0] sm:$0xf]
      %v3931 = vld [vmem:[%s231 + $0xb4] sm:$0xf]
      %v3932 = vld [vmem:[%s231 + $0xb8] sm:$0xf]
      %v3933 = vld [vmem:[%s231 + $0xbc] sm:$0xf]
      %v3934 = vld [vmem:[%s231 + $0xc0] sm:$0xf]
      %v3935 = vld [vmem:[%s231 + $0xc4] sm:$0xf]
      %v3936 = vld [vmem:[%s231 + $0xc8] sm:$0xf]
      %v3937 = vld [vmem:[%s231 + $0xcc] sm:$0xf]
      %v3938 = vld [vmem:[%s231 + $0xd0] sm:$0xf]
      %v3939 = vld [vmem:[%s231 + $0xd4] sm:$0xf]
      %v3940 = vld [vmem:[%s231 + $0xd8] sm:$0x1]
      %s3941 = scalar_lea.vmem %s236, 140
      %v3942 = vld [vmem:[%s3941] sm:$0xf]
      %v3943 = vld [vmem:[%s3941 + $0x4] sm:$0xf]
      %v3944 = vld [vmem:[%s3941 + $0x8] sm:$0xf]
      %v3945 = vld [vmem:[%s3941 + $0xc] sm:$0xf]
      %v3946 = vld [vmem:[%s3941 + $0x10] sm:$0x3]
      %v3996 = vunpack.c.l.b16 %v3892
      %v3997 = vunpack.c.l.b16 %v3893
      %v3998 = vunpack.c.l.b16 %v3894
      %v3999 = vunpack.c.l.b16 %v3895
      %v4000 = vunpack.c.l.b16 %v3896
      %v4001 = vunpack.c.l.b16 %v3897
      %v4002 = vunpack.c.l.b16 %v3898
      %v4003 = vunpack.c.l.b16 %v3899
      %v4004 = vunpack.c.l.b16 %v3900
      %v4005 = vunpack.c.l.b16 %v3901
      %v4006 = vunpack.c.l.b16 %v3902
      %v4007 = vunpack.c.l.b16 %v3903
      %v4008 = vunpack.c.l.b16 %v3904
      %v4009 = vunpack.c.l.b16 %v3905
      %v4010 = vunpack.c.l.b16 %v3906
      %v4011 = vunpack.c.l.b16 %v3907
      %v4012 = vunpack.c.l.b16 %v3908
      %v4013 = vunpack.c.l.b16 %v3909
      %v4014 = vunpack.c.l.b16 %v3910
      %v4015 = vunpack.c.l.b16 %v3911
      %v4016 = vunpack.c.l.b16 %v3912
      %v4017 = vunpack.c.l.b16 %v3913
      %v4018 = vunpack.c.l.b16 %v3914
      %v4019 = vunpack.c.l.b16 %v3915
      %v4020 = vunpack.c.l.b16 %v3916
      %v4021 = vunpack.c.l.b16 %v3917
      %v4022 = vunpack.c.l.b16 %v3918
      %v4023 = vunpack.c.l.b16 %v3919
      %v4024 = vunpack.c.l.b16 %v3920
      %v4025 = vunpack.c.l.b16 %v3921
      %v4026 = vunpack.c.l.b16 %v3922
      %v4027 = vunpack.c.l.b16 %v3923
      %v4028 = vunpack.c.l.b16 %v3924
      %v4029 = vunpack.c.l.b16 %v3925
      %v4030 = vunpack.c.l.b16 %v3926
      %v4031 = vunpack.c.l.b16 %v3927
      %v4032 = vunpack.c.l.b16 %v3928
      %v4033 = vunpack.c.l.b16 %v3929
      %v4034 = vunpack.c.l.b16 %v3930
      %v4035 = vunpack.c.l.b16 %v3931
      %v4036 = vunpack.c.l.b16 %v3932
      %v4037 = vunpack.c.l.b16 %v3933
      %v4038 = vunpack.c.l.b16 %v3934
      %v4039 = vunpack.c.l.b16 %v3935
      %v4040 = vunpack.c.l.b16 %v3936
      %v4041 = vunpack.c.l.b16 %v3937
      %v4042 = vunpack.c.l.b16 %v3938
      %v4043 = vunpack.c.l.b16 %v3939
      %v4044 = vunpack.c.l.b16 %v3940
      %v4045 = vpack.c.b16 %v3997, %v3996
      %v4046 = vpack.c.b16 %v3999, %v3998
      %v4047 = vpack.c.b16 %v4001, %v4000
      %v4048 = vpack.c.b16 %v4003, %v4002
      %v4049 = vpack.c.b16 %v4005, %v4004
      %v4050 = vpack.c.b16 %v4007, %v4006
      %v4051 = vpack.c.b16 %v4009, %v4008
      %v4052 = vpack.c.b16 %v4011, %v4010
      %v4053 = vpack.c.b16 %v4013, %v4012
      %v4054 = vpack.c.b16 %v4015, %v4014
      %v4055 = vpack.c.b16 %v4017, %v4016
      %v4056 = vpack.c.b16 %v4019, %v4018
      %v4057 = vpack.c.b16 %v4021, %v4020
      %v4058 = vpack.c.b16 %v4023, %v4022
      %v4059 = vpack.c.b16 %v4025, %v4024
      %v4060 = vpack.c.b16 %v4027, %v4026
      %v4061 = vpack.c.b16 %v4029, %v4028
      %v4062 = vpack.c.b16 %v4031, %v4030
      %v4063 = vpack.c.b16 %v4033, %v4032
      %v4064 = vpack.c.b16 %v4035, %v4034
      %v4065 = vpack.c.b16 %v4037, %v4036
      %v4066 = vpack.c.b16 %v4039, %v4038
      %v4067 = vpack.c.b16 %v4041, %v4040
      %v4068 = vpack.c.b16 %v4043, %v4042
      %v4069 = vpack.c.b16 %v4044, %v4044
      %v4071 = vshrl.u32 %v4045, 16
      %v4073 = vshll.u32 %v4045, 16
      %v4075 = vrot.slane %v4073, 1
      %v4076 = vor.u32 %v4071, %v4075
      %v4078 = vshll.u32 %v4046, 16
      %v4080 = vrot.slane %v4078, 1
      %v4081 = vsel %vm431, %v4076, %v4080
      %v4082 = vshrl.u32 %v4046, 16
      %v4084 = vor.u32 %v4082, %v4080
      %v4086 = vshll.u32 %v4047, 16
      %v4088 = vrot.slane %v4086, 1
      %v4089 = vsel %vm431, %v4084, %v4088
      %v4090 = vshrl.u32 %v4047, 16
      %v4092 = vor.u32 %v4090, %v4088
      %v4094 = vshll.u32 %v4048, 16
      %v4096 = vrot.slane %v4094, 1
      %v4097 = vsel %vm431, %v4092, %v4096
      %v4098 = vshrl.u32 %v4048, 16
      %v4100 = vor.u32 %v4098, %v4096
      %v4102 = vshll.u32 %v4049, 16
      %v4104 = vrot.slane %v4102, 1
      %v4105 = vsel %vm431, %v4100, %v4104
      %v4106 = vshrl.u32 %v4049, 16
      %v4108 = vor.u32 %v4106, %v4104
      %v4110 = vshll.u32 %v4050, 16
      %v4112 = vrot.slane %v4110, 1
      %v4113 = vsel %vm431, %v4108, %v4112
      %v4114 = vshrl.u32 %v4050, 16
      %v4116 = vor.u32 %v4114, %v4112
      %v4118 = vshll.u32 %v4051, 16
      %v4120 = vrot.slane %v4118, 1
      %v4121 = vsel %vm431, %v4116, %v4120
      %v4122 = vshrl.u32 %v4051, 16
      %v4124 = vor.u32 %v4122, %v4120
      %v4126 = vshll.u32 %v4052, 16
      %v4128 = vrot.slane %v4126, 1
      %v4129 = vsel %vm431, %v4124, %v4128
      %v4130 = vshrl.u32 %v4052, 16
      %v4132 = vor.u32 %v4130, %v4128
      %v4134 = vshll.u32 %v4053, 16
      %v4136 = vrot.slane %v4134, 1
      %v4137 = vsel %vm431, %v4132, %v4136
      %v4138 = vshrl.u32 %v4053, 16
      %v4140 = vor.u32 %v4138, %v4136
      %v4142 = vshll.u32 %v4054, 16
      %v4144 = vrot.slane %v4142, 1
      %v4145 = vsel %vm431, %v4140, %v4144
      %v4146 = vshrl.u32 %v4054, 16
      %v4148 = vor.u32 %v4146, %v4144
      %v4150 = vshll.u32 %v4055, 16
      %v4152 = vrot.slane %v4150, 1
      %v4153 = vsel %vm431, %v4148, %v4152
      %v4154 = vshrl.u32 %v4055, 16
      %v4156 = vor.u32 %v4154, %v4152
      %v4158 = vshll.u32 %v4056, 16
      %v4160 = vrot.slane %v4158, 1
      %v4161 = vsel %vm431, %v4156, %v4160
      %v4162 = vshrl.u32 %v4056, 16
      %v4164 = vor.u32 %v4162, %v4160
      %v4166 = vshll.u32 %v4057, 16
      %v4168 = vrot.slane %v4166, 1
      %v4169 = vsel %vm431, %v4164, %v4168
      %v4170 = vshrl.u32 %v4057, 16
      %v4172 = vor.u32 %v4170, %v4168
      %v4174 = vshll.u32 %v4058, 16
      %v4176 = vrot.slane %v4174, 1
      %v4177 = vsel %vm431, %v4172, %v4176
      %v4178 = vshrl.u32 %v4058, 16
      %v4180 = vor.u32 %v4178, %v4176
      %v4182 = vshll.u32 %v4059, 16
      %v4184 = vrot.slane %v4182, 1
      %v4185 = vsel %vm431, %v4180, %v4184
      %v4186 = vshrl.u32 %v4059, 16
      %v4188 = vor.u32 %v4186, %v4184
      %v4190 = vshll.u32 %v4060, 16
      %v4192 = vrot.slane %v4190, 1
      %v4193 = vsel %vm431, %v4188, %v4192
      %v4194 = vshrl.u32 %v4060, 16
      %v4196 = vor.u32 %v4194, %v4192
      %v4198 = vshll.u32 %v4061, 16
      %v4200 = vrot.slane %v4198, 1
      %v4201 = vsel %vm431, %v4196, %v4200
      %v4202 = vshrl.u32 %v4061, 16
      %v4204 = vor.u32 %v4202, %v4200
      %v4206 = vshll.u32 %v4062, 16
      %v4208 = vrot.slane %v4206, 1
      %v4209 = vsel %vm431, %v4204, %v4208
      %v4210 = vshrl.u32 %v4062, 16
      %v4212 = vor.u32 %v4210, %v4208
      %v4214 = vshll.u32 %v4063, 16
      %v4216 = vrot.slane %v4214, 1
      %v4217 = vsel %vm431, %v4212, %v4216
      %v4218 = vshrl.u32 %v4063, 16
      %v4220 = vor.u32 %v4218, %v4216
      %v4222 = vshll.u32 %v4064, 16
      %v4224 = vrot.slane %v4222, 1
      %v4225 = vsel %vm431, %v4220, %v4224
      %v4226 = vshrl.u32 %v4064, 16
      %v4228 = vor.u32 %v4226, %v4224
      %v4230 = vshll.u32 %v4065, 16
      %v4232 = vrot.slane %v4230, 1
      %v4233 = vsel %vm431, %v4228, %v4232
      %v4234 = vshrl.u32 %v4065, 16
      %v4236 = vor.u32 %v4234, %v4232
      %v4238 = vshll.u32 %v4066, 16
      %v4240 = vrot.slane %v4238, 1
      %v4241 = vsel %vm431, %v4236, %v4240
      %v4242 = vshrl.u32 %v4066, 16
      %v4244 = vor.u32 %v4242, %v4240
      %v4246 = vshll.u32 %v4067, 16
      %v4248 = vrot.slane %v4246, 1
      %v4249 = vsel %vm431, %v4244, %v4248
      %v4250 = vshrl.u32 %v4067, 16
      %v4252 = vor.u32 %v4250, %v4248
      %v4254 = vshll.u32 %v4068, 16
      %v4256 = vrot.slane %v4254, 1
      %v4257 = vsel %vm431, %v4252, %v4256
      %v4258 = vshrl.u32 %v4068, 16
      %v4260 = vor.u32 %v4258, %v4256
      %v4262 = vshll.u32 %v4069, 16
      %v4264 = vrot.slane %v4262, 1
      %v4265 = vsel %vm431, %v4260, %v4264
      %v4271 = vunpack.c.l.b16 %v3942
      %v4272 = vunpack.c.l.b16 %v3943
      %v4273 = vunpack.c.l.b16 %v3944
      %v4274 = vunpack.c.l.b16 %v3945
      %v4275 = vunpack.c.l.b16 %v3946
      %v4276 = vpack.c.b16 %v4272, %v4271
      %v4277 = vpack.c.b16 %v4274, %v4273
      %v4278 = vpack.c.b16 %v4275, %v4275
      %v4282 = vsel %vm643, %v4081, 0
      %v4285 = vsel %vm643, %v4089, 0
      %v4288 = vsel %vm643, %v4097, 0
      %v4291 = vsel %vm643, %v4105, 0
      %v4294 = vsel %vm643, %v4113, 0
      %v4297 = vsel %vm643, %v4121, 0
      %v4300 = vsel %vm643, %v4129, 0
      %v4303 = vsel %vm643, %v4137, 0
      %v4306 = vsel %vm643, %v4145, 0
      %v4309 = vsel %vm643, %v4153, 0
      %v4312 = vsel %vm643, %v4161, 0
      %v4315 = vsel %vm643, %v4169, 0
      %v4318 = vsel %vm643, %v4177, 0
      %v4321 = vsel %vm643, %v4185, 0
      %v4324 = vsel %vm643, %v4193, 0
      %v4327 = vsel %vm643, %v4201, 0
      %v4330 = vsel %vm643, %v4209, 0
      %v4333 = vsel %vm643, %v4217, 0
      %v4336 = vsel %vm643, %v4225, 0
      %v4339 = vsel %vm643, %v4233, 0
      %v4342 = vsel %vm643, %v4241, 0
      %v4345 = vsel %vm643, %v4249, 0
      %v4348 = vsel %vm643, %v4257, 0
      %v4351 = vsel %vm643, %v4265, 0
      %v4354 = vsel %vm716, %v4278, 0
      %4356 = vmatprep.subr.bf16.mxu0 0
      %4357 = vmatpush1.bf16.msra.mxu0 %v4276
      %4358 = vmatprep.subr.bf16.mxu0 0
      %4359 = vmatpush1.bf16.msra.mxu0 %v4277
      %4360 = vmatprep.subr.bf16.mxu0 0
      %4361 = vmatpush1.bf16.msra.mxu0 %v4354
      %4362 = vmatprep.subr.bf16.mxu0 0
      %4363 = vmatpush1.bf16.msra.mxu0 0
      %4364 = vmatprep.subr.bf16.mxu0 0
      %4365 = vmatpush1.bf16.msra.mxu0 0
      %4366 = vmatprep.subr.bf16.mxu0 0
      %4367 = vmatpush1.bf16.msra.mxu0 0
      %4368 = vmatprep.subr.bf16.mxu0 0
      %4369 = vmatpush1.bf16.msra.mxu0 0
      %4370 = vmatprep.subr.bf16.mxu0 0
      %4371 = vmatpush1.bf16.msra.mxu0 0
      %4372 = vmatprep.subr.bf16.mxu0 0
      %4373 = vmatpush1.bf16.msra.mxu0 0
      %4374 = vmatprep.subr.bf16.mxu0 0
      %4375 = vmatpush1.bf16.msra.mxu0 0
      %4376 = vmatprep.subr.bf16.mxu0 0
      %4377 = vmatpush1.bf16.msra.mxu0 0
      %4378 = vmatprep.subr.bf16.mxu0 0
      %4379 = vmatpush1.bf16.msra.mxu0 0
      %4380 = vmatprep.subr.bf16.mxu0 0
      %4381 = vmatpush1.bf16.msra.mxu0 0
      %4382 = vmatprep.subr.bf16.mxu0 0
      %4383 = vmatpush1.bf16.msra.mxu0 0
      %4384 = vmatprep.subr.bf16.mxu0 0
      %4385 = vmatpush1.bf16.msra.mxu0 0
      %4386 = vmatprep.subr.bf16.mxu0 0
      %4387 = vmatpush1.bf16.msra.mxu0 0
      %4388 = vmatprep.mubr.bf16.mxu0 0
      %4389 = vmatmul.mubr.bf16.gmra.mrb[0].mxu0 %v4282
      %v4390 = vpop.f32.mrb[0].mxu0
      %v4391 = vadd.f32 0.0, %v4390
      %v4392 = vpop.f32.mrb[0].mxu0
      %v4393 = vpop.f32.mrb[0].mxu0
      %v4394 = vadd.f32 0.0, %v4393
      %v4395 = vpop.f32.mrb[0].mxu0
      %4396 = vmatprep.mubr.bf16.mxu0 0
      %4397 = vmatmul.mubr.bf16.gmra.mrb[0].mxu0 %v4285
      %v4398 = vpop.f32.mrb[0].mxu0
      %v4399 = vadd.f32 0.0, %v4398
      %v4400 = vpop.f32.mrb[0].mxu0
      %v4401 = vpop.f32.mrb[0].mxu0
      %v4402 = vadd.f32 0.0, %v4401
      %v4403 = vpop.f32.mrb[0].mxu0
      %4404 = vmatprep.mubr.bf16.mxu0 0
      %4405 = vmatmul.mubr.bf16.gmra.mrb[0].mxu0 %v4288
      %v4406 = vpop.f32.mrb[0].mxu0
      %v4407 = vadd.f32 0.0, %v4406
      %v4408 = vpop.f32.mrb[0].mxu0
      %v4409 = vpop.f32.mrb[0].mxu0
      %v4410 = vadd.f32 0.0, %v4409
      %v4411 = vpop.f32.mrb[0].mxu0
      %4412 = vmatprep.mubr.bf16.mxu0 0
      %4413 = vmatmul.mubr.bf16.gmra.mrb[0].mxu0 %v4291
      %v4414 = vpop.f32.mrb[0].mxu0
      %v4415 = vadd.f32 0.0, %v4414
      %v4416 = vpop.f32.mrb[0].mxu0
      %v4417 = vpop.f32.mrb[0].mxu0
      %v4418 = vadd.f32 0.0, %v4417
      %v4419 = vpop.f32.mrb[0].mxu0
      %4420 = vmatprep.mubr.bf16.mxu0 0
      %4421 = vmatmul.mubr.bf16.gmra.mrb[0].mxu0 %v4294
      %v4422 = vpop.f32.mrb[0].mxu0
      %v4423 = vadd.f32 0.0, %v4422
      %v4424 = vpop.f32.mrb[0].mxu0
      %v4425 = vpop.f32.mrb[0].mxu0
      %v4426 = vadd.f32 0.0, %v4425
      %v4427 = vpop.f32.mrb[0].mxu0
      %4428 = vmatprep.mubr.bf16.mxu0 0
      %4429 = vmatmul.mubr.bf16.gmra.mrb[0].mxu0 %v4297
      %v4430 = vpop.f32.mrb[0].mxu0
      %v4431 = vadd.f32 0.0, %v4430
      %v4432 = vpop.f32.mrb[0].mxu0
      %v4433 = vpop.f32.mrb[0].mxu0
      %v4434 = vadd.f32 0.0, %v4433
      %v4435 = vpop.f32.mrb[0].mxu0
      %4436 = vmatprep.mubr.bf16.mxu0 0
      %4437 = vmatmul.mubr.bf16.gmra.mrb[0].mxu0 %v4300
      %v4438 = vpop.f32.mrb[0].mxu0
      %v4439 = vadd.f32 0.0, %v4438
      %v4440 = vpop.f32.mrb[0].mxu0
      %v4441 = vpop.f32.mrb[0].mxu0
      %v4442 = vadd.f32 0.0, %v4441
      %v4443 = vpop.f32.mrb[0].mxu0
      %4444 = vmatprep.mubr.bf16.mxu0 0
      %4445 = vmatmul.mubr.bf16.gmra.mrb[0].mxu0 %v4303
      %v4446 = vpop.f32.mrb[0].mxu0
      %v4447 = vadd.f32 0.0, %v4446
      %v4448 = vpop.f32.mrb[0].mxu0
      %v4449 = vpop.f32.mrb[0].mxu0
      %v4450 = vadd.f32 0.0, %v4449
      %v4451 = vpop.f32.mrb[0].mxu0
      %4452 = vmatprep.mubr.bf16.mxu0 0
      %4453 = vmatmul.mubr.bf16.gmra.mrb[0].mxu0 %v4306
      %v4454 = vpop.f32.mrb[0].mxu0
      %v4455 = vadd.f32 0.0, %v4454
      %v4456 = vpop.f32.mrb[0].mxu0
      %v4457 = vpop.f32.mrb[0].mxu0
      %v4458 = vadd.f32 0.0, %v4457
      %v4459 = vpop.f32.mrb[0].mxu0
      %4460 = vmatprep.mubr.bf16.mxu0 0
      %4461 = vmatmul.mubr.bf16.gmra.mrb[0].mxu0 %v4309
      %v4462 = vpop.f32.mrb[0].mxu0
      %v4463 = vadd.f32 0.0, %v4462
      %v4464 = vpop.f32.mrb[0].mxu0
      %v4465 = vpop.f32.mrb[0].mxu0
      %v4466 = vadd.f32 0.0, %v4465
      %v4467 = vpop.f32.mrb[0].mxu0
      %4468 = vmatprep.mubr.bf16.mxu0 0
      %4469 = vmatmul.mubr.bf16.gmra.mrb[0].mxu0 %v4312
      %v4470 = vpop.f32.mrb[0].mxu0
      %v4471 = vadd.f32 0.0, %v4470
      %v4472 = vpop.f32.mrb[0].mxu0
      %v4473 = vpop.f32.mrb[0].mxu0
      %v4474 = vadd.f32 0.0, %v4473
      %v4475 = vpop.f32.mrb[0].mxu0
      %4476 = vmatprep.mubr.bf16.mxu0 0
      %4477 = vmatmul.mubr.bf16.gmra.mrb[0].mxu0 %v4315
      %v4478 = vpop.f32.mrb[0].mxu0
      %v4479 = vadd.f32 0.0, %v4478
      %v4480 = vpop.f32.mrb[0].mxu0
      %v4481 = vpop.f32.mrb[0].mxu0
      %v4482 = vadd.f32 0.0, %v4481
      %v4483 = vpop.f32.mrb[0].mxu0
      %4484 = vmatprep.mubr.bf16.mxu0 0
      %4485 = vmatmul.mubr.bf16.gmra.mrb[0].mxu0 %v4318
      %v4486 = vpop.f32.mrb[0].mxu0
      %v4487 = vadd.f32 0.0, %v4486
      %v4488 = vpop.f32.mrb[0].mxu0
      %v4489 = vpop.f32.mrb[0].mxu0
      %v4490 = vadd.f32 0.0, %v4489
      %v4491 = vpop.f32.mrb[0].mxu0
      %4492 = vmatprep.mubr.bf16.mxu0 0
      %4493 = vmatmul.mubr.bf16.gmra.mrb[0].mxu0 %v4321
      %v4494 = vpop.f32.mrb[0].mxu0
      %v4495 = vadd.f32 0.0, %v4494
      %v4496 = vpop.f32.mrb[0].mxu0
      %v4497 = vpop.f32.mrb[0].mxu0
      %v4498 = vadd.f32 0.0, %v4497
      %v4499 = vpop.f32.mrb[0].mxu0
      %4500 = vmatprep.mubr.bf16.mxu0 0
      %4501 = vmatmul.mubr.bf16.gmra.mrb[0].mxu0 %v4324
      %v4502 = vpop.f32.mrb[0].mxu0
      %v4503 = vadd.f32 0.0, %v4502
      %v4504 = vpop.f32.mrb[0].mxu0
      %v4505 = vpop.f32.mrb[0].mxu0
      %v4506 = vadd.f32 0.0, %v4505
      %v4507 = vpop.f32.mrb[0].mxu0
      %4508 = vmatprep.mubr.bf16.mxu0 0
      %4509 = vmatmul.mubr.bf16.gmra.mrb[0].mxu0 %v4327
      %v4510 = vpop.f32.mrb[0].mxu0
      %v4511 = vadd.f32 0.0, %v4510
      %v4512 = vpop.f32.mrb[0].mxu0
      %v4513 = vpop.f32.mrb[0].mxu0
      %v4514 = vadd.f32 0.0, %v4513
      %v4515 = vpop.f32.mrb[0].mxu0
      %4516 = vmatprep.mubr.bf16.mxu0 0
      %4517 = vmatmul.mubr.bf16.gmra.mrb[0].mxu0 %v4330
      %v4518 = vpop.f32.mrb[0].mxu0
      %v4519 = vadd.f32 0.0, %v4518
      %v4520 = vpop.f32.mrb[0].mxu0
      %v4521 = vpop.f32.mrb[0].mxu0
      %v4522 = vadd.f32 0.0, %v4521
      %v4523 = vpop.f32.mrb[0].mxu0
      %4524 = vmatprep.mubr.bf16.mxu0 0
      %4525 = vmatmul.mubr.bf16.gmra.mrb[0].mxu0 %v4333
      %v4526 = vpop.f32.mrb[0].mxu0
      %v4527 = vadd.f32 0.0, %v4526
      %v4528 = vpop.f32.mrb[0].mxu0
      %v4529 = vpop.f32.mrb[0].mxu0
      %v4530 = vadd.f32 0.0, %v4529
      %v4531 = vpop.f32.mrb[0].mxu0
      %4532 = vmatprep.mubr.bf16.mxu0 0
      %4533 = vmatmul.mubr.bf16.gmra.mrb[0].mxu0 %v4336
      %v4534 = vpop.f32.mrb[0].mxu0
      %v4535 = vadd.f32 0.0, %v4534
      %v4536 = vpop.f32.mrb[0].mxu0
      %v4537 = vpop.f32.mrb[0].mxu0
      %v4538 = vadd.f32 0.0, %v4537
      %v4539 = vpop.f32.mrb[0].mxu0
      %4540 = vmatprep.mubr.bf16.mxu0 0
      %4541 = vmatmul.mubr.bf16.gmra.mrb[0].mxu0 %v4339
      %v4542 = vpop.f32.mrb[0].mxu0
      %v4543 = vadd.f32 0.0, %v4542
      %v4544 = vpop.f32.mrb[0].mxu0
      %v4545 = vpop.f32.mrb[0].mxu0
      %v4546 = vadd.f32 0.0, %v4545
      %v4547 = vpop.f32.mrb[0].mxu0
      %4548 = vmatprep.mubr.bf16.mxu0 0
      %4549 = vmatmul.mubr.bf16.gmra.mrb[0].mxu0 %v4342
      %v4550 = vpop.f32.mrb[0].mxu0
      %v4551 = vadd.f32 0.0, %v4550
      %v4552 = vpop.f32.mrb[0].mxu0
      %v4553 = vpop.f32.mrb[0].mxu0
      %v4554 = vadd.f32 0.0, %v4553
      %v4555 = vpop.f32.mrb[0].mxu0
      %4556 = vmatprep.mubr.bf16.mxu0 0
      %4557 = vmatmul.mubr.bf16.gmra.mrb[0].mxu0 %v4345
      %v4558 = vpop.f32.mrb[0].mxu0
      %v4559 = vadd.f32 0.0, %v4558
      %v4560 = vpop.f32.mrb[0].mxu0
      %v4561 = vpop.f32.mrb[0].mxu0
      %v4562 = vadd.f32 0.0, %v4561
      %v4563 = vpop.f32.mrb[0].mxu0
      %4564 = vmatprep.mubr.bf16.mxu0 0
      %4565 = vmatmul.mubr.bf16.gmra.mrb[0].mxu0 %v4348
      %v4566 = vpop.f32.mrb[0].mxu0
      %v4567 = vadd.f32 0.0, %v4566
      %v4568 = vpop.f32.mrb[0].mxu0
      %v4569 = vpop.f32.mrb[0].mxu0
      %v4570 = vadd.f32 0.0, %v4569
      %v4571 = vpop.f32.mrb[0].mxu0
      %4572 = vmatprep.mubr.bf16.mxu0 0
      %4573 = vmatmul.mubr.bf16.gmra.mrb[0].mxu0 %v4351
      %v4574 = vpop.f32.mrb[0].mxu0
      %v4575 = vadd.f32 0.0, %v4574
      %v4576 = vpop.f32.mrb[0].mxu0
      %v4577 = vpop.f32.mrb[0].mxu0
      %v4578 = vadd.f32 0.0, %v4577
      %v4579 = vpop.f32.mrb[0].mxu0
      %4580 = vdwg.mxu0
      %v4581 = vadd.f32 %v3844, %v4391
      %v4582 = vadd.f32 %v3845, %v4394
      %v4583 = vadd.f32 %v3846, %v4399
      %v4584 = vadd.f32 %v3847, %v4402
      %v4585 = vadd.f32 %v3848, %v4407
      %v4586 = vadd.f32 %v3849, %v4410
      %v4587 = vadd.f32 %v3850, %v4415
      %v4588 = vadd.f32 %v3851, %v4418
      %v4589 = vadd.f32 %v3852, %v4423
      %v4590 = vadd.f32 %v3853, %v4426
      %v4591 = vadd.f32 %v3854, %v4431
      %v4592 = vadd.f32 %v3855, %v4434
      %v4593 = vadd.f32 %v3856, %v4439
      %v4594 = vadd.f32 %v3857, %v4442
      %v4595 = vadd.f32 %v3858, %v4447
      %v4596 = vadd.f32 %v3859, %v4450
      %v4597 = vadd.f32 %v3860, %v4455
      %v4598 = vadd.f32 %v3861, %v4458
      %v4599 = vadd.f32 %v3862, %v4463
      %v4600 = vadd.f32 %v3863, %v4466
      %v4601 = vadd.f32 %v3864, %v4471
      %v4602 = vadd.f32 %v3865, %v4474
      %v4603 = vadd.f32 %v3866, %v4479
      %v4604 = vadd.f32 %v3867, %v4482
      %v4605 = vadd.f32 %v3868, %v4487
      %v4606 = vadd.f32 %v3869, %v4490
      %v4607 = vadd.f32 %v3870, %v4495
      %v4608 = vadd.f32 %v3871, %v4498
      %v4609 = vadd.f32 %v3872, %v4503
      %v4610 = vadd.f32 %v3873, %v4506
      %v4611 = vadd.f32 %v3874, %v4511
      %v4612 = vadd.f32 %v3875, %v4514
      %v4613 = vadd.f32 %v3876, %v4519
      %v4614 = vadd.f32 %v3877, %v4522
      %v4615 = vadd.f32 %v3878, %v4527
      %v4616 = vadd.f32 %v3879, %v4530
      %v4617 = vadd.f32 %v3880, %v4535
      %v4618 = vadd.f32 %v3881, %v4538
      %v4619 = vadd.f32 %v3882, %v4543
      %v4620 = vadd.f32 %v3883, %v4546
      %v4621 = vadd.f32 %v3884, %v4551
      %v4622 = vadd.f32 %v3885, %v4554
      %v4623 = vadd.f32 %v3886, %v4559
      %v4624 = vadd.f32 %v3887, %v4562
      %v4625 = vadd.f32 %v3888, %v4567
      %v4626 = vadd.f32 %v3889, %v4570
      %v4627 = vadd.f32 %v3890, %v4575
      %v4628 = vadd.f32 %v3891, %v4578
      %v4629 = vld [vmem:[%s231 + $0x18] sm:$0xe]
      %s4630 = scalar_lea.vmem %s236, 160
      %v4631 = vld [vmem:[%s4630] sm:$0xf]
      %v4632 = vld [vmem:[%s4630 + $0x4] sm:$0xf]
      %v4633 = vld [vmem:[%s4630 + $0x8] sm:$0xf]
      %v4634 = vld [vmem:[%s4630 + $0xc] sm:$0xf]
      %v4635 = vld [vmem:[%s4630 + $0x10] sm:$0x3]
      %v4637 = vunpack.c.l.b16 %v4629
      %v4638 = vpack.c.b16 %v3997, %v4637
      %v4639 = vrot.slane %v4638, 1
      %v4640 = vrot.slane %v4046, 1
      %v4641 = vsel %vm1246, %v4639, %v4640
      %v4642 = vrot.slane %v4047, 1
      %v4643 = vsel %vm1246, %v4640, %v4642
      %v4644 = vrot.slane %v4048, 1
      %v4645 = vsel %vm1246, %v4642, %v4644
      %v4646 = vrot.slane %v4049, 1
      %v4647 = vsel %vm1246, %v4644, %v4646
      %v4648 = vrot.slane %v4050, 1
      %v4649 = vsel %vm1246, %v4646, %v4648
      %v4650 = vrot.slane %v4051, 1
      %v4651 = vsel %vm1246, %v4648, %v4650
      %v4652 = vrot.slane %v4052, 1
      %v4653 = vsel %vm1246, %v4650, %v4652
      %v4654 = vrot.slane %v4053, 1
      %v4655 = vsel %vm1246, %v4652, %v4654
      %v4656 = vrot.slane %v4054, 1
      %v4657 = vsel %vm1246, %v4654, %v4656
      %v4658 = vrot.slane %v4055, 1
      %v4659 = vsel %vm1246, %v4656, %v4658
      %v4660 = vrot.slane %v4056, 1
      %v4661 = vsel %vm1246, %v4658, %v4660
      %v4662 = vrot.slane %v4057, 1
      %v4663 = vsel %vm1246, %v4660, %v4662
      %v4664 = vrot.slane %v4058, 1
      %v4665 = vsel %vm1246, %v4662, %v4664
      %v4666 = vrot.slane %v4059, 1
      %v4667 = vsel %vm1246, %v4664, %v4666
      %v4668 = vrot.slane %v4060, 1
      %v4669 = vsel %vm1246, %v4666, %v4668
      %v4670 = vrot.slane %v4061, 1
      %v4671 = vsel %vm1246, %v4668, %v4670
      %v4672 = vrot.slane %v4062, 1
      %v4673 = vsel %vm1246, %v4670, %v4672
      %v4674 = vrot.slane %v4063, 1
      %v4675 = vsel %vm1246, %v4672, %v4674
      %v4676 = vrot.slane %v4064, 1
      %v4677 = vsel %vm1246, %v4674, %v4676
      %v4678 = vrot.slane %v4065, 1
      %v4679 = vsel %vm1246, %v4676, %v4678
      %v4680 = vrot.slane %v4066, 1
      %v4681 = vsel %vm1246, %v4678, %v4680
      %v4682 = vrot.slane %v4067, 1
      %v4683 = vsel %vm1246, %v4680, %v4682
      %v4684 = vrot.slane %v4068, 1
      %v4685 = vsel %vm1246, %v4682, %v4684
      %v4686 = vrot.slane %v4069, 1
      %v4687 = vsel %vm1246, %v4684, %v4686
      %v4693 = vunpack.c.l.b16 %v4631
      %v4694 = vunpack.c.l.b16 %v4632
      %v4695 = vunpack.c.l.b16 %v4633
      %v4696 = vunpack.c.l.b16 %v4634
      %v4697 = vunpack.c.l.b16 %v4635
      %v4698 = vpack.c.b16 %v4694, %v4693
      %v4699 = vpack.c.b16 %v4696, %v4695
      %v4700 = vpack.c.b16 %v4697, %v4697
      %v4704 = vsel %vm643, %v4641, 0
      %v4707 = vsel %vm643, %v4643, 0
      %v4710 = vsel %vm643, %v4645, 0
      %v4713 = vsel %vm643, %v4647, 0
      %v4716 = vsel %vm643, %v4649, 0
      %v4719 = vsel %vm643, %v4651, 0
      %v4722 = vsel %vm643, %v4653, 0
      %v4725 = vsel %vm643, %v4655, 0
      %v4728 = vsel %vm643, %v4657, 0
      %v4731 = vsel %vm643, %v4659, 0
      %v4734 = vsel %vm643, %v4661, 0
      %v4737 = vsel %vm643, %v4663, 0
      %v4740 = vsel %vm643, %v4665, 0
      %v4743 = vsel %vm643, %v4667, 0
      %v4746 = vsel %vm643, %v4669, 0
      %v4749 = vsel %vm643, %v4671, 0
      %v4752 = vsel %vm643, %v4673, 0
      %v4755 = vsel %vm643, %v4675, 0
      %v4758 = vsel %vm643, %v4677, 0
      %v4761 = vsel %vm643, %v4679, 0
      %v4764 = vsel %vm643, %v4681, 0
      %v4767 = vsel %vm643, %v4683, 0
      %v4770 = vsel %vm643, %v4685, 0
      %v4773 = vsel %vm643, %v4687, 0
      %v4776 = vsel %vm716, %v4700, 0
      %4778 = vmatprep.subr.bf16.mxu0 0
      %4779 = vmatpush1.bf16.msra.mxu0 %v4698
      %4780 = vmatprep.subr.bf16.mxu0 0
      %4781 = vmatpush1.bf16.msra.mxu0 %v4699
      %4782 = vmatprep.subr.bf16.mxu0 0
      %4783 = vmatpush1.bf16.msra.mxu0 %v4776
      %4784 = vmatprep.subr.bf16.mxu0 0
      %4785 = vmatpush1.bf16.msra.mxu0 0
      %4786 = vmatprep.subr.bf16.mxu0 0
      %4787 = vmatpush1.bf16.msra.mxu0 0
      %4788 = vmatprep.subr.bf16.mxu0 0
      %4789 = vmatpush1.bf16.msra.mxu0 0
      %4790 = vmatprep.subr.bf16.mxu0 0
      %4791 = vmatpush1.bf16.msra.mxu0 0
      %4792 = vmatprep.subr.bf16.mxu0 0
      %4793 = vmatpush1.bf16.msra.mxu0 0
      %4794 = vmatprep.subr.bf16.mxu0 0
      %4795 = vmatpush1.bf16.msra.mxu0 0
      %4796 = vmatprep.subr.bf16.mxu0 0
      %4797 = vmatpush1.bf16.msra.mxu0 0
      %4798 = vmatprep.subr.bf16.mxu0 0
      %4799 = vmatpush1.bf16.msra.mxu0 0
      %4800 = vmatprep.subr.bf16.mxu0 0
      %4801 = vmatpush1.bf16.msra.mxu0 0
      %4802 = vmatprep.subr.bf16.mxu0 0
      %4803 = vmatpush1.bf16.msra.mxu0 0
      %4804 = vmatprep.subr.bf16.mxu0 0
      %4805 = vmatpush1.bf16.msra.mxu0 0
      %4806 = vmatprep.subr.bf16.mxu0 0
      %4807 = vmatpush1.bf16.msra.mxu0 0
      %4808 = vmatprep.subr.bf16.mxu0 0
      %4809 = vmatpush1.bf16.msra.mxu0 0
      %4810 = vmatprep.mubr.bf16.mxu0 0
      %4811 = vmatmul.mubr.bf16.gmra.mrb[0].mxu0 %v4704
      %v4812 = vpop.f32.mrb[0].mxu0
      %v4813 = vadd.f32 0.0, %v4812
      %v4814 = vpop.f32.mrb[0].mxu0
      %v4815 = vpop.f32.mrb[0].mxu0
      %v4816 = vadd.f32 0.0, %v4815
      %v4817 = vpop.f32.mrb[0].mxu0
      %4818 = vmatprep.mubr.bf16.mxu0 0
      %4819 = vmatmul.mubr.bf16.gmra.mrb[0].mxu0 %v4707
      %v4820 = vpop.f32.mrb[0].mxu0
      %v4821 = vadd.f32 0.0, %v4820
      %v4822 = vpop.f32.mrb[0].mxu0
      %v4823 = vpop.f32.mrb[0].mxu0
      %v4824 = vadd.f32 0.0, %v4823
      %v4825 = vpop.f32.mrb[0].mxu0
      %4826 = vmatprep.mubr.bf16.mxu0 0
      %4827 = vmatmul.mubr.bf16.gmra.mrb[0].mxu0 %v4710
      %v4828 = vpop.f32.mrb[0].mxu0
      %v4829 = vadd.f32 0.0, %v4828
      %v4830 = vpop.f32.mrb[0].mxu0
      %v4831 = vpop.f32.mrb[0].mxu0
      %v4832 = vadd.f32 0.0, %v4831
      %v4833 = vpop.f32.mrb[0].mxu0
      %4834 = vmatprep.mubr.bf16.mxu0 0
      %4835 = vmatmul.mubr.bf16.gmra.mrb[0].mxu0 %v4713
      %v4836 = vpop.f32.mrb[0].mxu0
      %v4837 = vadd.f32 0.0, %v4836
      %v4838 = vpop.f32.mrb[0].mxu0
      %v4839 = vpop.f32.mrb[0].mxu0
      %v4840 = vadd.f32 0.0, %v4839
      %v4841 = vpop.f32.mrb[0].mxu0
      %4842 = vmatprep.mubr.bf16.mxu0 0
      %4843 = vmatmul.mubr.bf16.gmra.mrb[0].mxu0 %v4716
      %v4844 = vpop.f32.mrb[0].mxu0
      %v4845 = vadd.f32 0.0, %v4844
      %v4846 = vpop.f32.mrb[0].mxu0
      %v4847 = vpop.f32.mrb[0].mxu0
      %v4848 = vadd.f32 0.0, %v4847
      %v4849 = vpop.f32.mrb[0].mxu0
      %4850 = vmatprep.mubr.bf16.mxu0 0
      %4851 = vmatmul.mubr.bf16.gmra.mrb[0].mxu0 %v4719
      %v4852 = vpop.f32.mrb[0].mxu0
      %v4853 = vadd.f32 0.0, %v4852
      %v4854 = vpop.f32.mrb[0].mxu0
      %v4855 = vpop.f32.mrb[0].mxu0
      %v4856 = vadd.f32 0.0, %v4855
      %v4857 = vpop.f32.mrb[0].mxu0
      %4858 = vmatprep.mubr.bf16.mxu0 0
      %4859 = vmatmul.mubr.bf16.gmra.mrb[0].mxu0 %v4722
      %v4860 = vpop.f32.mrb[0].mxu0
      %v4861 = vadd.f32 0.0, %v4860
      %v4862 = vpop.f32.mrb[0].mxu0
      %v4863 = vpop.f32.mrb[0].mxu0
      %v4864 = vadd.f32 0.0, %v4863
      %v4865 = vpop.f32.mrb[0].mxu0
      %4866 = vmatprep.mubr.bf16.mxu0 0
      %4867 = vmatmul.mubr.bf16.gmra.mrb[0].mxu0 %v4725
      %v4868 = vpop.f32.mrb[0].mxu0
      %v4869 = vadd.f32 0.0, %v4868
      %v4870 = vpop.f32.mrb[0].mxu0
      %v4871 = vpop.f32.mrb[0].mxu0
      %v4872 = vadd.f32 0.0, %v4871
      %v4873 = vpop.f32.mrb[0].mxu0
      %4874 = vmatprep.mubr.bf16.mxu0 0
      %4875 = vmatmul.mubr.bf16.gmra.mrb[0].mxu0 %v4728
      %v4876 = vpop.f32.mrb[0].mxu0
      %v4877 = vadd.f32 0.0, %v4876
      %v4878 = vpop.f32.mrb[0].mxu0
      %v4879 = vpop.f32.mrb[0].mxu0
      %v4880 = vadd.f32 0.0, %v4879
      %v4881 = vpop.f32.mrb[0].mxu0
      %4882 = vmatprep.mubr.bf16.mxu0 0
      %4883 = vmatmul.mubr.bf16.gmra.mrb[0].mxu0 %v4731
      %v4884 = vpop.f32.mrb[0].mxu0
      %v4885 = vadd.f32 0.0, %v4884
      %v4886 = vpop.f32.mrb[0].mxu0
      %v4887 = vpop.f32.mrb[0].mxu0
      %v4888 = vadd.f32 0.0, %v4887
      %v4889 = vpop.f32.mrb[0].mxu0
      %4890 = vmatprep.mubr.bf16.mxu0 0
      %4891 = vmatmul.mubr.bf16.gmra.mrb[0].mxu0 %v4734
      %v4892 = vpop.f32.mrb[0].mxu0
      %v4893 = vadd.f32 0.0, %v4892
      %v4894 = vpop.f32.mrb[0].mxu0
      %v4895 = vpop.f32.mrb[0].mxu0
      %v4896 = vadd.f32 0.0, %v4895
      %v4897 = vpop.f32.mrb[0].mxu0
      %4898 = vmatprep.mubr.bf16.mxu0 0
      %4899 = vmatmul.mubr.bf16.gmra.mrb[0].mxu0 %v4737
      %v4900 = vpop.f32.mrb[0].mxu0
      %v4901 = vadd.f32 0.0, %v4900
      %v4902 = vpop.f32.mrb[0].mxu0
      %v4903 = vpop.f32.mrb[0].mxu0
      %v4904 = vadd.f32 0.0, %v4903
      %v4905 = vpop.f32.mrb[0].mxu0
      %4906 = vmatprep.mubr.bf16.mxu0 0
      %4907 = vmatmul.mubr.bf16.gmra.mrb[0].mxu0 %v4740
      %v4908 = vpop.f32.mrb[0].mxu0
      %v4909 = vadd.f32 0.0, %v4908
      %v4910 = vpop.f32.mrb[0].mxu0
      %v4911 = vpop.f32.mrb[0].mxu0
      %v4912 = vadd.f32 0.0, %v4911
      %v4913 = vpop.f32.mrb[0].mxu0
      %4914 = vmatprep.mubr.bf16.mxu0 0
      %4915 = vmatmul.mubr.bf16.gmra.mrb[0].mxu0 %v4743
      %v4916 = vpop.f32.mrb[0].mxu0
      %v4917 = vadd.f32 0.0, %v4916
      %v4918 = vpop.f32.mrb[0].mxu0
      %v4919 = vpop.f32.mrb[0].mxu0
      %v4920 = vadd.f32 0.0, %v4919
      %v4921 = vpop.f32.mrb[0].mxu0
      %4922 = vmatprep.mubr.bf16.mxu0 0
      %4923 = vmatmul.mubr.bf16.gmra.mrb[0].mxu0 %v4746
      %v4924 = vpop.f32.mrb[0].mxu0
      %v4925 = vadd.f32 0.0, %v4924
      %v4926 = vpop.f32.mrb[0].mxu0
      %v4927 = vpop.f32.mrb[0].mxu0
      %v4928 = vadd.f32 0.0, %v4927
      %v4929 = vpop.f32.mrb[0].mxu0
      %4930 = vmatprep.mubr.bf16.mxu0 0
      %4931 = vmatmul.mubr.bf16.gmra.mrb[0].mxu0 %v4749
      %v4932 = vpop.f32.mrb[0].mxu0
      %v4933 = vadd.f32 0.0, %v4932
      %v4934 = vpop.f32.mrb[0].mxu0
      %v4935 = vpop.f32.mrb[0].mxu0
      %v4936 = vadd.f32 0.0, %v4935
      %v4937 = vpop.f32.mrb[0].mxu0
      %4938 = vmatprep.mubr.bf16.mxu0 0
      %4939 = vmatmul.mubr.bf16.gmra.mrb[0].mxu0 %v4752
      %v4940 = vpop.f32.mrb[0].mxu0
      %v4941 = vadd.f32 0.0, %v4940
      %v4942 = vpop.f32.mrb[0].mxu0
      %v4943 = vpop.f32.mrb[0].mxu0
      %v4944 = vadd.f32 0.0, %v4943
      %v4945 = vpop.f32.mrb[0].mxu0
      %4946 = vmatprep.mubr.bf16.mxu0 0
      %4947 = vmatmul.mubr.bf16.gmra.mrb[0].mxu0 %v4755
      %v4948 = vpop.f32.mrb[0].mxu0
      %v4949 = vadd.f32 0.0, %v4948
      %v4950 = vpop.f32.mrb[0].mxu0
      %v4951 = vpop.f32.mrb[0].mxu0
      %v4952 = vadd.f32 0.0, %v4951
      %v4953 = vpop.f32.mrb[0].mxu0
      %4954 = vmatprep.mubr.bf16.mxu0 0
      %4955 = vmatmul.mubr.bf16.gmra.mrb[0].mxu0 %v4758
      %v4956 = vpop.f32.mrb[0].mxu0
      %v4957 = vadd.f32 0.0, %v4956
      %v4958 = vpop.f32.mrb[0].mxu0
      %v4959 = vpop.f32.mrb[0].mxu0
      %v4960 = vadd.f32 0.0, %v4959
      %v4961 = vpop.f32.mrb[0].mxu0
      %4962 = vmatprep.mubr.bf16.mxu0 0
      %4963 = vmatmul.mubr.bf16.gmra.mrb[0].mxu0 %v4761
      %v4964 = vpop.f32.mrb[0].mxu0
      %v4965 = vadd.f32 0.0, %v4964
      %v4966 = vpop.f32.mrb[0].mxu0
      %v4967 = vpop.f32.mrb[0].mxu0
      %v4968 = vadd.f32 0.0, %v4967
      %v4969 = vpop.f32.mrb[0].mxu0
      %4970 = vmatprep.mubr.bf16.mxu0 0
      %4971 = vmatmul.mubr.bf16.gmra.mrb[0].mxu0 %v4764
      %v4972 = vpop.f32.mrb[0].mxu0
      %v4973 = vadd.f32 0.0, %v4972
      %v4974 = vpop.f32.mrb[0].mxu0
      %v4975 = vpop.f32.mrb[0].mxu0
      %v4976 = vadd.f32 0.0, %v4975
      %v4977 = vpop.f32.mrb[0].mxu0
      %4978 = vmatprep.mubr.bf16.mxu0 0
      %4979 = vmatmul.mubr.bf16.gmra.mrb[0].mxu0 %v4767
      %v4980 = vpop.f32.mrb[0].mxu0
      %v4981 = vadd.f32 0.0, %v4980
      %v4982 = vpop.f32.mrb[0].mxu0
      %v4983 = vpop.f32.mrb[0].mxu0
      %v4984 = vadd.f32 0.0, %v4983
      %v4985 = vpop.f32.mrb[0].mxu0
      %4986 = vmatprep.mubr.bf16.mxu0 0
      %4987 = vmatmul.mubr.bf16.gmra.mrb[0].mxu0 %v4770
      %v4988 = vpop.f32.mrb[0].mxu0
      %v4989 = vadd.f32 0.0, %v4988
      %v4990 = vpop.f32.mrb[0].mxu0
      %v4991 = vpop.f32.mrb[0].mxu0
      %v4992 = vadd.f32 0.0, %v4991
      %v4993 = vpop.f32.mrb[0].mxu0
      %4994 = vmatprep.mubr.bf16.mxu0 0
      %4995 = vmatmul.mubr.bf16.gmra.mrb[0].mxu0 %v4773
      %v4996 = vpop.f32.mrb[0].mxu0
      %v4997 = vadd.f32 0.0, %v4996
      %v4998 = vpop.f32.mrb[0].mxu0
      %v4999 = vpop.f32.mrb[0].mxu0
      %v5000 = vadd.f32 0.0, %v4999
      %v5001 = vpop.f32.mrb[0].mxu0
      %5002 = vdwg.mxu0
      %v5003 = vadd.f32 %v4581, %v4813
      %v5004 = vadd.f32 %v4582, %v4816
      %v5005 = vadd.f32 %v4583, %v4821
      %v5006 = vadd.f32 %v4584, %v4824
      %v5007 = vadd.f32 %v4585, %v4829
      %v5008 = vadd.f32 %v4586, %v4832
      %v5009 = vadd.f32 %v4587, %v4837
      %v5010 = vadd.f32 %v4588, %v4840
      %v5011 = vadd.f32 %v4589, %v4845
      %v5012 = vadd.f32 %v4590, %v4848
      %v5013 = vadd.f32 %v4591, %v4853
      %v5014 = vadd.f32 %v4592, %v4856
      %v5015 = vadd.f32 %v4593, %v4861
      %v5016 = vadd.f32 %v4594, %v4864
      %v5017 = vadd.f32 %v4595, %v4869
      %v5018 = vadd.f32 %v4596, %v4872
      %v5019 = vadd.f32 %v4597, %v4877
      %v5020 = vadd.f32 %v4598, %v4880
      %v5021 = vadd.f32 %v4599, %v4885
      %v5022 = vadd.f32 %v4600, %v4888
      %v5023 = vadd.f32 %v4601, %v4893
      %v5024 = vadd.f32 %v4602, %v4896
      %v5025 = vadd.f32 %v4603, %v4901
      %v5026 = vadd.f32 %v4604, %v4904
      %v5027 = vadd.f32 %v4605, %v4909
      %v5028 = vadd.f32 %v4606, %v4912
      %v5029 = vadd.f32 %v4607, %v4917
      %v5030 = vadd.f32 %v4608, %v4920
      %v5031 = vadd.f32 %v4609, %v4925
      %v5032 = vadd.f32 %v4610, %v4928
      %v5033 = vadd.f32 %v4611, %v4933
      %v5034 = vadd.f32 %v4612, %v4936
      %v5035 = vadd.f32 %v4613, %v4941
      %v5036 = vadd.f32 %v4614, %v4944
      %v5037 = vadd.f32 %v4615, %v4949
      %v5038 = vadd.f32 %v4616, %v4952
      %v5039 = vadd.f32 %v4617, %v4957
      %v5040 = vadd.f32 %v4618, %v4960
      %v5041 = vadd.f32 %v4619, %v4965
      %v5042 = vadd.f32 %v4620, %v4968
      %v5043 = vadd.f32 %v4621, %v4973
      %v5044 = vadd.f32 %v4622, %v4976
      %v5045 = vadd.f32 %v4623, %v4981
      %v5046 = vadd.f32 %v4624, %v4984
      %v5047 = vadd.f32 %v4625, %v4989
      %v5048 = vadd.f32 %v4626, %v4992
      %v5049 = vadd.f32 %v4627, %v4997
      %v5050 = vadd.f32 %v4628, %v5000
      %v5051 = vld [vmem:[%s2] sm:$0x1]
      %v5053 = vlaneseq
      %v5054 = vshrl.u32 %v5053, 7
      %v5055 = vsub.s32 0, %v5054
      %v5056 = vrot.slane %v5051, %v5055
      %v5058 = vadd.f32 %v5003, %v5056
      %v5059 = vadd.f32 %v5004, %v5056
      %v5060 = vadd.f32 %v5005, %v5056
      %v5061 = vadd.f32 %v5006, %v5056
      %v5062 = vadd.f32 %v5007, %v5056
      %v5063 = vadd.f32 %v5008, %v5056
      %v5064 = vadd.f32 %v5009, %v5056
      %v5065 = vadd.f32 %v5010, %v5056
      %v5066 = vadd.f32 %v5011, %v5056
      %v5067 = vadd.f32 %v5012, %v5056
      %v5068 = vadd.f32 %v5013, %v5056
      %v5069 = vadd.f32 %v5014, %v5056
      %v5070 = vadd.f32 %v5015, %v5056
      %v5071 = vadd.f32 %v5016, %v5056
      %v5072 = vadd.f32 %v5017, %v5056
      %v5073 = vadd.f32 %v5018, %v5056
      %v5074 = vadd.f32 %v5019, %v5056
      %v5075 = vadd.f32 %v5020, %v5056
      %v5076 = vadd.f32 %v5021, %v5056
      %v5077 = vadd.f32 %v5022, %v5056
      %v5078 = vadd.f32 %v5023, %v5056
      %v5079 = vadd.f32 %v5024, %v5056
      %v5080 = vadd.f32 %v5025, %v5056
      %v5081 = vadd.f32 %v5026, %v5056
      %v5082 = vadd.f32 %v5027, %v5056
      %v5083 = vadd.f32 %v5028, %v5056
      %v5084 = vadd.f32 %v5029, %v5056
      %v5085 = vadd.f32 %v5030, %v5056
      %v5086 = vadd.f32 %v5031, %v5056
      %v5087 = vadd.f32 %v5032, %v5056
      %v5088 = vadd.f32 %v5033, %v5056
      %v5089 = vadd.f32 %v5034, %v5056
      %v5090 = vadd.f32 %v5035, %v5056
      %v5091 = vadd.f32 %v5036, %v5056
      %v5092 = vadd.f32 %v5037, %v5056
      %v5093 = vadd.f32 %v5038, %v5056
      %v5094 = vadd.f32 %v5039, %v5056
      %v5095 = vadd.f32 %v5040, %v5056
      %v5096 = vadd.f32 %v5041, %v5056
      %v5097 = vadd.f32 %v5042, %v5056
      %v5098 = vadd.f32 %v5043, %v5056
      %v5099 = vadd.f32 %v5044, %v5056
      %v5100 = vadd.f32 %v5045, %v5056
      %v5101 = vadd.f32 %v5046, %v5056
      %v5102 = vadd.f32 %v5047, %v5056
      %v5103 = vadd.f32 %v5048, %v5056
      %v5104 = vadd.f32 %v5049, %v5056
      %v5105 = vadd.f32 %v5050, %v5056
      %v5106 = vmax.f32 %v5058, 0.0
      %v5107 = vmax.f32 %v5059, 0.0
      %v5108 = vmax.f32 %v5060, 0.0
      %v5109 = vmax.f32 %v5061, 0.0
      %v5110 = vmax.f32 %v5062, 0.0
      %v5111 = vmax.f32 %v5063, 0.0
      %v5112 = vmax.f32 %v5064, 0.0
      %v5113 = vmax.f32 %v5065, 0.0
      %v5114 = vmax.f32 %v5066, 0.0
      %v5115 = vmax.f32 %v5067, 0.0
      %v5116 = vmax.f32 %v5068, 0.0
      %v5117 = vmax.f32 %v5069, 0.0
      %v5118 = vmax.f32 %v5070, 0.0
      %v5119 = vmax.f32 %v5071, 0.0
      %v5120 = vmax.f32 %v5072, 0.0
      %v5121 = vmax.f32 %v5073, 0.0
      %v5122 = vmax.f32 %v5074, 0.0
      %v5123 = vmax.f32 %v5075, 0.0
      %v5124 = vmax.f32 %v5076, 0.0
      %v5125 = vmax.f32 %v5077, 0.0
      %v5126 = vmax.f32 %v5078, 0.0
      %v5127 = vmax.f32 %v5079, 0.0
      %v5128 = vmax.f32 %v5080, 0.0
      %v5129 = vmax.f32 %v5081, 0.0
      %v5130 = vmax.f32 %v5082, 0.0
      %v5131 = vmax.f32 %v5083, 0.0
      %v5132 = vmax.f32 %v5084, 0.0
      %v5133 = vmax.f32 %v5085, 0.0
      %v5134 = vmax.f32 %v5086, 0.0
      %v5135 = vmax.f32 %v5087, 0.0
      %v5136 = vmax.f32 %v5088, 0.0
      %v5137 = vmax.f32 %v5089, 0.0
      %v5138 = vmax.f32 %v5090, 0.0
      %v5139 = vmax.f32 %v5091, 0.0
      %v5140 = vmax.f32 %v5092, 0.0
      %v5141 = vmax.f32 %v5093, 0.0
      %v5142 = vmax.f32 %v5094, 0.0
      %v5143 = vmax.f32 %v5095, 0.0
      %v5144 = vmax.f32 %v5096, 0.0
      %v5145 = vmax.f32 %v5097, 0.0
      %v5146 = vmax.f32 %v5098, 0.0
      %v5147 = vmax.f32 %v5099, 0.0
      %v5148 = vmax.f32 %v5100, 0.0
      %v5149 = vmax.f32 %v5101, 0.0
      %v5150 = vmax.f32 %v5102, 0.0
      %v5151 = vmax.f32 %v5103, 0.0
      %v5152 = vmax.f32 %v5104, 0.0
      %v5153 = vmax.f32 %v5105, 0.0
      %5154 = vst [vmem:[%s246] sm:$0xff] %v5106
      %5155 = vst [vmem:[%s246 + $0x8] sm:$0xff] %v5107
      %5156 = vst [vmem:[%s246 + $0x10] sm:$0xff] %v5108
      %5157 = vst [vmem:[%s246 + $0x18] sm:$0xff] %v5109
      %5158 = vst [vmem:[%s246 + $0x20] sm:$0xff] %v5110
      %5159 = vst [vmem:[%s246 + $0x28] sm:$0xff] %v5111
      %5160 = vst [vmem:[%s246 + $0x30] sm:$0xff] %v5112
      %5161 = vst [vmem:[%s246 + $0x38] sm:$0xff] %v5113
      %5162 = vst [vmem:[%s246 + $0x40] sm:$0xff] %v5114
      %5163 = vst [vmem:[%s246 + $0x48] sm:$0xff] %v5115
      %5164 = vst [vmem:[%s246 + $0x50] sm:$0xff] %v5116
      %5165 = vst [vmem:[%s246 + $0x58] sm:$0xff] %v5117
      %5166 = vst [vmem:[%s246 + $0x60] sm:$0xff] %v5118
      %5167 = vst [vmem:[%s246 + $0x68] sm:$0xff] %v5119
      %5168 = vst [vmem:[%s246 + $0x70] sm:$0xff] %v5120
      %5169 = vst [vmem:[%s246 + $0x78] sm:$0xff] %v5121
      %5170 = vst [vmem:[%s246 + $0x80] sm:$0xff] %v5122
      %5171 = vst [vmem:[%s246 + $0x88] sm:$0xff] %v5123
      %5172 = vst [vmem:[%s246 + $0x90] sm:$0xff] %v5124
      %5173 = vst [vmem:[%s246 + $0x98] sm:$0xff] %v5125
      %5174 = vst [vmem:[%s246 + $0xa0] sm:$0xff] %v5126
      %5175 = vst [vmem:[%s246 + $0xa8] sm:$0xff] %v5127
      %5176 = vst [vmem:[%s246 + $0xb0] sm:$0xff] %v5128
      %5177 = vst [vmem:[%s246 + $0xb8] sm:$0xff] %v5129
      %5178 = vst [vmem:[%s246 + $0xc0] sm:$0xff] %v5130
      %5179 = vst [vmem:[%s246 + $0xc8] sm:$0xff] %v5131
      %5180 = vst [vmem:[%s246 + $0xd0] sm:$0xff] %v5132
      %5181 = vst [vmem:[%s246 + $0xd8] sm:$0xff] %v5133
      %5182 = vst [vmem:[%s246 + $0xe0] sm:$0xff] %v5134
      %5183 = vst [vmem:[%s246 + $0xe8] sm:$0xff] %v5135
      %5184 = vst [vmem:[%s246 + $0xf0] sm:$0xff] %v5136
      %5185 = vst [vmem:[%s246 + $0xf8] sm:$0xff] %v5137
      %5186 = vst [vmem:[%s246 + $0x100] sm:$0xff] %v5138
      %5187 = vst [vmem:[%s246 + $0x108] sm:$0xff] %v5139
      %5188 = vst [vmem:[%s246 + $0x110] sm:$0xff] %v5140
      %5189 = vst [vmem:[%s246 + $0x118] sm:$0xff] %v5141
      %5190 = vst [vmem:[%s246 + $0x120] sm:$0xff] %v5142
      %5191 = vst [vmem:[%s246 + $0x128] sm:$0xff] %v5143
      %5192 = vst [vmem:[%s246 + $0x130] sm:$0xff] %v5144
      %5193 = vst [vmem:[%s246 + $0x138] sm:$0xff] %v5145
      %5194 = vst [vmem:[%s246 + $0x140] sm:$0xff] %v5146
      %5195 = vst [vmem:[%s246 + $0x148] sm:$0xff] %v5147
      %5196 = vst [vmem:[%s246 + $0x150] sm:$0xff] %v5148
      %5197 = vst [vmem:[%s246 + $0x158] sm:$0xff] %v5149
      %5198 = vst [vmem:[%s246 + $0x160] sm:$0xff] %v5150
      %5199 = vst [vmem:[%s246 + $0x168] sm:$0xff] %v5151
      %5200 = vst [vmem:[%s246 + $0x170] sm:$0xff] %v5152
      %5201 = vst [vmem:[%s246 + $0x178] sm:$0xff] %v5153
      %p5202 = scmp.lt.s32.totalorder %s19, 1
      %s5203 = scalar_select %p5202, %s19, 1
      %p5204 = scmp.lt.s32.totalorder %s20, 0
      %s5205 = scalar_select %p5204, %s20, 0
      %s5206 = smul.addr %s5205, 48
      %s5207 = smul.addr %s5203, 48
      %s5208 = sadd.s32 %s5206, %s5207
      %s5209 = smul.addr %s5208, 8
      %s5210 = scalar_lea.vmem %s3, %s5209
      // Predicated region
      $region33: #{psp_forward.3} parent=31 // pred_check
        %p5211 = pneg %p130
      $region34: #{psp_forward.3} parent=31 // pred_check_branch
        %5213 = sbr.rel (%p5211) target = $region36
      $region35: #{psp_forward.3} parent=31 // pred_region
        _
      $region36: #{psp_forward.3} parent=31 // pred_fallthru
        _
    $region32: #{psp_forward.3} parent=5 // pred_fallthru
      _
    %p5214 = scmp.le.s32.totalorder 2, %s9
    // Predicated region
    $region37: #{psp_forward.3} parent=5 // pred_check
      %p5215 = pneg %p5214
    $region38: #{psp_forward.3} parent=5 // pred_check_branch
      %5217 = sbr.rel (%p5215) target = $region40
    $region39: #{psp_forward.3} parent=5 // pred_region
      %s5218 = ssub.s32 %s9, 2
      // Predicated region
      $region41: #{psp_forward.3} parent=39 // pred_check
        %p5219 = pneg %p136
      $region42: #{psp_forward.3} parent=39 // pred_check_branch
        %5221 = sbr.rel (%p5219) target = $region44
      $region43: #{psp_forward.3} parent=39 // pred_region
        %p5222 = scmp.lt.s32.totalorder %s22, 1
        %s5223 = scalar_select %p5222, %s22, 1
        %p5224 = scmp.lt.s32.totalorder %s23, 0
        %s5225 = scalar_select %p5224, %s23, 0
        %s5226 = smul.addr %s5225, 48
        %s5227 = smul.addr %s5223, 48
        %s5228 = sadd.s32 %s5226, %s5227
        %s5229 = smul.addr %s5228, 8
        %s5230 = scalar_lea.vmem %s3, %s5229
      $region44: #{psp_forward.3} parent=39 // pred_fallthru
        _
    $region40: #{psp_forward.3} parent=5 // pred_fallthru
      _
  $region6: #{psp_forward.3} parent=0 // loop_footer
    %s13 = sadd.s32 1, %s9
  $region7: #{psp_forward.3} parent=0 // loop_footer_branch
    %8 = sbr.rel target = $region3
  $region8: #{psp_forward.3} parent=0 // loop_exit
    _

</llo_original>
